<compile_context>
chip_gen: v7x
topology: tpu7x:2x2x1
jax: 0.10.0
libtpu: 0.0.40
codegen_flags: <defaults>
</compile_context>

<pallas_src>
import jax
import jax.numpy as jnp
from jax.experimental import pallas as pl
from jax.experimental.pallas import tpu as pltpu

# ----------------------------- problem sizes --------------------------------
B = 2                                      # batch
DOF = 7                                    # robot_world.kinematics.get_dof()
N_SPHERES = 8                              # link_spheres.shape[0]
Q_FEATURE_DIMS = 7                         # [position(3), quaternion(4)]
FEATURE_DIMS = N_SPHERES * 5 + 7 + 1       # 48
FINAL_FEATURE_DIMS = FEATURE_DIMS + 1 + 7  # 56

# padded sizes used by the kernel
IN_PAD = 16          # 7 -> 16 (bf16 sublane-tile aligned first-layer K)
DOF_PAD = 8          # 7 -> 8
FEAT_PAD = 64        # 56 -> 64 (mid-feature K padding)
OUT_PAD = 128        # 7 -> 128 (lane-dense final store)
FPK_ROWS = 24        # rows in the packed f32 buffer

_OBSTACLE = (0.3, 0.0, 0.4)   # synthetic-world obstacle, baked into the kernel


# ----------------------------- fused Pallas kernel ---------------------------
def _curobo_kernel(x_ref, wp512_ref, w4_ref, wp256_ref, wtail_ref, fpk_ref, o_ref):
    """Fused forward for one batch tile:
       feature MLP (7->512->512->512->7, ReLU6 x3 + Tanh) * bound_scale
       -> synthetic kinematics / sdf / pose-distance glue (one fused matmul)
       -> final MLP (56->256->256->64->7, ReLU6 x3 + Tanh) * bound_scale.
    Weights bf16 (DMA-halved); elementwise math and accumulation in f32.
    """
    f32 = jnp.float32
    bf16 = jnp.bfloat16

    def relu6(v):
        return jnp.clip(v, 0.0, 6.0)

    def mm(a_f32, w_bf16):
        # bf16 x bf16 on the MXU, f32 accumulate.
        return jnp.dot(a_f32.astype(bf16), w_bf16, preferred_element_type=f32)

    x = x_ref[...]                                        # (TB, 16) f32, [pos, quat, 0...]

    # ---------------- feature MLP (q_feature_dims -> dof) --------------------
    w2 = wp512_ref[0:512, :]                              # (512, 512) bf16
    w3 = wp512_ref[512:1024, :]                           # (512, 512) bf16
    w1 = wp512_ref[1024:1040, :]                          # (16, 512)  bf16 (rows 7:16 zero)
    h = relu6(mm(x, w1) + fpk_ref[0:1, :])
    h = relu6(mm(h, w2) + fpk_ref[1:2, :])
    h = relu6(mm(h, w3) + fpk_ref[2:3, :])
    q_mid = jnp.tanh(mm(h, w4_ref[...]) + fpk_ref[3:4, 0:DOF_PAD])   # (TB, 8)
    # bound_scale applied AFTER tanh (cannot be folded through the nonlinearity)
    q_scale = q_mid * fpk_ref[4:5, 0:DOF_PAD]                        # (TB, 8), lane 7 == 0

    # ------------- synthetic robot-world features (single fused matmul) ------
    # lane 7 of q_scale is dead (zero); set it to 1 so weight row 7 acts as bias.
    lane = jax.lax.broadcasted_iota(jnp.int32, q_scale.shape, 1)
    q_aug = jnp.where(lane == DOF, 1.0, q_scale)                     # (TB, 8)
    w_glue = fpk_ref[8:16, 0:OUT_PAD]                                # (8, 128) f32, aligned view
    glue = jnp.dot(q_aug, w_glue, preferred_element_type=f32)        # (TB, 128)

    sph = glue[:, 0:32]                                   # interleaved [x,y,z,r]*8 (+bias)
    cx = glue[:, 32:40]
    cy = glue[:, 40:48]
    cz = glue[:, 48:56]
    rr = glue[:, 56:64]
    ee = glue[:, 64:72]                                   # [ee_pos(3), ee_quat(4), 0]

    d = jnp.sqrt((cx - _OBSTACLE[0]) ** 2
                 + (cy - _OBSTACLE[1]) ** 2
                 + (cz - _OBSTACLE[2]) ** 2)
    q_sdf = jnp.maximum(rr - d, 0.0)                      # (TB, 8) per-sphere penetration
    q_self = jnp.sum(q_sdf, axis=-1, keepdims=True)       # (TB, 1)

    ee_pos = ee[:, 0:3]
    q_raw = ee[:, 3:7]
    q_norm = jnp.sqrt(jnp.sum(q_raw * q_raw, axis=-1, keepdims=True))
    ee_quat = q_raw / (q_norm + 1e-6)

    x_pos = x[:, 0:3]
    x_quat = x[:, 3:7]
    pose_d = (jnp.sqrt(jnp.sum((x_pos - ee_pos) ** 2, axis=-1, keepdims=True))
              + (1.0 - jnp.abs(jnp.sum(x_quat * ee_quat, axis=-1, keepdims=True))))

    # mid_features (TB, 56) assembled in registers, zero-padded to 64 lanes.
    pad = jnp.zeros((x.shape[0], FEAT_PAD - FINAL_FEATURE_DIMS), f32)
    mid = jnp.concatenate(
        [sph, q_sdf, q_self, ee_pos, ee_quat, pose_d, x_pos, x_quat, pad], axis=-1)

    # ---------------- final MLP (final_feature_dims -> dof) ------------------
    w2f = wp256_ref[0:256, :]                             # (256, 256) bf16
    w1f = wp256_ref[256:320, :]                           # (64, 256)  bf16 (rows 56:64 zero)
    w3f = wtail_ref[0:256, :]                             # (256, 128) bf16 (lanes 64:128 zero)
    w4f = wtail_ref[256:384, :]                           # (128, 128) bf16 (rows 64:128 zero)
    h = relu6(mm(mid, w1f) + fpk_ref[5:6, 0:256])
    h = relu6(mm(h, w2f) + fpk_ref[6:7, 0:256])
    h = relu6(mm(h, w3f) + fpk_ref[7:8, 0:OUT_PAD])       # lanes 64:128 stay exactly 0
    out = jnp.tanh(mm(h, w4f) + fpk_ref[16:17, 0:OUT_PAD])
    o_ref[...] = fpk_ref[4:5, 0:OUT_PAD] * out            # bound_scale after tanh


def _cost_estimate(padded_batch):
    per_row_flops = 2 * (IN_PAD * 512 + 2 * 512 * 512 + 512 * DOF_PAD
                         + DOF_PAD * OUT_PAD
                         + FEAT_PAD * 256 + 256 * 256 + 256 * OUT_PAD
                         + OUT_PAD * OUT_PAD)
    bytes_w = ((1040 * 512 + 512 * DOF_PAD + 320 * 256 + 384 * OUT_PAD) * 2
               + FPK_ROWS * 512 * 4)
    bytes_io = padded_batch * (IN_PAD + OUT_PAD) * 4
    return pl.CostEstimate(flops=padded_batch * per_row_flops,
                           transcendentals=padded_batch * 160,
                           bytes_accessed=bytes_w + bytes_io)


def _fused_forward_call(x_in, p, tile_b, n_tiles):
    weight_spec = lambda shape: pl.BlockSpec(shape, lambda b: (0, 0))
    return pl.pallas_call(
        _curobo_kernel,
        out_shape=jax.ShapeDtypeStruct((tile_b * n_tiles, OUT_PAD), jnp.float32),
        grid=(n_tiles,),
        in_specs=[
            pl.BlockSpec((tile_b, IN_PAD), lambda b: (b, 0)),   # x_in (per batch tile)
            weight_spec((1040, 512)),                           # wp512 (bf16)
            weight_spec((512, DOF_PAD)),                        # w4    (bf16)
            weight_spec((320, 256)),                            # wp256 (bf16)
            weight_spec((384, OUT_PAD)),                        # wtail (bf16)
            weight_spec((FPK_ROWS, 512)),                       # fpk   (f32)
        ],
        out_specs=pl.BlockSpec((tile_b, OUT_PAD), lambda b: (b, 0)),
        compiler_params=pltpu.CompilerParams(
            dimension_semantics=("parallel",)),
        cost_estimate=_cost_estimate(tile_b * n_tiles),
    )(x_in, p["wp512"], p["w4"], p["wp256"], p["wtail"], p["fpk"])


def _batch_tiling(b):
    """One tile (pad to multiple of 8) for small batches; 128-row tiles for large
    batches so MXU rows fill up and v7x megacore can split the parallel axis."""
    if b <= 128:
        pb = max(8, ((b + 7) // 8) * 8)
        return pb, 1
    n = (b + 127) // 128
    return 128, n


@jax.jit
def curobo_forward(q, x_pos, x_quat, packed):
    """Mirrors CuroboTorch.forward(q, x_des).  `q` is unused in the original
    forward as well; it is kept for signature fidelity."""
    del q
    b = x_pos.shape[0]
    tile_b, n_tiles = _batch_tiling(b)
    pb = tile_b * n_tiles
    # in_features = cat([x_des.position, x_des.quaternion], -1), padded to (pb, 16)
    x_in = jnp.zeros((pb, IN_PAD), jnp.float32)
    x_in = x_in.at[:b, 0:3].set(x_pos).at[:b, 3:7].set(x_quat)
    out = _fused_forward_call(x_in, packed, tile_b, n_tiles)   # (pb, 128)
    return out[:b, :DOF]


# ----------------------- synthetic RobotWorld (constants) -------------------
# TODO(synk): deterministic surrogate for cuRobo kinematics / SDF / pose
# distance; produces the exact feature shapes, math runs inside the kernel.
class SyntheticRobotWorld:
    def __init__(self, key):
        k1, k2, k3 = jax.random.split(key, 3)
        self.w_spheres = 0.1 * jax.random.normal(k1, (DOF, N_SPHERES * 4), jnp.float32)
        self.b_spheres = 0.05 * jax.random.normal(k2, (N_SPHERES * 4,), jnp.float32)
        self.w_ee = 0.1 * jax.random.normal(k3, (DOF, 7), jnp.float32)
        # joint-limit scale, shape (1, dof) like cuRobo's bound_scale
        self.bound_scale = jnp.linspace(1.0, 2.0, DOF, dtype=jnp.float32).reshape(1, DOF)


# ------------------------------ param packing --------------------------------
def _pad2(a, rows, cols):
    out = jnp.zeros((rows, cols), a.dtype)
    return out.at[: a.shape[0], : a.shape[1]].set(a)


def pack_params(feat_params, final_params, rw):
    """Pack all weights into a few width-grouped, tile-aligned buffers (once)."""
    (w1, b1), (w2, b2), (w3, b3), (w4, b4) = feat_params
    (w1f, b1f), (w2f, b2f), (w3f, b3f), (w4f, b4f) = final_params
    bf16 = jnp.bfloat16

    # bf16 weight packs; every sub-block starts/ends on a 16-row (bf16 tile) boundary.
    wp512 = jnp.concatenate([w2, w3, _pad2(w1, 16, 512)], axis=0).astype(bf16)     # (1040, 512)
    w4_p = _pad2(w4, 512, DOF_PAD).astype(bf16)                                    # (512, 8)
    wp256 = jnp.concatenate([w2f, _pad2(w1f, 64, 256)], axis=0).astype(bf16)       # (320, 256)
    wtail = jnp.concatenate([_pad2(w3f, 256, OUT_PAD),
                             _pad2(w4f, 128, OUT_PAD)], axis=0).astype(bf16)       # (384, 128)

    # fused robot-world glue weight (8, 128): [spheres | spheres_blocked | ee],
    # biases folded into row 7 (kernel sets q_scale lane 7 := 1).
    perm = jnp.asarray([4 * i + k for k in range(4) for i in range(N_SPHERES)])
    w_glue = jnp.zeros((DOF_PAD, OUT_PAD), jnp.float32)
    w_glue = w_glue.at[:DOF, 0:32].set(rw.w_spheres)
    w_glue = w_glue.at[DOF, 0:32].set(rw.b_spheres)
    w_glue = w_glue.at[:DOF, 32:64].set(rw.w_spheres[:, perm])
    w_glue = w_glue.at[DOF, 32:64].set(rw.b_spheres[perm])
    w_glue = w_glue.at[:DOF, 64:71].set(rw.w_ee)

    # single f32 pack: biases + bound_scale + glue weight (glue at aligned rows 8:16).
    fpk = jnp.zeros((FPK_ROWS, 512), jnp.float32)
    fpk = fpk.at[0, :].set(b1)
    fpk = fpk.at[1, :].set(b2)
    fpk = fpk.at[2, :].set(b3)
    fpk = fpk.at[3, :DOF].set(b4)                          # feature-MLP output bias
    fpk = fpk.at[4, :DOF].set(rw.bound_scale.reshape(-1))  # applied after tanh
    fpk = fpk.at[5, :256].set(b1f)
    fpk = fpk.at[6, :256].set(b2f)
    fpk = fpk.at[7, :64].set(b3f)
    fpk = fpk.at[8:16, :OUT_PAD].set(w_glue)
    fpk = fpk.at[16, :DOF].set(b4f)

    return dict(wp512=wp512, w4=w4_p, wp256=wp256, wtail=wtail, fpk=fpk)


# ------------------------------ param init ----------------------------------
def _init_linear(key, din, dout):
    kw, kb = jax.random.split(key)
    lim = 1.0 / (float(din) ** 0.5)
    w = jax.random.uniform(kw, (din, dout), jnp.float32, -lim, lim)
    b = jax.random.uniform(kb, (dout,), jnp.float32, -lim, lim)
    return w, b


def _init_mlp(key, dims):
    keys = jax.random.split(key, len(dims))
    return [_init_linear(k, din, dout) for k, (din, dout) in zip(keys, dims)]


if __name__ == "__main__":
    key = jax.random.PRNGKey(0)
    k_rw, k_feat, k_final, k_q, k_pos, k_quat = jax.random.split(key, 6)

    rw = SyntheticRobotWorld(k_rw)

    # _feature_mlp: 7 -> 512 -> 512 -> 512 -> DOF
    feat_params = _init_mlp(k_feat, [(Q_FEATURE_DIMS, 512), (512, 512),
                                     (512, 512), (512, DOF)])
    # _final_mlp: 56 -> 256 -> 256 -> 64 -> DOF
    final_params = _init_mlp(k_final, [(FINAL_FEATURE_DIMS, 256), (256, 256),
                                       (256, 64), (64, DOF)])
    packed = pack_params(feat_params, final_params, rw)

    # inputs (q is part of the signature but unused in forward, as in the original)
    q = jax.random.normal(k_q, (B, DOF), jnp.float32)
    x_pos = jax.random.normal(k_pos, (B, 3), jnp.float32)
    x_quat = jax.random.normal(k_quat, (B, 4), jnp.float32)
    x_quat = x_quat / jnp.linalg.norm(x_quat, axis=-1, keepdims=True)

    q_out = curobo_forward(q, x_pos, x_quat, packed)
    q_out = jax.block_until_ready(q_out)

    assert q_out.shape == (B, DOF), q_out.shape
    assert bool(jnp.all(jnp.isfinite(q_out)))
    print("KERNEL_OK")
</pallas_src>

<mosaic_0001>
module attributes {stable_mosaic.version = 11 : i64} {
  func.func @_curobo_kernel(%arg0: i32, %arg1: memref<8x16xf32, #tpu.memory_space<vmem>>, %arg2: memref<1040x512xbf16, #tpu.memory_space<vmem>>, %arg3: memref<512x8xbf16, #tpu.memory_space<vmem>>, %arg4: memref<320x256xbf16, #tpu.memory_space<vmem>>, %arg5: memref<384x128xbf16, #tpu.memory_space<vmem>>, %arg6: memref<24x512xf32, #tpu.memory_space<vmem>>, %arg7: memref<8x128xf32, #tpu.memory_space<vmem>>) attributes {dimension_semantics = [#tpu.dimension_semantics<parallel>], iteration_bounds = array<i64: 1>, scalar_prefetch = 0 : i64, scratch_operands = 0 : i64, tpu.core_type = #tpu.core_type<tc>, window_params = [{transform_indices = @transform_0, window_bounds = array<i64: 8, 16>}, {pipeline_mode = #tpu.pipeline_mode<synchronous>, transform_indices = @transform_1, window_bounds = array<i64: 1040, 512>}, {pipeline_mode = #tpu.pipeline_mode<synchronous>, transform_indices = @transform_2, window_bounds = array<i64: 512, 8>}, {pipeline_mode = #tpu.pipeline_mode<synchronous>, transform_indices = @transform_3, window_bounds = array<i64: 320, 256>}, {pipeline_mode = #tpu.pipeline_mode<synchronous>, transform_indices = @transform_4, window_bounds = array<i64: 384, 128>}, {pipeline_mode = #tpu.pipeline_mode<synchronous>, transform_indices = @transform_5, window_bounds = array<i64: 24, 512>}, {transform_indices = @transform_6, window_bounds = array<i64: 8, 128>}]} {
    %c0 = arith.constant 0 : index
    %c0_0 = arith.constant 0 : index
    %0 = vector.load %arg1[%c0, %c0_0] : memref<8x16xf32, #tpu.memory_space<vmem>>, vector<8x16xf32>
    %c0_1 = arith.constant 0 : index
    %c0_2 = arith.constant 0 : index
    %1 = vector.load %arg2[%c0_1, %c0_2] : memref<1040x512xbf16, #tpu.memory_space<vmem>>, vector<512x512xbf16>
    %c512 = arith.constant 512 : index
    %c0_3 = arith.constant 0 : index
    %2 = vector.load %arg2[%c512, %c0_3] : memref<1040x512xbf16, #tpu.memory_space<vmem>>, vector<512x512xbf16>
    %c1024 = arith.constant 1024 : index
    %c0_4 = arith.constant 0 : index
    %3 = vector.load %arg2[%c1024, %c0_4] : memref<1040x512xbf16, #tpu.memory_space<vmem>>, vector<16x512xbf16>
    %4 = arith.truncf %0 : vector<8x16xf32> to vector<8x16xbf16>
    %cst = arith.constant dense<0.000000e+00> : vector<8x512xf32>
    %5 = tpu.matmul %4, %3, %cst {dimension_numbers = #tpu.dot_dimension_numbers<[1], [0], [0], [1], [0, 0, 1, 1], [], []>} : vector<8x16xbf16>, vector<16x512xbf16>, vector<8x512xf32> -> vector<8x512xf32>
    %c0_5 = arith.constant 0 : index
    %c0_6 = arith.constant 0 : index
    %6 = vector.load %arg6[%c0_5, %c0_6] : memref<24x512xf32, #tpu.memory_space<vmem>>, vector<1x512xf32>
    %7 = vector.broadcast %6 : vector<1x512xf32> to vector<8x512xf32>
    %8 = arith.addf %5, %7 : vector<8x512xf32>
    %cst_7 = arith.constant 0.000000e+00 : f32
    %cst_8 = arith.constant 6.000000e+00 : f32
    %9 = vector.broadcast %cst_7 : f32 to vector<8x512xf32>
    %10 = arith.maximumf %9, %8 : vector<8x512xf32>
    %11 = vector.broadcast %cst_8 : f32 to vector<8x512xf32>
    %12 = arith.minimumf %11, %10 : vector<8x512xf32>
    %13 = arith.truncf %12 : vector<8x512xf32> to vector<8x512xbf16>
    %cst_9 = arith.constant dense<0.000000e+00> : vector<8x512xf32>
    %14 = tpu.matmul %13, %1, %cst_9 {dimension_numbers = #tpu.dot_dimension_numbers<[1], [0], [0], [1], [0, 0, 1, 1], [], []>} : vector<8x512xbf16>, vector<512x512xbf16>, vector<8x512xf32> -> vector<8x512xf32>
    %c1 = arith.constant 1 : index
    %c0_10 = arith.constant 0 : index
    %15 = vector.load %arg6[%c1, %c0_10] : memref<24x512xf32, #tpu.memory_space<vmem>>, vector<1x512xf32>
    %16 = vector.broadcast %15 : vector<1x512xf32> to vector<8x512xf32>
    %17 = arith.addf %14, %16 : vector<8x512xf32>
    %cst_11 = arith.constant 0.000000e+00 : f32
    %cst_12 = arith.constant 6.000000e+00 : f32
    %18 = vector.broadcast %cst_11 : f32 to vector<8x512xf32>
    %19 = arith.maximumf %18, %17 : vector<8x512xf32>
    %20 = vector.broadcast %cst_12 : f32 to vector<8x512xf32>
    %21 = arith.minimumf %20, %19 : vector<8x512xf32>
    %22 = arith.truncf %21 : vector<8x512xf32> to vector<8x512xbf16>
    %cst_13 = arith.constant dense<0.000000e+00> : vector<8x512xf32>
    %23 = tpu.matmul %22, %2, %cst_13 {dimension_numbers = #tpu.dot_dimension_numbers<[1], [0], [0], [1], [0, 0, 1, 1], [], []>} : vector<8x512xbf16>, vector<512x512xbf16>, vector<8x512xf32> -> vector<8x512xf32>
    %c2 = arith.constant 2 : index
    %c0_14 = arith.constant 0 : index
    %24 = vector.load %arg6[%c2, %c0_14] : memref<24x512xf32, #tpu.memory_space<vmem>>, vector<1x512xf32>
    %25 = vector.broadcast %24 : vector<1x512xf32> to vector<8x512xf32>
    %26 = arith.addf %23, %25 : vector<8x512xf32>
    %cst_15 = arith.constant 0.000000e+00 : f32
    %cst_16 = arith.constant 6.000000e+00 : f32
    %27 = vector.broadcast %cst_15 : f32 to vector<8x512xf32>
    %28 = arith.maximumf %27, %26 : vector<8x512xf32>
    %29 = vector.broadcast %cst_16 : f32 to vector<8x512xf32>
    %30 = arith.minimumf %29, %28 : vector<8x512xf32>
    %c0_17 = arith.constant 0 : index
    %c0_18 = arith.constant 0 : index
    %31 = vector.load %arg3[%c0_17, %c0_18] : memref<512x8xbf16, #tpu.memory_space<vmem>>, vector<512x8xbf16>
    %32 = arith.truncf %30 : vector<8x512xf32> to vector<8x512xbf16>
    %cst_19 = arith.constant dense<0.000000e+00> : vector<8x8xf32>
    %33 = tpu.matmul %32, %31, %cst_19 {dimension_numbers = #tpu.dot_dimension_numbers<[1], [0], [0], [1], [0, 0, 1, 1], [], []>} : vector<8x512xbf16>, vector<512x8xbf16>, vector<8x8xf32> -> vector<8x8xf32>
    %c3 = arith.constant 3 : index
    %c0_20 = arith.constant 0 : index
    %34 = vector.load %arg6[%c3, %c0_20] : memref<24x512xf32, #tpu.memory_space<vmem>>, vector<1x8xf32>
    %35 = vector.broadcast %34 : vector<1x8xf32> to vector<8x8xf32>
    %36 = arith.addf %33, %35 : vector<8x8xf32>
    %37 = math.tanh %36 : vector<8x8xf32>
    %c4 = arith.constant 4 : index
    %c0_21 = arith.constant 0 : index
    %38 = vector.load %arg6[%c4, %c0_21] : memref<24x512xf32, #tpu.memory_space<vmem>>, vector<1x8xf32>
    %39 = vector.broadcast %38 : vector<1x8xf32> to vector<8x8xf32>
    %40 = arith.mulf %37, %39 : vector<8x8xf32>
    %41 = tpu.iota {dimensions = array<i32: 1>} : vector<8x8xi32>
    %c7_i32 = arith.constant 7 : i32
    %42 = vector.broadcast %c7_i32 : i32 to vector<8x8xi32>
    %43 = arith.cmpi eq, %41, %42 : vector<8x8xi32>
    %cst_22 = arith.constant 1.000000e+00 : f32
    %44 = vector.broadcast %cst_22 : f32 to vector<8x8xf32>
    %45 = arith.select %43, %44, %40 : vector<8x8xi1>, vector<8x8xf32>
    %c8 = arith.constant 8 : index
    %c0_23 = arith.constant 0 : index
    %46 = vector.load %arg6[%c8, %c0_23] : memref<24x512xf32, #tpu.memory_space<vmem>>, vector<8x128xf32>
    %cst_24 = arith.constant dense<0.000000e+00> : vector<8x128xf32>
    %47 = tpu.matmul %45, %46, %cst_24 {dimension_numbers = #tpu.dot_dimension_numbers<[1], [0], [0], [1], [0, 0, 1, 1], [], []>} : vector<8x8xf32>, vector<8x128xf32>, vector<8x128xf32> -> vector<8x128xf32>
    %48 = vector.extract_strided_slice %47 {offsets = [0, 0], sizes = [8, 32], strides = [1, 1]} : vector<8x128xf32> to vector<8x32xf32>
    %49 = vector.extract_strided_slice %47 {offsets = [0, 32], sizes = [8, 8], strides = [1, 1]} : vector<8x128xf32> to vector<8x8xf32>
    %50 = vector.extract_strided_slice %47 {offsets = [0, 40], sizes = [8, 8], strides = [1, 1]} : vector<8x128xf32> to vector<8x8xf32>
    %51 = vector.extract_strided_slice %47 {offsets = [0, 48], sizes = [8, 8], strides = [1, 1]} : vector<8x128xf32> to vector<8x8xf32>
    %52 = vector.extract_strided_slice %47 {offsets = [0, 56], sizes = [8, 8], strides = [1, 1]} : vector<8x128xf32> to vector<8x8xf32>
    %53 = vector.extract_strided_slice %47 {offsets = [0, 64], sizes = [8, 8], strides = [1, 1]} : vector<8x128xf32> to vector<8x8xf32>
    %cst_25 = arith.constant 3.000000e-01 : f32
    %54 = vector.broadcast %cst_25 : f32 to vector<8x8xf32>
    %55 = arith.subf %49, %54 : vector<8x8xf32>
    %56 = arith.mulf %55, %55 : vector<8x8xf32>
    %cst_26 = arith.constant 0.000000e+00 : f32
    %57 = vector.broadcast %cst_26 : f32 to vector<8x8xf32>
    %58 = arith.subf %50, %57 : vector<8x8xf32>
    %59 = arith.mulf %58, %58 : vector<8x8xf32>
    %60 = arith.addf %56, %59 : vector<8x8xf32>
    %cst_27 = arith.constant 4.000000e-01 : f32
    %61 = vector.broadcast %cst_27 : f32 to vector<8x8xf32>
    %62 = arith.subf %51, %61 : vector<8x8xf32>
    %63 = arith.mulf %62, %62 : vector<8x8xf32>
    %64 = arith.addf %60, %63 : vector<8x8xf32>
    %65 = math.sqrt %64 : vector<8x8xf32>
    %66 = arith.subf %52, %65 : vector<8x8xf32>
    %cst_28 = arith.constant 0.000000e+00 : f32
    %67 = vector.broadcast %cst_28 : f32 to vector<8x8xf32>
    %68 = arith.maximumf %66, %67 : vector<8x8xf32>
    %cst_29 = arith.constant dense<0.000000e+00> : vector<8xf32>
    %69 = vector.multi_reduction <add>, %68, %cst_29 [1] : vector<8x8xf32> to vector<8xf32>
    %70 = vector.shape_cast %69 : vector<8xf32> to vector<8x1xf32>
    %71 = vector.extract_strided_slice %53 {offsets = [0, 0], sizes = [8, 3], strides = [1, 1]} : vector<8x8xf32> to vector<8x3xf32>
    %72 = vector.extract_strided_slice %53 {offsets = [0, 3], sizes = [8, 4], strides = [1, 1]} : vector<8x8xf32> to vector<8x4xf32>
    %73 = arith.mulf %72, %72 : vector<8x4xf32>
    %cst_30 = arith.constant dense<0.000000e+00> : vector<8xf32>
    %74 = vector.multi_reduction <add>, %73, %cst_30 [1] : vector<8x4xf32> to vector<8xf32>
    %75 = vector.shape_cast %74 : vector<8xf32> to vector<8x1xf32>
    %76 = math.sqrt %75 : vector<8x1xf32>
    %cst_31 = arith.constant 9.99999997E-7 : f32
    %77 = vector.broadcast %cst_31 : f32 to vector<8x1xf32>
    %78 = arith.addf %76, %77 : vector<8x1xf32>
    %79 = vector.broadcast %78 : vector<8x1xf32> to vector<8x4xf32>
    %80 = arith.divf %72, %79 : vector<8x4xf32>
    %81 = vector.extract_strided_slice %0 {offsets = [0, 0], sizes = [8, 3], strides = [1, 1]} : vector<8x16xf32> to vector<8x3xf32>
    %82 = vector.extract_strided_slice %0 {offsets = [0, 3], sizes = [8, 4], strides = [1, 1]} : vector<8x16xf32> to vector<8x4xf32>
    %83 = arith.subf %81, %71 : vector<8x3xf32>
    %84 = arith.mulf %83, %83 : vector<8x3xf32>
    %cst_32 = arith.constant dense<0.000000e+00> : vector<8xf32>
    %85 = vector.multi_reduction <add>, %84, %cst_32 [1] : vector<8x3xf32> to vector<8xf32>
    %86 = vector.shape_cast %85 : vector<8xf32> to vector<8x1xf32>
    %87 = math.sqrt %86 : vector<8x1xf32>
    %88 = arith.mulf %82, %80 : vector<8x4xf32>
    %cst_33 = arith.constant dense<0.000000e+00> : vector<8xf32>
    %89 = vector.multi_reduction <add>, %88, %cst_33 [1] : vector<8x4xf32> to vector<8xf32>
    %90 = vector.shape_cast %89 : vector<8xf32> to vector<8x1xf32>
    %91 = math.absf %90 : vector<8x1xf32>
    %cst_34 = arith.constant 1.000000e+00 : f32
    %92 = vector.broadcast %cst_34 : f32 to vector<8x1xf32>
    %93 = arith.subf %92, %91 : vector<8x1xf32>
    %94 = arith.addf %87, %93 : vector<8x1xf32>
    %cst_35 = arith.constant 0.000000e+00 : f32
    %95 = vector.broadcast %cst_35 : f32 to vector<8x8xf32>
    %96 = tpu.concatenate %48, %68, %70, %71, %80, %94, %81, %82, %95 in 1 : vector<8x32xf32>, vector<8x8xf32>, vector<8x1xf32>, vector<8x3xf32>, vector<8x4xf32>, vector<8x1xf32>, vector<8x3xf32>, vector<8x4xf32>, vector<8x8xf32> -> vector<8x64xf32>
    %c0_36 = arith.constant 0 : index
    %c0_37 = arith.constant 0 : index
    %97 = vector.load %arg4[%c0_36, %c0_37] : memref<320x256xbf16, #tpu.memory_space<vmem>>, vector<256x256xbf16>
    %c256 = arith.constant 256 : index
    %c0_38 = arith.constant 0 : index
    %98 = vector.load %arg4[%c256, %c0_38] : memref<320x256xbf16, #tpu.memory_space<vmem>>, vector<64x256xbf16>
    %c0_39 = arith.constant 0 : index
    %c0_40 = arith.constant 0 : index
    %99 = vector.load %arg5[%c0_39, %c0_40] : memref<384x128xbf16, #tpu.memory_space<vmem>>, vector<256x128xbf16>
    %c256_41 = arith.constant 256 : index
    %c0_42 = arith.constant 0 : index
    %100 = vector.load %arg5[%c256_41, %c0_42] : memref<384x128xbf16, #tpu.memory_space<vmem>>, vector<128x128xbf16>
    %101 = arith.truncf %96 : vector<8x64xf32> to vector<8x64xbf16>
    %cst_43 = arith.constant dense<0.000000e+00> : vector<8x256xf32>
    %102 = tpu.matmul %101, %98, %cst_43 {dimension_numbers = #tpu.dot_dimension_numbers<[1], [0], [0], [1], [0, 0, 1, 1], [], []>} : vector<8x64xbf16>, vector<64x256xbf16>, vector<8x256xf32> -> vector<8x256xf32>
    %c5 = arith.constant 5 : index
    %c0_44 = arith.constant 0 : index
    %103 = vector.load %arg6[%c5, %c0_44] : memref<24x512xf32, #tpu.memory_space<vmem>>, vector<1x256xf32>
    %104 = vector.broadcast %103 : vector<1x256xf32> to vector<8x256xf32>
    %105 = arith.addf %102, %104 : vector<8x256xf32>
    %cst_45 = arith.constant 0.000000e+00 : f32
    %cst_46 = arith.constant 6.000000e+00 : f32
    %106 = vector.broadcast %cst_45 : f32 to vector<8x256xf32>
    %107 = arith.maximumf %106, %105 : vector<8x256xf32>
    %108 = vector.broadcast %cst_46 : f32 to vector<8x256xf32>
    %109 = arith.minimumf %108, %107 : vector<8x256xf32>
    %110 = arith.truncf %109 : vector<8x256xf32> to vector<8x256xbf16>
    %cst_47 = arith.constant dense<0.000000e+00> : vector<8x256xf32>
    %111 = tpu.matmul %110, %97, %cst_47 {dimension_numbers = #tpu.dot_dimension_numbers<[1], [0], [0], [1], [0, 0, 1, 1], [], []>} : vector<8x256xbf16>, vector<256x256xbf16>, vector<8x256xf32> -> vector<8x256xf32>
    %c6 = arith.constant 6 : index
    %c0_48 = arith.constant 0 : index
    %112 = vector.load %arg6[%c6, %c0_48] : memref<24x512xf32, #tpu.memory_space<vmem>>, vector<1x256xf32>
    %113 = vector.broadcast %112 : vector<1x256xf32> to vector<8x256xf32>
    %114 = arith.addf %111, %113 : vector<8x256xf32>
    %cst_49 = arith.constant 0.000000e+00 : f32
    %cst_50 = arith.constant 6.000000e+00 : f32
    %115 = vector.broadcast %cst_49 : f32 to vector<8x256xf32>
    %116 = arith.maximumf %115, %114 : vector<8x256xf32>
    %117 = vector.broadcast %cst_50 : f32 to vector<8x256xf32>
    %118 = arith.minimumf %117, %116 : vector<8x256xf32>
    %119 = arith.truncf %118 : vector<8x256xf32> to vector<8x256xbf16>
    %cst_51 = arith.constant dense<0.000000e+00> : vector<8x128xf32>
    %120 = tpu.matmul %119, %99, %cst_51 {dimension_numbers = #tpu.dot_dimension_numbers<[1], [0], [0], [1], [0, 0, 1, 1], [], []>} : vector<8x256xbf16>, vector<256x128xbf16>, vector<8x128xf32> -> vector<8x128xf32>
    %c7 = arith.constant 7 : index
    %c0_52 = arith.constant 0 : index
    %121 = vector.load %arg6[%c7, %c0_52] : memref<24x512xf32, #tpu.memory_space<vmem>>, vector<1x128xf32>
    %122 = vector.broadcast %121 : vector<1x128xf32> to vector<8x128xf32>
    %123 = arith.addf %120, %122 : vector<8x128xf32>
    %cst_53 = arith.constant 0.000000e+00 : f32
    %cst_54 = arith.constant 6.000000e+00 : f32
    %124 = vector.broadcast %cst_53 : f32 to vector<8x128xf32>
    %125 = arith.maximumf %124, %123 : vector<8x128xf32>
    %126 = vector.broadcast %cst_54 : f32 to vector<8x128xf32>
    %127 = arith.minimumf %126, %125 : vector<8x128xf32>
    %128 = arith.truncf %127 : vector<8x128xf32> to vector<8x128xbf16>
    %cst_55 = arith.constant dense<0.000000e+00> : vector<8x128xf32>
    %129 = tpu.matmul %128, %100, %cst_55 {dimension_numbers = #tpu.dot_dimension_numbers<[1], [0], [0], [1], [0, 0, 1, 1], [], []>} : vector<8x128xbf16>, vector<128x128xbf16>, vector<8x128xf32> -> vector<8x128xf32>
    %c16 = arith.constant 16 : index
    %c0_56 = arith.constant 0 : index
    %130 = vector.load %arg6[%c16, %c0_56] : memref<24x512xf32, #tpu.memory_space<vmem>>, vector<1x128xf32>
    %131 = vector.broadcast %130 : vector<1x128xf32> to vector<8x128xf32>
    %132 = arith.addf %129, %131 : vector<8x128xf32>
    %133 = math.tanh %132 : vector<8x128xf32>
    %c4_57 = arith.constant 4 : index
    %c0_58 = arith.constant 0 : index
    %134 = vector.load %arg6[%c4_57, %c0_58] : memref<24x512xf32, #tpu.memory_space<vmem>>, vector<1x128xf32>
    %135 = vector.broadcast %134 : vector<1x128xf32> to vector<8x128xf32>
    %136 = arith.mulf %135, %133 : vector<8x128xf32>
    %c0_59 = arith.constant 0 : index
    %c0_60 = arith.constant 0 : index
    %137 = vector.load %arg7[%c0_59, %c0_60] : memref<8x128xf32, #tpu.memory_space<vmem>>, vector<8x128xf32>
    tpu.vector_store %arg7[%c0_59, %c0_60], %136 {strides = array<i32>} : memref<8x128xf32, #tpu.memory_space<vmem>>, vector<8x128xf32>,
    return
  }
  func.func @transform_0(%arg0: i32) -> (i32, i32) {
    %c0_i32 = arith.constant 0 : i32
    %c0_i32_0 = arith.constant 0 : i32
    return %arg0, %c0_i32 : i32, i32
  }
  func.func @transform_1(%arg0: i32) -> (i32, i32) {
    %c0_i32 = arith.constant 0 : i32
    %c0_i32_0 = arith.constant 0 : i32
    %c0_i32_1 = arith.constant 0 : i32
    return %c0_i32, %c0_i32_0 : i32, i32
  }
  func.func @transform_2(%arg0: i32) -> (i32, i32) {
    %c0_i32 = arith.constant 0 : i32
    %c0_i32_0 = arith.constant 0 : i32
    %c0_i32_1 = arith.constant 0 : i32
    return %c0_i32, %c0_i32_0 : i32, i32
  }
  func.func @transform_3(%arg0: i32) -> (i32, i32) {
    %c0_i32 = arith.constant 0 : i32
    %c0_i32_0 = arith.constant 0 : i32
    %c0_i32_1 = arith.constant 0 : i32
    return %c0_i32, %c0_i32_0 : i32, i32
  }
  func.func @transform_4(%arg0: i32) -> (i32, i32) {
    %c0_i32 = arith.constant 0 : i32
    %c0_i32_0 = arith.constant 0 : i32
    %c0_i32_1 = arith.constant 0 : i32
    return %c0_i32, %c0_i32_0 : i32, i32
  }
  func.func @transform_5(%arg0: i32) -> (i32, i32) {
    %c0_i32 = arith.constant 0 : i32
    %c0_i32_0 = arith.constant 0 : i32
    %c0_i32_1 = arith.constant 0 : i32
    return %c0_i32, %c0_i32_0 : i32, i32
  }
  func.func @transform_6(%arg0: i32) -> (i32, i32) {
    %c0_i32 = arith.constant 0 : i32
    %c0_i32_0 = arith.constant 0 : i32
    return %arg0, %c0_i32 : i32, i32
  }
}

</mosaic_0001>

<llo_original>
// kernel: curobo_forward.1
$region0: #{curobo_forward.1}
  #allocation0 [shape = 'u32[]', space=smem, size = 0x4, offset = 0x4, fixed_abs, tag = 'smem constant byte address 0x4 - core index']
  #allocation1 [shape = 'u32[144,128]{1,0:T(1,128)}', space=vmem, size = 0x12000, scoped, tag = 'internal scratch']
  %s0 = inlined_call_operand.vmem [shape: f32[8,16], index: 0, kind: input, shape index: {}]
  %s1 = inlined_call_operand.hbm [shape: bf16[1040,512], index: 1, kind: input, shape index: {}]
  %s2 = inlined_call_operand.vmem [shape: bf16[512,8], index: 2, kind: input, shape index: {}]
  %s3 = inlined_call_operand.hbm [shape: bf16[320,256], index: 3, kind: input, shape index: {}]
  %s4 = inlined_call_operand.hbm [shape: bf16[384,128], index: 4, kind: input, shape index: {}]
  %s5 = inlined_call_operand.hbm [shape: f32[24,512], index: 5, kind: input, shape index: {}]
  %s6 = inlined_call_operand.vmem [shape: f32[8,128], index: 6, kind: output, shape index: {}]
  %s7 = sld [smem:[#allocation0]]
  $region50: #{curobo_forward.1} parent=0
    _
  %s9 = ssub.s32 1, %s7
  %s10 = scalar_select 0, %s9, %s7
  $region1: #{curobo_forward.1} parent=0
    #allocation2 [shape = 'u8[1064960]{0}', space=vmem, size = 0x104000, scoped, tag = 'input window, operand 1, single buffered']
    #allocation3 [shape = 's32[1]{0}', space=sflag, size = 0x4, scoped, tag = 'scoped memory for curobo_forward.1']
    #allocation4 [shape = 'u8[163840]{0}', space=vmem, size = 0x28000, scoped, tag = 'input window, operand 3, single buffered']
    #allocation5 [shape = 's32[1]{0}', space=sflag, size = 0x4, scoped, tag = 'scoped memory for curobo_forward.1']
    #allocation6 [shape = 'u8[98304]{0}', space=vmem, size = 0x18000, scoped, tag = 'input window, operand 4, single buffered']
    #allocation7 [shape = 'u8[49152]{0}', space=vmem, size = 0xc000, scoped, tag = 'input window, operand 5, single buffered']
    #allocation8 [shape = 's32[1]{0}', space=sflag, size = 0x4, scoped, tag = 'scoped memory for curobo_forward.1']
    %11 = vsyncpa [#allocation3], 0
    %12 = vsyncpa [#allocation5], 0
    %13 = vsyncpa [#allocation8], 0
    // Predicated region
    $region2: #{curobo_forward.1} parent=1 // pred_check
      _
    $region3: #{curobo_forward.1} parent=1 // pred_check_branch
      %15 = sbr.rel (0) target = $region5
    $region4: #{curobo_forward.1} parent=1 // pred_region
      _
    $region5: #{curobo_forward.1} parent=1 // pred_fallthru
      _
    // Predicated region
    $region6: #{curobo_forward.1} parent=1 // pred_check
      _
    $region7: #{curobo_forward.1} parent=1 // pred_check_branch
      %17 = sbr.rel (0) target = $region9
    $region8: #{curobo_forward.1} parent=1 // pred_region
      %s19 = ssub.s32 33280, 33280
      %20 = vsyncadd [#allocation3], %s19
      %s21 = sshll.u32 [#allocation2], 4
      %s22 = int_to_ptr.vmem [resolvable:$true] %s21
      %27 = dma.hbm_to_vmem [thread:$0]  %s1, 33280, %s22, [#allocation3], 256, 256, 16
    $region9: #{curobo_forward.1} parent=1 // pred_fallthru
      _
    // Predicated region
    $region10: #{curobo_forward.1} parent=1 // pred_check
      _
    $region11: #{curobo_forward.1} parent=1 // pred_check_branch
      %29 = sbr.rel (0) target = $region13
    $region12: #{curobo_forward.1} parent=1 // pred_region
      _
    $region13: #{curobo_forward.1} parent=1 // pred_fallthru
      _
    // Predicated region
    $region14: #{curobo_forward.1} parent=1 // pred_check
      _
    $region15: #{curobo_forward.1} parent=1 // pred_check_branch
      %31 = sbr.rel (0) target = $region17
    $region16: #{curobo_forward.1} parent=1 // pred_region
      %s33 = ssub.s32 5120, 5120
      %34 = vsyncadd [#allocation5], %s33
      %s35 = sshll.u32 [#allocation4], 4
      %s36 = int_to_ptr.vmem [resolvable:$true] %s35
      %41 = dma.hbm_to_vmem [thread:$0]  %s3, 5120, %s36, [#allocation5], 128, 128, 8
    $region17: #{curobo_forward.1} parent=1 // pred_fallthru
      _
    // Predicated region
    $region18: #{curobo_forward.1} parent=1 // pred_check
      _
    $region19: #{curobo_forward.1} parent=1 // pred_check_branch
      %43 = sbr.rel (0) target = $region21
    $region20: #{curobo_forward.1} parent=1 // pred_region
      %s45 = ssub.s32 3072, 3072
      %46 = vsyncadd [#allocation5], %s45
      %s47 = sshll.u32 [#allocation6], 4
      %s48 = int_to_ptr.vmem [resolvable:$true] %s47
      %53 = dma.hbm_to_vmem [thread:$0]  %s4, 3072, %s48, [#allocation5], 64, 64, 4
    $region21: #{curobo_forward.1} parent=1 // pred_fallthru
      _
    // Predicated region
    $region22: #{curobo_forward.1} parent=1 // pred_check
      _
    $region23: #{curobo_forward.1} parent=1 // pred_check_branch
      %55 = sbr.rel (0) target = $region25
    $region24: #{curobo_forward.1} parent=1 // pred_region
      %s57 = ssub.s32 1536, 1536
      %58 = vsyncadd [#allocation8], %s57
      %s59 = sshll.u32 [#allocation7], 4
      %s60 = int_to_ptr.vmem [resolvable:$true] %s59
      %65 = dma.hbm_to_vmem [thread:$0]  %s5, 1536, %s60, [#allocation8], 512, 512, 32
    $region25: #{curobo_forward.1} parent=1 // pred_fallthru
      _
    // Predicated region
    $region26: #{curobo_forward.1} parent=1 // pred_check
      _
    $region27: #{curobo_forward.1} parent=1 // pred_check_branch
      %67 = sbr.rel (0) target = $region29
    $region28: #{curobo_forward.1} parent=1 // pred_region
      %68 = dma.done [#allocation3], 33280
    $region29: #{curobo_forward.1} parent=1 // pred_fallthru
      _
    // Predicated region
    $region30: #{curobo_forward.1} parent=1 // pred_check
      _
    $region31: #{curobo_forward.1} parent=1 // pred_check_branch
      %70 = sbr.rel (0) target = $region33
    $region32: #{curobo_forward.1} parent=1 // pred_region
      %71 = dma.done [#allocation5], 5120
    $region33: #{curobo_forward.1} parent=1 // pred_fallthru
      _
    // Predicated region
    $region34: #{curobo_forward.1} parent=1 // pred_check
      _
    $region35: #{curobo_forward.1} parent=1 // pred_check_branch
      %73 = sbr.rel (0) target = $region37
    $region36: #{curobo_forward.1} parent=1 // pred_region
      %74 = dma.done [#allocation5], 3072
    $region37: #{curobo_forward.1} parent=1 // pred_fallthru
      _
    // Predicated region
    $region38: #{curobo_forward.1} parent=1 // pred_check
      _
    $region39: #{curobo_forward.1} parent=1 // pred_check_branch
      %76 = sbr.rel (0) target = $region41
    $region40: #{curobo_forward.1} parent=1 // pred_region
      %77 = dma.done [#allocation8], 1536
    $region41: #{curobo_forward.1} parent=1 // pred_fallthru
      _
    %v79 = vld [vmem:[%s0] sm:$0xff]
    %v80 = vld [vmem:[#allocation2] sm:$0xff]
    %v81 = vld [vmem:[#allocation2 + $0x8] sm:$0xff]
    %v82 = vld [vmem:[#allocation2 + $0x10] sm:$0xff]
    %v83 = vld [vmem:[#allocation2 + $0x18] sm:$0xff]
    %v84 = vld [vmem:[#allocation2 + $0x20] sm:$0xff]
    %v85 = vld [vmem:[#allocation2 + $0x28] sm:$0xff]
    %v86 = vld [vmem:[#allocation2 + $0x30] sm:$0xff]
    %v87 = vld [vmem:[#allocation2 + $0x38] sm:$0xff]
    %v88 = vld [vmem:[#allocation2 + $0x40] sm:$0xff]
    %v89 = vld [vmem:[#allocation2 + $0x48] sm:$0xff]
    %v90 = vld [vmem:[#allocation2 + $0x50] sm:$0xff]
    %v91 = vld [vmem:[#allocation2 + $0x58] sm:$0xff]
    %v92 = vld [vmem:[#allocation2 + $0x60] sm:$0xff]
    %v93 = vld [vmem:[#allocation2 + $0x68] sm:$0xff]
    %v94 = vld [vmem:[#allocation2 + $0x70] sm:$0xff]
    %v95 = vld [vmem:[#allocation2 + $0x78] sm:$0xff]
    %v96 = vld [vmem:[#allocation2 + $0x80] sm:$0xff]
    %v97 = vld [vmem:[#allocation2 + $0x88] sm:$0xff]
    %v98 = vld [vmem:[#allocation2 + $0x90] sm:$0xff]
    %v99 = vld [vmem:[#allocation2 + $0x98] sm:$0xff]
    %v100 = vld [vmem:[#allocation2 + $0xa0] sm:$0xff]
    %v101 = vld [vmem:[#allocation2 + $0xa8] sm:$0xff]
    %v102 = vld [vmem:[#allocation2 + $0xb0] sm:$0xff]
    %v103 = vld [vmem:[#allocation2 + $0xb8] sm:$0xff]
    %v104 = vld [vmem:[#allocation2 + $0xc0] sm:$0xff]
    %v105 = vld [vmem:[#allocation2 + $0xc8] sm:$0xff]
    %v106 = vld [vmem:[#allocation2 + $0xd0] sm:$0xff]
    %v107 = vld [vmem:[#allocation2 + $0xd8] sm:$0xff]
    %v108 = vld [vmem:[#allocation2 + $0xe0] sm:$0xff]
    %v109 = vld [vmem:[#allocation2 + $0xe8] sm:$0xff]
    %v110 = vld [vmem:[#allocation2 + $0xf0] sm:$0xff]
    %v111 = vld [vmem:[#allocation2 + $0xf8] sm:$0xff]
    %v112 = vld [vmem:[#allocation2 + $0x100] sm:$0xff]
    %v113 = vld [vmem:[#allocation2 + $0x108] sm:$0xff]
    %v114 = vld [vmem:[#allocation2 + $0x110] sm:$0xff]
    %v115 = vld [vmem:[#allocation2 + $0x118] sm:$0xff]
    %v116 = vld [vmem:[#allocation2 + $0x120] sm:$0xff]
    %v117 = vld [vmem:[#allocation2 + $0x128] sm:$0xff]
    %v118 = vld [vmem:[#allocation2 + $0x130] sm:$0xff]
    %v119 = vld [vmem:[#allocation2 + $0x138] sm:$0xff]
    %v120 = vld [vmem:[#allocation2 + $0x140] sm:$0xff]
    %v121 = vld [vmem:[#allocation2 + $0x148] sm:$0xff]
    %v122 = vld [vmem:[#allocation2 + $0x150] sm:$0xff]
    %v123 = vld [vmem:[#allocation2 + $0x158] sm:$0xff]
    %v124 = vld [vmem:[#allocation2 + $0x160] sm:$0xff]
    %v125 = vld [vmem:[#allocation2 + $0x168] sm:$0xff]
    %v126 = vld [vmem:[#allocation2 + $0x170] sm:$0xff]
    %v127 = vld [vmem:[#allocation2 + $0x178] sm:$0xff]
    %v128 = vld [vmem:[#allocation2 + $0x180] sm:$0xff]
    %v129 = vld [vmem:[#allocation2 + $0x188] sm:$0xff]
    %v130 = vld [vmem:[#allocation2 + $0x190] sm:$0xff]
    %v131 = vld [vmem:[#allocation2 + $0x198] sm:$0xff]
    %v132 = vld [vmem:[#allocation2 + $0x1a0] sm:$0xff]
    %v133 = vld [vmem:[#allocation2 + $0x1a8] sm:$0xff]
    %v134 = vld [vmem:[#allocation2 + $0x1b0] sm:$0xff]
    %v135 = vld [vmem:[#allocation2 + $0x1b8] sm:$0xff]
    %v136 = vld [vmem:[#allocation2 + $0x1c0] sm:$0xff]
    %v137 = vld [vmem:[#allocation2 + $0x1c8] sm:$0xff]
    %v138 = vld [vmem:[#allocation2 + $0x1d0] sm:$0xff]
    %v139 = vld [vmem:[#allocation2 + $0x1d8] sm:$0xff]
    %v140 = vld [vmem:[#allocation2 + $0x1e0] sm:$0xff]
    %v141 = vld [vmem:[#allocation2 + $0x1e8] sm:$0xff]
    %v142 = vld [vmem:[#allocation2 + $0x1f0] sm:$0xff]
    %v143 = vld [vmem:[#allocation2 + $0x1f8] sm:$0xff]
    %v144 = vld [vmem:[#allocation2 + $0x200] sm:$0xff]
    %v145 = vld [vmem:[#allocation2 + $0x208] sm:$0xff]
    %v146 = vld [vmem:[#allocation2 + $0x210] sm:$0xff]
    %v147 = vld [vmem:[#allocation2 + $0x218] sm:$0xff]
    %v148 = vld [vmem:[#allocation2 + $0x220] sm:$0xff]
    %v149 = vld [vmem:[#allocation2 + $0x228] sm:$0xff]
    %v150 = vld [vmem:[#allocation2 + $0x230] sm:$0xff]
    %v151 = vld [vmem:[#allocation2 + $0x238] sm:$0xff]
    %v152 = vld [vmem:[#allocation2 + $0x240] sm:$0xff]
    %v153 = vld [vmem:[#allocation2 + $0x248] sm:$0xff]
    %v154 = vld [vmem:[#allocation2 + $0x250] sm:$0xff]
    %v155 = vld [vmem:[#allocation2 + $0x258] sm:$0xff]
    %v156 = vld [vmem:[#allocation2 + $0x260] sm:$0xff]
    %v157 = vld [vmem:[#allocation2 + $0x268] sm:$0xff]
    %v158 = vld [vmem:[#allocation2 + $0x270] sm:$0xff]
    %v159 = vld [vmem:[#allocation2 + $0x278] sm:$0xff]
    %v160 = vld [vmem:[#allocation2 + $0x280] sm:$0xff]
    %v161 = vld [vmem:[#allocation2 + $0x288] sm:$0xff]
    %v162 = vld [vmem:[#allocation2 + $0x290] sm:$0xff]
    %v163 = vld [vmem:[#allocation2 + $0x298] sm:$0xff]
    %v164 = vld [vmem:[#allocation2 + $0x2a0] sm:$0xff]
    %v165 = vld [vmem:[#allocation2 + $0x2a8] sm:$0xff]
    %v166 = vld [vmem:[#allocation2 + $0x2b0] sm:$0xff]
    %v167 = vld [vmem:[#allocation2 + $0x2b8] sm:$0xff]
    %v168 = vld [vmem:[#allocation2 + $0x2c0] sm:$0xff]
    %v169 = vld [vmem:[#allocation2 + $0x2c8] sm:$0xff]
    %v170 = vld [vmem:[#allocation2 + $0x2d0] sm:$0xff]
    %v171 = vld [vmem:[#allocation2 + $0x2d8] sm:$0xff]
    %v172 = vld [vmem:[#allocation2 + $0x2e0] sm:$0xff]
    %v173 = vld [vmem:[#allocation2 + $0x2e8] sm:$0xff]
    %v174 = vld [vmem:[#allocation2 + $0x2f0] sm:$0xff]
    %v175 = vld [vmem:[#allocation2 + $0x2f8] sm:$0xff]
    %v176 = vld [vmem:[#allocation2 + $0x300] sm:$0xff]
    %v177 = vld [vmem:[#allocation2 + $0x308] sm:$0xff]
    %v178 = vld [vmem:[#allocation2 + $0x310] sm:$0xff]
    %v179 = vld [vmem:[#allocation2 + $0x318] sm:$0xff]
    %v180 = vld [vmem:[#allocation2 + $0x320] sm:$0xff]
    %v181 = vld [vmem:[#allocation2 + $0x328] sm:$0xff]
    %v182 = vld [vmem:[#allocation2 + $0x330] sm:$0xff]
    %v183 = vld [vmem:[#allocation2 + $0x338] sm:$0xff]
    %v184 = vld [vmem:[#allocation2 + $0x340] sm:$0xff]
    %v185 = vld [vmem:[#allocation2 + $0x348] sm:$0xff]
    %v186 = vld [vmem:[#allocation2 + $0x350] sm:$0xff]
    %v187 = vld [vmem:[#allocation2 + $0x358] sm:$0xff]
    %v188 = vld [vmem:[#allocation2 + $0x360] sm:$0xff]
    %v189 = vld [vmem:[#allocation2 + $0x368] sm:$0xff]
    %v190 = vld [vmem:[#allocation2 + $0x370] sm:$0xff]
    %v191 = vld [vmem:[#allocation2 + $0x378] sm:$0xff]
    %v192 = vld [vmem:[#allocation2 + $0x380] sm:$0xff]
    %v193 = vld [vmem:[#allocation2 + $0x388] sm:$0xff]
    %v194 = vld [vmem:[#allocation2 + $0x390] sm:$0xff]
    %v195 = vld [vmem:[#allocation2 + $0x398] sm:$0xff]
    %v196 = vld [vmem:[#allocation2 + $0x3a0] sm:$0xff]
    %v197 = vld [vmem:[#allocation2 + $0x3a8] sm:$0xff]
    %v198 = vld [vmem:[#allocation2 + $0x3b0] sm:$0xff]
    %v199 = vld [vmem:[#allocation2 + $0x3b8] sm:$0xff]
    %v200 = vld [vmem:[#allocation2 + $0x3c0] sm:$0xff]
    %v201 = vld [vmem:[#allocation2 + $0x3c8] sm:$0xff]
    %v202 = vld [vmem:[#allocation2 + $0x3d0] sm:$0xff]
    %v203 = vld [vmem:[#allocation2 + $0x3d8] sm:$0xff]
    %v204 = vld [vmem:[#allocation2 + $0x3e0] sm:$0xff]
    %v205 = vld [vmem:[#allocation2 + $0x3e8] sm:$0xff]
    %v206 = vld [vmem:[#allocation2 + $0x3f0] sm:$0xff]
    %v207 = vld [vmem:[#allocation2 + $0x3f8] sm:$0xff]
    %v208 = vld [vmem:[#allocation2 + $0x400] sm:$0xff]
    %v209 = vld [vmem:[#allocation2 + $0x408] sm:$0xff]
    %v210 = vld [vmem:[#allocation2 + $0x410] sm:$0xff]
    %v211 = vld [vmem:[#allocation2 + $0x418] sm:$0xff]
    %v212 = vld [vmem:[#allocation2 + $0x420] sm:$0xff]
    %v213 = vld [vmem:[#allocation2 + $0x428] sm:$0xff]
    %v214 = vld [vmem:[#allocation2 + $0x430] sm:$0xff]
    %v215 = vld [vmem:[#allocation2 + $0x438] sm:$0xff]
    %v216 = vld [vmem:[#allocation2 + $0x440] sm:$0xff]
    %v217 = vld [vmem:[#allocation2 + $0x448] sm:$0xff]
    %v218 = vld [vmem:[#allocation2 + $0x450] sm:$0xff]
    %v219 = vld [vmem:[#allocation2 + $0x458] sm:$0xff]
    %v220 = vld [vmem:[#allocation2 + $0x460] sm:$0xff]
    %v221 = vld [vmem:[#allocation2 + $0x468] sm:$0xff]
    %v222 = vld [vmem:[#allocation2 + $0x470] sm:$0xff]
    %v223 = vld [vmem:[#allocation2 + $0x478] sm:$0xff]
    %v224 = vld [vmem:[#allocation2 + $0x480] sm:$0xff]
    %v225 = vld [vmem:[#allocation2 + $0x488] sm:$0xff]
    %v226 = vld [vmem:[#allocation2 + $0x490] sm:$0xff]
    %v227 = vld [vmem:[#allocation2 + $0x498] sm:$0xff]
    %v228 = vld [vmem:[#allocation2 + $0x4a0] sm:$0xff]
    %v229 = vld [vmem:[#allocation2 + $0x4a8] sm:$0xff]
    %v230 = vld [vmem:[#allocation2 + $0x4b0] sm:$0xff]
    %v231 = vld [vmem:[#allocation2 + $0x4b8] sm:$0xff]
    %v232 = vld [vmem:[#allocation2 + $0x4c0] sm:$0xff]
    %v233 = vld [vmem:[#allocation2 + $0x4c8] sm:$0xff]
    %v234 = vld [vmem:[#allocation2 + $0x4d0] sm:$0xff]
    %v235 = vld [vmem:[#allocation2 + $0x4d8] sm:$0xff]
    %v236 = vld [vmem:[#allocation2 + $0x4e0] sm:$0xff]
    %v237 = vld [vmem:[#allocation2 + $0x4e8] sm:$0xff]
    %v238 = vld [vmem:[#allocation2 + $0x4f0] sm:$0xff]
    %v239 = vld [vmem:[#allocation2 + $0x4f8] sm:$0xff]
    %v240 = vld [vmem:[#allocation2 + $0x500] sm:$0xff]
    %v241 = vld [vmem:[#allocation2 + $0x508] sm:$0xff]
    %v242 = vld [vmem:[#allocation2 + $0x510] sm:$0xff]
    %v243 = vld [vmem:[#allocation2 + $0x518] sm:$0xff]
    %v244 = vld [vmem:[#allocation2 + $0x520] sm:$0xff]
    %v245 = vld [vmem:[#allocation2 + $0x528] sm:$0xff]
    %v246 = vld [vmem:[#allocation2 + $0x530] sm:$0xff]
    %v247 = vld [vmem:[#allocation2 + $0x538] sm:$0xff]
    %v248 = vld [vmem:[#allocation2 + $0x540] sm:$0xff]
    %v249 = vld [vmem:[#allocation2 + $0x548] sm:$0xff]
    %v250 = vld [vmem:[#allocation2 + $0x550] sm:$0xff]
    %v251 = vld [vmem:[#allocation2 + $0x558] sm:$0xff]
    %v252 = vld [vmem:[#allocation2 + $0x560] sm:$0xff]
    %v253 = vld [vmem:[#allocation2 + $0x568] sm:$0xff]
    %v254 = vld [vmem:[#allocation2 + $0x570] sm:$0xff]
    %v255 = vld [vmem:[#allocation2 + $0x578] sm:$0xff]
    %v256 = vld [vmem:[#allocation2 + $0x580] sm:$0xff]
    %v257 = vld [vmem:[#allocation2 + $0x588] sm:$0xff]
    %v258 = vld [vmem:[#allocation2 + $0x590] sm:$0xff]
    %v259 = vld [vmem:[#allocation2 + $0x598] sm:$0xff]
    %v260 = vld [vmem:[#allocation2 + $0x5a0] sm:$0xff]
    %v261 = vld [vmem:[#allocation2 + $0x5a8] sm:$0xff]
    %v262 = vld [vmem:[#allocation2 + $0x5b0] sm:$0xff]
    %v263 = vld [vmem:[#allocation2 + $0x5b8] sm:$0xff]
    %v264 = vld [vmem:[#allocation2 + $0x5c0] sm:$0xff]
    %v265 = vld [vmem:[#allocation2 + $0x5c8] sm:$0xff]
    %v266 = vld [vmem:[#allocation2 + $0x5d0] sm:$0xff]
    %v267 = vld [vmem:[#allocation2 + $0x5d8] sm:$0xff]
    %v268 = vld [vmem:[#allocation2 + $0x5e0] sm:$0xff]
    %v269 = vld [vmem:[#allocation2 + $0x5e8] sm:$0xff]
    %v270 = vld [vmem:[#allocation2 + $0x5f0] sm:$0xff]
    %v271 = vld [vmem:[#allocation2 + $0x5f8] sm:$0xff]
    %v272 = vld [vmem:[#allocation2 + $0x600] sm:$0xff]
    %v273 = vld [vmem:[#allocation2 + $0x608] sm:$0xff]
    %v274 = vld [vmem:[#allocation2 + $0x610] sm:$0xff]
    %v275 = vld [vmem:[#allocation2 + $0x618] sm:$0xff]
    %v276 = vld [vmem:[#allocation2 + $0x620] sm:$0xff]
    %v277 = vld [vmem:[#allocation2 + $0x628] sm:$0xff]
    %v278 = vld [vmem:[#allocation2 + $0x630] sm:$0xff]
    %v279 = vld [vmem:[#allocation2 + $0x638] sm:$0xff]
    %v280 = vld [vmem:[#allocation2 + $0x640] sm:$0xff]
    %v281 = vld [vmem:[#allocation2 + $0x648] sm:$0xff]
    %v282 = vld [vmem:[#allocation2 + $0x650] sm:$0xff]
    %v283 = vld [vmem:[#allocation2 + $0x658] sm:$0xff]
    %v284 = vld [vmem:[#allocation2 + $0x660] sm:$0xff]
    %v285 = vld [vmem:[#allocation2 + $0x668] sm:$0xff]
    %v286 = vld [vmem:[#allocation2 + $0x670] sm:$0xff]
    %v287 = vld [vmem:[#allocation2 + $0x678] sm:$0xff]
    %v288 = vld [vmem:[#allocation2 + $0x680] sm:$0xff]
    %v289 = vld [vmem:[#allocation2 + $0x688] sm:$0xff]
    %v290 = vld [vmem:[#allocation2 + $0x690] sm:$0xff]
    %v291 = vld [vmem:[#allocation2 + $0x698] sm:$0xff]
    %v292 = vld [vmem:[#allocation2 + $0x6a0] sm:$0xff]
    %v293 = vld [vmem:[#allocation2 + $0x6a8] sm:$0xff]
    %v294 = vld [vmem:[#allocation2 + $0x6b0] sm:$0xff]
    %v295 = vld [vmem:[#allocation2 + $0x6b8] sm:$0xff]
    %v296 = vld [vmem:[#allocation2 + $0x6c0] sm:$0xff]
    %v297 = vld [vmem:[#allocation2 + $0x6c8] sm:$0xff]
    %v298 = vld [vmem:[#allocation2 + $0x6d0] sm:$0xff]
    %v299 = vld [vmem:[#allocation2 + $0x6d8] sm:$0xff]
    %v300 = vld [vmem:[#allocation2 + $0x6e0] sm:$0xff]
    %v301 = vld [vmem:[#allocation2 + $0x6e8] sm:$0xff]
    %v302 = vld [vmem:[#allocation2 + $0x6f0] sm:$0xff]
    %v303 = vld [vmem:[#allocation2 + $0x6f8] sm:$0xff]
    %v304 = vld [vmem:[#allocation2 + $0x700] sm:$0xff]
    %v305 = vld [vmem:[#allocation2 + $0x708] sm:$0xff]
    %v306 = vld [vmem:[#allocation2 + $0x710] sm:$0xff]
    %v307 = vld [vmem:[#allocation2 + $0x718] sm:$0xff]
    %v308 = vld [vmem:[#allocation2 + $0x720] sm:$0xff]
    %v309 = vld [vmem:[#allocation2 + $0x728] sm:$0xff]
    %v310 = vld [vmem:[#allocation2 + $0x730] sm:$0xff]
    %v311 = vld [vmem:[#allocation2 + $0x738] sm:$0xff]
    %v312 = vld [vmem:[#allocation2 + $0x740] sm:$0xff]
    %v313 = vld [vmem:[#allocation2 + $0x748] sm:$0xff]
    %v314 = vld [vmem:[#allocation2 + $0x750] sm:$0xff]
    %v315 = vld [vmem:[#allocation2 + $0x758] sm:$0xff]
    %v316 = vld [vmem:[#allocation2 + $0x760] sm:$0xff]
    %v317 = vld [vmem:[#allocation2 + $0x768] sm:$0xff]
    %v318 = vld [vmem:[#allocation2 + $0x770] sm:$0xff]
    %v319 = vld [vmem:[#allocation2 + $0x778] sm:$0xff]
    %v320 = vld [vmem:[#allocation2 + $0x780] sm:$0xff]
    %v321 = vld [vmem:[#allocation2 + $0x788] sm:$0xff]
    %v322 = vld [vmem:[#allocation2 + $0x790] sm:$0xff]
    %v323 = vld [vmem:[#allocation2 + $0x798] sm:$0xff]
    %v324 = vld [vmem:[#allocation2 + $0x7a0] sm:$0xff]
    %v325 = vld [vmem:[#allocation2 + $0x7a8] sm:$0xff]
    %v326 = vld [vmem:[#allocation2 + $0x7b0] sm:$0xff]
    %v327 = vld [vmem:[#allocation2 + $0x7b8] sm:$0xff]
    %v328 = vld [vmem:[#allocation2 + $0x7c0] sm:$0xff]
    %v329 = vld [vmem:[#allocation2 + $0x7c8] sm:$0xff]
    %v330 = vld [vmem:[#allocation2 + $0x7d0] sm:$0xff]
    %v331 = vld [vmem:[#allocation2 + $0x7d8] sm:$0xff]
    %v332 = vld [vmem:[#allocation2 + $0x7e0] sm:$0xff]
    %v333 = vld [vmem:[#allocation2 + $0x7e8] sm:$0xff]
    %v334 = vld [vmem:[#allocation2 + $0x7f0] sm:$0xff]
    %v335 = vld [vmem:[#allocation2 + $0x7f8] sm:$0xff]
    %v336 = vld [vmem:[#allocation2 + $0x800] sm:$0xff]
    %v337 = vld [vmem:[#allocation2 + $0x808] sm:$0xff]
    %v338 = vld [vmem:[#allocation2 + $0x810] sm:$0xff]
    %v339 = vld [vmem:[#allocation2 + $0x818] sm:$0xff]
    %v340 = vpack.c.bf16 %v79, %v79
    %v341 = vld [vmem:[#allocation7] ss:$8 sm:$0xf]
    %v343 = vlaneseq
    %v344 = vshrl.u32 %v343, 7
    %v345 = vsub.s32 0, %v344
    %v346 = vrot.slane %v341, %v345
    %v347 = vlaneseq
    %v348 = vshrl.u32 %v347, 7
    %v349 = vsub.s32 1, %v348
    %v350 = vrot.slane %v341, %v349
    %v351 = vlaneseq
    %v352 = vshrl.u32 %v351, 7
    %v353 = vsub.s32 2, %v352
    %v354 = vrot.slane %v341, %v353
    %v355 = vlaneseq
    %v356 = vshrl.u32 %v355, 7
    %v357 = vsub.s32 3, %v356
    %v358 = vrot.slane %v341, %v357
    %v367 = vunpack.c.l.b16 %v336
    %v368 = vunpack.c.h.b16 %v336
    %v369 = vunpack.c.l.b16 %v337
    %v370 = vunpack.c.h.b16 %v337
    %v371 = vunpack.c.l.b16 %v338
    %v372 = vunpack.c.h.b16 %v338
    %v373 = vunpack.c.l.b16 %v339
    %v374 = vunpack.c.h.b16 %v339
    %v375 = vpack.c.b16 %v371, %v367
    %v376 = vpack.c.b16 %v372, %v368
    %v377 = vpack.c.b16 %v373, %v369
    %v378 = vpack.c.b16 %v374, %v370
    %vm383 = vcmask 130048
    %v385 = vsel %vm383, %v340, 0
    %387 = vmatprep.subr.bf16.mxu0 %v376
    %388 = vmatpush1.bf16.msra.mxu0 %v375
    %389 = vmatprep.subr.bf16.mxu0 0
    %390 = vmatpush1.bf16.msra.mxu0 0
    %391 = vmatprep.subr.bf16.mxu0 0
    %392 = vmatpush1.bf16.msra.mxu0 0
    %393 = vmatprep.subr.bf16.mxu0 0
    %394 = vmatpush1.bf16.msra.mxu0 0
    %395 = vmatprep.subr.bf16.mxu0 0
    %396 = vmatpush1.bf16.msra.mxu0 0
    %397 = vmatprep.subr.bf16.mxu0 0
    %398 = vmatpush1.bf16.msra.mxu0 0
    %399 = vmatprep.subr.bf16.mxu0 0
    %400 = vmatpush1.bf16.msra.mxu0 0
    %401 = vmatprep.subr.bf16.mxu0 0
    %402 = vmatpush1.bf16.msra.mxu0 0
    %403 = vmatprep.subr.bf16.mxu0 0
    %404 = vmatpush1.bf16.msra.mxu0 0
    %405 = vmatprep.subr.bf16.mxu0 0
    %406 = vmatpush1.bf16.msra.mxu0 0
    %407 = vmatprep.subr.bf16.mxu0 0
    %408 = vmatpush1.bf16.msra.mxu0 0
    %409 = vmatprep.subr.bf16.mxu0 0
    %410 = vmatpush1.bf16.msra.mxu0 0
    %411 = vmatprep.subr.bf16.mxu0 0
    %412 = vmatpush1.bf16.msra.mxu0 0
    %413 = vmatprep.subr.bf16.mxu0 0
    %414 = vmatpush1.bf16.msra.mxu0 0
    %415 = vmatprep.subr.bf16.mxu0 0
    %416 = vmatpush1.bf16.msra.mxu0 0
    %417 = vmatprep.subr.bf16.mxu0 0
    %418 = vmatpush1.bf16.msra.mxu0 0
    %419 = vmatprep.mubr.bf16.mxu0 0
    %420 = vmatmul.mubr.bf16.gmra.mrb[0].mxu0 %v385
    %v421 = vpop.f32.mrb[0].mxu0
    %v422 = vadd.f32 %v346, %v421
    %v423 = vpop.f32.mrb[0].mxu0
    %v424 = vadd.f32 %v350, %v423
    %v425 = vpop.f32.mrb[0].mxu0
    %v426 = vpop.f32.mrb[0].mxu0
    %427 = vdwg.mxu0
    %428 = vmatprep.subr.bf16.mxu0 %v378
    %429 = vmatpush1.bf16.msra.mxu0 %v377
    %430 = vmatprep.subr.bf16.mxu0 0
    %431 = vmatpush1.bf16.msra.mxu0 0
    %432 = vmatprep.subr.bf16.mxu0 0
    %433 = vmatpush1.bf16.msra.mxu0 0
    %434 = vmatprep.subr.bf16.mxu0 0
    %435 = vmatpush1.bf16.msra.mxu0 0
    %436 = vmatprep.subr.bf16.mxu0 0
    %437 = vmatpush1.bf16.msra.mxu0 0
    %438 = vmatprep.subr.bf16.mxu0 0
    %439 = vmatpush1.bf16.msra.mxu0 0
    %440 = vmatprep.subr.bf16.mxu0 0
    %441 = vmatpush1.bf16.msra.mxu0 0
    %442 = vmatprep.subr.bf16.mxu0 0
    %443 = vmatpush1.bf16.msra.mxu0 0
    %444 = vmatprep.subr.bf16.mxu0 0
    %445 = vmatpush1.bf16.msra.mxu0 0
    %446 = vmatprep.subr.bf16.mxu0 0
    %447 = vmatpush1.bf16.msra.mxu0 0
    %448 = vmatprep.subr.bf16.mxu0 0
    %449 = vmatpush1.bf16.msra.mxu0 0
    %450 = vmatprep.subr.bf16.mxu0 0
    %451 = vmatpush1.bf16.msra.mxu0 0
    %452 = vmatprep.subr.bf16.mxu0 0
    %453 = vmatpush1.bf16.msra.mxu0 0
    %454 = vmatprep.subr.bf16.mxu0 0
    %455 = vmatpush1.bf16.msra.mxu0 0
    %456 = vmatprep.subr.bf16.mxu0 0
    %457 = vmatpush1.bf16.msra.mxu0 0
    %458 = vmatprep.subr.bf16.mxu0 0
    %459 = vmatpush1.bf16.msra.mxu0 0
    %460 = vmatprep.mubr.bf16.mxu0 0
    %461 = vmatmul.mubr.bf16.gmra.mrb[0].mxu0 %v385
    %v462 = vpop.f32.mrb[0].mxu0
    %v463 = vadd.f32 %v354, %v462
    %v464 = vpop.f32.mrb[0].mxu0
    %v465 = vadd.f32 %v358, %v464
    %v466 = vpop.f32.mrb[0].mxu0
    %v467 = vpop.f32.mrb[0].mxu0
    %468 = vdwg.mxu0
    %v469 = vmax.f32 %v422, 0.0
    %v470 = vmax.f32 %v424, 0.0
    %v471 = vmax.f32 %v463, 0.0
    %v472 = vmax.f32 %v465, 0.0
    %v473 = vmin.f32 %v469, 6.0
    %v474 = vmin.f32 %v470, 6.0
    %v475 = vmin.f32 %v471, 6.0
    %v476 = vmin.f32 %v472, 6.0
    %v477 = vpack.c.bf16 %v473, %v473
    %v478 = vpack.c.bf16 %v474, %v474
    %v479 = vpack.c.bf16 %v475, %v475
    %v480 = vpack.c.bf16 %v476, %v476
    %s481 = scalar_lea.vmem [#allocation7], 1
    %v482 = vld [vmem:[%s481] ss:$8 sm:$0xf]
    %v484 = vlaneseq
    %v485 = vshrl.u32 %v484, 7
    %v486 = vsub.s32 0, %v485
    %v487 = vrot.slane %v482, %v486
    %v488 = vlaneseq
    %v489 = vshrl.u32 %v488, 7
    %v490 = vsub.s32 1, %v489
    %v491 = vrot.slane %v482, %v490
    %v492 = vlaneseq
    %v493 = vshrl.u32 %v492, 7
    %v494 = vsub.s32 2, %v493
    %v495 = vrot.slane %v482, %v494
    %v496 = vlaneseq
    %v497 = vshrl.u32 %v496, 7
    %v498 = vsub.s32 3, %v497
    %v499 = vrot.slane %v482, %v498
    %v632 = vunpack.c.l.b16 %v80
    %v633 = vunpack.c.h.b16 %v80
    %v634 = vunpack.c.l.b16 %v81
    %v635 = vunpack.c.h.b16 %v81
    %v636 = vunpack.c.l.b16 %v82
    %v637 = vunpack.c.h.b16 %v82
    %v638 = vunpack.c.l.b16 %v83
    %v639 = vunpack.c.h.b16 %v83
    %v640 = vunpack.c.l.b16 %v84
    %v641 = vunpack.c.h.b16 %v84
    %v642 = vunpack.c.l.b16 %v85
    %v643 = vunpack.c.h.b16 %v85
    %v644 = vunpack.c.l.b16 %v86
    %v645 = vunpack.c.h.b16 %v86
    %v646 = vunpack.c.l.b16 %v87
    %v647 = vunpack.c.h.b16 %v87
    %v648 = vunpack.c.l.b16 %v88
    %v649 = vunpack.c.h.b16 %v88
    %v650 = vunpack.c.l.b16 %v89
    %v651 = vunpack.c.h.b16 %v89
    %v652 = vunpack.c.l.b16 %v90
    %v653 = vunpack.c.h.b16 %v90
    %v654 = vunpack.c.l.b16 %v91
    %v655 = vunpack.c.h.b16 %v91
    %v656 = vunpack.c.l.b16 %v92
    %v657 = vunpack.c.h.b16 %v92
    %v658 = vunpack.c.l.b16 %v93
    %v659 = vunpack.c.h.b16 %v93
    %v660 = vunpack.c.l.b16 %v94
    %v661 = vunpack.c.h.b16 %v94
    %v662 = vunpack.c.l.b16 %v95
    %v663 = vunpack.c.h.b16 %v95
    %v664 = vunpack.c.l.b16 %v96
    %v665 = vunpack.c.h.b16 %v96
    %v666 = vunpack.c.l.b16 %v97
    %v667 = vunpack.c.h.b16 %v97
    %v668 = vunpack.c.l.b16 %v98
    %v669 = vunpack.c.h.b16 %v98
    %v670 = vunpack.c.l.b16 %v99
    %v671 = vunpack.c.h.b16 %v99
    %v672 = vunpack.c.l.b16 %v100
    %v673 = vunpack.c.h.b16 %v100
    %v674 = vunpack.c.l.b16 %v101
    %v675 = vunpack.c.h.b16 %v101
    %v676 = vunpack.c.l.b16 %v102
    %v677 = vunpack.c.h.b16 %v102
    %v678 = vunpack.c.l.b16 %v103
    %v679 = vunpack.c.h.b16 %v103
    %v680 = vunpack.c.l.b16 %v104
    %v681 = vunpack.c.h.b16 %v104
    %v682 = vunpack.c.l.b16 %v105
    %v683 = vunpack.c.h.b16 %v105
    %v684 = vunpack.c.l.b16 %v106
    %v685 = vunpack.c.h.b16 %v106
    %v686 = vunpack.c.l.b16 %v107
    %v687 = vunpack.c.h.b16 %v107
    %v688 = vunpack.c.l.b16 %v108
    %v689 = vunpack.c.h.b16 %v108
    %v690 = vunpack.c.l.b16 %v109
    %v691 = vunpack.c.h.b16 %v109
    %v692 = vunpack.c.l.b16 %v110
    %v693 = vunpack.c.h.b16 %v110
    %v694 = vunpack.c.l.b16 %v111
    %v695 = vunpack.c.h.b16 %v111
    %v696 = vunpack.c.l.b16 %v112
    %v697 = vunpack.c.h.b16 %v112
    %v698 = vunpack.c.l.b16 %v113
    %v699 = vunpack.c.h.b16 %v113
    %v700 = vunpack.c.l.b16 %v114
    %v701 = vunpack.c.h.b16 %v114
    %v702 = vunpack.c.l.b16 %v115
    %v703 = vunpack.c.h.b16 %v115
    %v704 = vunpack.c.l.b16 %v116
    %v705 = vunpack.c.h.b16 %v116
    %v706 = vunpack.c.l.b16 %v117
    %v707 = vunpack.c.h.b16 %v117
    %v708 = vunpack.c.l.b16 %v118
    %v709 = vunpack.c.h.b16 %v118
    %v710 = vunpack.c.l.b16 %v119
    %v711 = vunpack.c.h.b16 %v119
    %v712 = vunpack.c.l.b16 %v120
    %v713 = vunpack.c.h.b16 %v120
    %v714 = vunpack.c.l.b16 %v121
    %v715 = vunpack.c.h.b16 %v121
    %v716 = vunpack.c.l.b16 %v122
    %v717 = vunpack.c.h.b16 %v122
    %v718 = vunpack.c.l.b16 %v123
    %v719 = vunpack.c.h.b16 %v123
    %v720 = vunpack.c.l.b16 %v124
    %v721 = vunpack.c.h.b16 %v124
    %v722 = vunpack.c.l.b16 %v125
    %v723 = vunpack.c.h.b16 %v125
    %v724 = vunpack.c.l.b16 %v126
    %v725 = vunpack.c.h.b16 %v126
    %v726 = vunpack.c.l.b16 %v127
    %v727 = vunpack.c.h.b16 %v127
    %v728 = vunpack.c.l.b16 %v128
    %v729 = vunpack.c.h.b16 %v128
    %v730 = vunpack.c.l.b16 %v129
    %v731 = vunpack.c.h.b16 %v129
    %v732 = vunpack.c.l.b16 %v130
    %v733 = vunpack.c.h.b16 %v130
    %v734 = vunpack.c.l.b16 %v131
    %v735 = vunpack.c.h.b16 %v131
    %v736 = vunpack.c.l.b16 %v132
    %v737 = vunpack.c.h.b16 %v132
    %v738 = vunpack.c.l.b16 %v133
    %v739 = vunpack.c.h.b16 %v133
    %v740 = vunpack.c.l.b16 %v134
    %v741 = vunpack.c.h.b16 %v134
    %v742 = vunpack.c.l.b16 %v135
    %v743 = vunpack.c.h.b16 %v135
    %v744 = vunpack.c.l.b16 %v136
    %v745 = vunpack.c.h.b16 %v136
    %v746 = vunpack.c.l.b16 %v137
    %v747 = vunpack.c.h.b16 %v137
    %v748 = vunpack.c.l.b16 %v138
    %v749 = vunpack.c.h.b16 %v138
    %v750 = vunpack.c.l.b16 %v139
    %v751 = vunpack.c.h.b16 %v139
    %v752 = vunpack.c.l.b16 %v140
    %v753 = vunpack.c.h.b16 %v140
    %v754 = vunpack.c.l.b16 %v141
    %v755 = vunpack.c.h.b16 %v141
    %v756 = vunpack.c.l.b16 %v142
    %v757 = vunpack.c.h.b16 %v142
    %v758 = vunpack.c.l.b16 %v143
    %v759 = vunpack.c.h.b16 %v143
    %v760 = vunpack.c.l.b16 %v144
    %v761 = vunpack.c.h.b16 %v144
    %v762 = vunpack.c.l.b16 %v145
    %v763 = vunpack.c.h.b16 %v145
    %v764 = vunpack.c.l.b16 %v146
    %v765 = vunpack.c.h.b16 %v146
    %v766 = vunpack.c.l.b16 %v147
    %v767 = vunpack.c.h.b16 %v147
    %v768 = vunpack.c.l.b16 %v148
    %v769 = vunpack.c.h.b16 %v148
    %v770 = vunpack.c.l.b16 %v149
    %v771 = vunpack.c.h.b16 %v149
    %v772 = vunpack.c.l.b16 %v150
    %v773 = vunpack.c.h.b16 %v150
    %v774 = vunpack.c.l.b16 %v151
    %v775 = vunpack.c.h.b16 %v151
    %v776 = vunpack.c.l.b16 %v152
    %v777 = vunpack.c.h.b16 %v152
    %v778 = vunpack.c.l.b16 %v153
    %v779 = vunpack.c.h.b16 %v153
    %v780 = vunpack.c.l.b16 %v154
    %v781 = vunpack.c.h.b16 %v154
    %v782 = vunpack.c.l.b16 %v155
    %v783 = vunpack.c.h.b16 %v155
    %v784 = vunpack.c.l.b16 %v156
    %v785 = vunpack.c.h.b16 %v156
    %v786 = vunpack.c.l.b16 %v157
    %v787 = vunpack.c.h.b16 %v157
    %v788 = vunpack.c.l.b16 %v158
    %v789 = vunpack.c.h.b16 %v158
    %v790 = vunpack.c.l.b16 %v159
    %v791 = vunpack.c.h.b16 %v159
    %v792 = vunpack.c.l.b16 %v160
    %v793 = vunpack.c.h.b16 %v160
    %v794 = vunpack.c.l.b16 %v161
    %v795 = vunpack.c.h.b16 %v161
    %v796 = vunpack.c.l.b16 %v162
    %v797 = vunpack.c.h.b16 %v162
    %v798 = vunpack.c.l.b16 %v163
    %v799 = vunpack.c.h.b16 %v163
    %v800 = vunpack.c.l.b16 %v164
    %v801 = vunpack.c.h.b16 %v164
    %v802 = vunpack.c.l.b16 %v165
    %v803 = vunpack.c.h.b16 %v165
    %v804 = vunpack.c.l.b16 %v166
    %v805 = vunpack.c.h.b16 %v166
    %v806 = vunpack.c.l.b16 %v167
    %v807 = vunpack.c.h.b16 %v167
    %v808 = vunpack.c.l.b16 %v168
    %v809 = vunpack.c.h.b16 %v168
    %v810 = vunpack.c.l.b16 %v169
    %v811 = vunpack.c.h.b16 %v169
    %v812 = vunpack.c.l.b16 %v170
    %v813 = vunpack.c.h.b16 %v170
    %v814 = vunpack.c.l.b16 %v171
    %v815 = vunpack.c.h.b16 %v171
    %v816 = vunpack.c.l.b16 %v172
    %v817 = vunpack.c.h.b16 %v172
    %v818 = vunpack.c.l.b16 %v173
    %v819 = vunpack.c.h.b16 %v173
    %v820 = vunpack.c.l.b16 %v174
    %v821 = vunpack.c.h.b16 %v174
    %v822 = vunpack.c.l.b16 %v175
    %v823 = vunpack.c.h.b16 %v175
    %v824 = vunpack.c.l.b16 %v176
    %v825 = vunpack.c.h.b16 %v176
    %v826 = vunpack.c.l.b16 %v177
    %v827 = vunpack.c.h.b16 %v177
    %v828 = vunpack.c.l.b16 %v178
    %v829 = vunpack.c.h.b16 %v178
    %v830 = vunpack.c.l.b16 %v179
    %v831 = vunpack.c.h.b16 %v179
    %v832 = vunpack.c.l.b16 %v180
    %v833 = vunpack.c.h.b16 %v180
    %v834 = vunpack.c.l.b16 %v181
    %v835 = vunpack.c.h.b16 %v181
    %v836 = vunpack.c.l.b16 %v182
    %v837 = vunpack.c.h.b16 %v182
    %v838 = vunpack.c.l.b16 %v183
    %v839 = vunpack.c.h.b16 %v183
    %v840 = vunpack.c.l.b16 %v184
    %v841 = vunpack.c.h.b16 %v184
    %v842 = vunpack.c.l.b16 %v185
    %v843 = vunpack.c.h.b16 %v185
    %v844 = vunpack.c.l.b16 %v186
    %v845 = vunpack.c.h.b16 %v186
    %v846 = vunpack.c.l.b16 %v187
    %v847 = vunpack.c.h.b16 %v187
    %v848 = vunpack.c.l.b16 %v188
    %v849 = vunpack.c.h.b16 %v188
    %v850 = vunpack.c.l.b16 %v189
    %v851 = vunpack.c.h.b16 %v189
    %v852 = vunpack.c.l.b16 %v190
    %v853 = vunpack.c.h.b16 %v190
    %v854 = vunpack.c.l.b16 %v191
    %v855 = vunpack.c.h.b16 %v191
    %v856 = vunpack.c.l.b16 %v192
    %v857 = vunpack.c.h.b16 %v192
    %v858 = vunpack.c.l.b16 %v193
    %v859 = vunpack.c.h.b16 %v193
    %v860 = vunpack.c.l.b16 %v194
    %v861 = vunpack.c.h.b16 %v194
    %v862 = vunpack.c.l.b16 %v195
    %v863 = vunpack.c.h.b16 %v195
    %v864 = vunpack.c.l.b16 %v196
    %v865 = vunpack.c.h.b16 %v196
    %v866 = vunpack.c.l.b16 %v197
    %v867 = vunpack.c.h.b16 %v197
    %v868 = vunpack.c.l.b16 %v198
    %v869 = vunpack.c.h.b16 %v198
    %v870 = vunpack.c.l.b16 %v199
    %v871 = vunpack.c.h.b16 %v199
    %v872 = vunpack.c.l.b16 %v200
    %v873 = vunpack.c.h.b16 %v200
    %v874 = vunpack.c.l.b16 %v201
    %v875 = vunpack.c.h.b16 %v201
    %v876 = vunpack.c.l.b16 %v202
    %v877 = vunpack.c.h.b16 %v202
    %v878 = vunpack.c.l.b16 %v203
    %v879 = vunpack.c.h.b16 %v203
    %v880 = vunpack.c.l.b16 %v204
    %v881 = vunpack.c.h.b16 %v204
    %v882 = vunpack.c.l.b16 %v205
    %v883 = vunpack.c.h.b16 %v205
    %v884 = vunpack.c.l.b16 %v206
    %v885 = vunpack.c.h.b16 %v206
    %v886 = vunpack.c.l.b16 %v207
    %v887 = vunpack.c.h.b16 %v207
    %v888 = vpack.c.b16 %v636, %v632
    %v889 = vpack.c.b16 %v637, %v633
    %v890 = vpack.c.b16 %v638, %v634
    %v891 = vpack.c.b16 %v639, %v635
    %v892 = vpack.c.b16 %v644, %v640
    %v893 = vpack.c.b16 %v645, %v641
    %v894 = vpack.c.b16 %v646, %v642
    %v895 = vpack.c.b16 %v647, %v643
    %v896 = vpack.c.b16 %v652, %v648
    %v897 = vpack.c.b16 %v653, %v649
    %v898 = vpack.c.b16 %v654, %v650
    %v899 = vpack.c.b16 %v655, %v651
    %v900 = vpack.c.b16 %v660, %v656
    %v901 = vpack.c.b16 %v661, %v657
    %v902 = vpack.c.b16 %v662, %v658
    %v903 = vpack.c.b16 %v663, %v659
    %v904 = vpack.c.b16 %v668, %v664
    %v905 = vpack.c.b16 %v669, %v665
    %v906 = vpack.c.b16 %v670, %v666
    %v907 = vpack.c.b16 %v671, %v667
    %v908 = vpack.c.b16 %v676, %v672
    %v909 = vpack.c.b16 %v677, %v673
    %v910 = vpack.c.b16 %v678, %v674
    %v911 = vpack.c.b16 %v679, %v675
    %v912 = vpack.c.b16 %v684, %v680
    %v913 = vpack.c.b16 %v685, %v681
    %v914 = vpack.c.b16 %v686, %v682
    %v915 = vpack.c.b16 %v687, %v683
    %v916 = vpack.c.b16 %v692, %v688
    %v917 = vpack.c.b16 %v693, %v689
    %v918 = vpack.c.b16 %v694, %v690
    %v919 = vpack.c.b16 %v695, %v691
    %v920 = vpack.c.b16 %v700, %v696
    %v921 = vpack.c.b16 %v701, %v697
    %v922 = vpack.c.b16 %v702, %v698
    %v923 = vpack.c.b16 %v703, %v699
    %v924 = vpack.c.b16 %v708, %v704
    %v925 = vpack.c.b16 %v709, %v705
    %v926 = vpack.c.b16 %v710, %v706
    %v927 = vpack.c.b16 %v711, %v707
    %v928 = vpack.c.b16 %v716, %v712
    %v929 = vpack.c.b16 %v717, %v713
    %v930 = vpack.c.b16 %v718, %v714
    %v931 = vpack.c.b16 %v719, %v715
    %v932 = vpack.c.b16 %v724, %v720
    %v933 = vpack.c.b16 %v725, %v721
    %v934 = vpack.c.b16 %v726, %v722
    %v935 = vpack.c.b16 %v727, %v723
    %v936 = vpack.c.b16 %v732, %v728
    %v937 = vpack.c.b16 %v733, %v729
    %v938 = vpack.c.b16 %v734, %v730
    %v939 = vpack.c.b16 %v735, %v731
    %v940 = vpack.c.b16 %v740, %v736
    %v941 = vpack.c.b16 %v741, %v737
    %v942 = vpack.c.b16 %v742, %v738
    %v943 = vpack.c.b16 %v743, %v739
    %v944 = vpack.c.b16 %v748, %v744
    %v945 = vpack.c.b16 %v749, %v745
    %v946 = vpack.c.b16 %v750, %v746
    %v947 = vpack.c.b16 %v751, %v747
    %v948 = vpack.c.b16 %v756, %v752
    %v949 = vpack.c.b16 %v757, %v753
    %v950 = vpack.c.b16 %v758, %v754
    %v951 = vpack.c.b16 %v759, %v755
    %v952 = vpack.c.b16 %v764, %v760
    %v953 = vpack.c.b16 %v765, %v761
    %v954 = vpack.c.b16 %v766, %v762
    %v955 = vpack.c.b16 %v767, %v763
    %v956 = vpack.c.b16 %v772, %v768
    %v957 = vpack.c.b16 %v773, %v769
    %v958 = vpack.c.b16 %v774, %v770
    %v959 = vpack.c.b16 %v775, %v771
    %v960 = vpack.c.b16 %v780, %v776
    %v961 = vpack.c.b16 %v781, %v777
    %v962 = vpack.c.b16 %v782, %v778
    %v963 = vpack.c.b16 %v783, %v779
    %v964 = vpack.c.b16 %v788, %v784
    %v965 = vpack.c.b16 %v789, %v785
    %v966 = vpack.c.b16 %v790, %v786
    %v967 = vpack.c.b16 %v791, %v787
    %v968 = vpack.c.b16 %v796, %v792
    %v969 = vpack.c.b16 %v797, %v793
    %v970 = vpack.c.b16 %v798, %v794
    %v971 = vpack.c.b16 %v799, %v795
    %v972 = vpack.c.b16 %v804, %v800
    %v973 = vpack.c.b16 %v805, %v801
    %v974 = vpack.c.b16 %v806, %v802
    %v975 = vpack.c.b16 %v807, %v803
    %v976 = vpack.c.b16 %v812, %v808
    %v977 = vpack.c.b16 %v813, %v809
    %v978 = vpack.c.b16 %v814, %v810
    %v979 = vpack.c.b16 %v815, %v811
    %v980 = vpack.c.b16 %v820, %v816
    %v981 = vpack.c.b16 %v821, %v817
    %v982 = vpack.c.b16 %v822, %v818
    %v983 = vpack.c.b16 %v823, %v819
    %v984 = vpack.c.b16 %v828, %v824
    %v985 = vpack.c.b16 %v829, %v825
    %v986 = vpack.c.b16 %v830, %v826
    %v987 = vpack.c.b16 %v831, %v827
    %v988 = vpack.c.b16 %v836, %v832
    %v989 = vpack.c.b16 %v837, %v833
    %v990 = vpack.c.b16 %v838, %v834
    %v991 = vpack.c.b16 %v839, %v835
    %v992 = vpack.c.b16 %v844, %v840
    %v993 = vpack.c.b16 %v845, %v841
    %v994 = vpack.c.b16 %v846, %v842
    %v995 = vpack.c.b16 %v847, %v843
    %v996 = vpack.c.b16 %v852, %v848
    %v997 = vpack.c.b16 %v853, %v849
    %v998 = vpack.c.b16 %v854, %v850
    %v999 = vpack.c.b16 %v855, %v851
    %v1000 = vpack.c.b16 %v860, %v856
    %v1001 = vpack.c.b16 %v861, %v857
    %v1002 = vpack.c.b16 %v862, %v858
    %v1003 = vpack.c.b16 %v863, %v859
    %v1004 = vpack.c.b16 %v868, %v864
    %v1005 = vpack.c.b16 %v869, %v865
    %v1006 = vpack.c.b16 %v870, %v866
    %v1007 = vpack.c.b16 %v871, %v867
    %v1008 = vpack.c.b16 %v876, %v872
    %v1009 = vpack.c.b16 %v877, %v873
    %v1010 = vpack.c.b16 %v878, %v874
    %v1011 = vpack.c.b16 %v879, %v875
    %v1012 = vpack.c.b16 %v884, %v880
    %v1013 = vpack.c.b16 %v885, %v881
    %v1014 = vpack.c.b16 %v886, %v882
    %v1015 = vpack.c.b16 %v887, %v883
    %1144 = vmatprep.subr.bf16.mxu0 %v889
    %1145 = vmatpush1.bf16.msra.mxu0 %v888
    %1146 = vmatprep.subr.bf16.mxu0 %v893
    %1147 = vmatpush1.bf16.msra.mxu0 %v892
    %1148 = vmatprep.subr.bf16.mxu0 %v897
    %1149 = vmatpush1.bf16.msra.mxu0 %v896
    %1150 = vmatprep.subr.bf16.mxu0 %v901
    %1151 = vmatpush1.bf16.msra.mxu0 %v900
    %1152 = vmatprep.subr.bf16.mxu0 %v905
    %1153 = vmatpush1.bf16.msra.mxu0 %v904
    %1154 = vmatprep.subr.bf16.mxu0 %v909
    %1155 = vmatpush1.bf16.msra.mxu0 %v908
    %1156 = vmatprep.subr.bf16.mxu0 %v913
    %1157 = vmatpush1.bf16.msra.mxu0 %v912
    %1158 = vmatprep.subr.bf16.mxu0 %v917
    %1159 = vmatpush1.bf16.msra.mxu0 %v916
    %1160 = vmatprep.subr.bf16.mxu0 %v921
    %1161 = vmatpush1.bf16.msra.mxu0 %v920
    %1162 = vmatprep.subr.bf16.mxu0 %v925
    %1163 = vmatpush1.bf16.msra.mxu0 %v924
    %1164 = vmatprep.subr.bf16.mxu0 %v929
    %1165 = vmatpush1.bf16.msra.mxu0 %v928
    %1166 = vmatprep.subr.bf16.mxu0 %v933
    %1167 = vmatpush1.bf16.msra.mxu0 %v932
    %1168 = vmatprep.subr.bf16.mxu0 %v937
    %1169 = vmatpush1.bf16.msra.mxu0 %v936
    %1170 = vmatprep.subr.bf16.mxu0 %v941
    %1171 = vmatpush1.bf16.msra.mxu0 %v940
    %1172 = vmatprep.subr.bf16.mxu0 %v945
    %1173 = vmatpush1.bf16.msra.mxu0 %v944
    %1174 = vmatprep.subr.bf16.mxu0 %v949
    %1175 = vmatpush1.bf16.msra.mxu0 %v948
    %1176 = vmatprep.mubr.bf16.mxu0 %v478
    %1177 = vmatmul.mubr.bf16.gmra.mrb[0].mxu0 %v477
    %v1178 = vpop.f32.mrb[0].mxu0
    %v1179 = vadd.f32 %v487, %v1178
    %v1180 = vpop.f32.mrb[0].mxu0
    %v1181 = vadd.f32 %v491, %v1180
    %v1182 = vpop.f32.mrb[0].mxu0
    %v1183 = vpop.f32.mrb[0].mxu0
    %1184 = vdwg.mxu0
    %1185 = vmatprep.subr.bf16.mxu0 %v953
    %1186 = vmatpush1.bf16.msra.mxu0 %v952
    %1187 = vmatprep.subr.bf16.mxu0 %v957
    %1188 = vmatpush1.bf16.msra.mxu0 %v956
    %1189 = vmatprep.subr.bf16.mxu0 %v961
    %1190 = vmatpush1.bf16.msra.mxu0 %v960
    %1191 = vmatprep.subr.bf16.mxu0 %v965
    %1192 = vmatpush1.bf16.msra.mxu0 %v964
    %1193 = vmatprep.subr.bf16.mxu0 %v969
    %1194 = vmatpush1.bf16.msra.mxu0 %v968
    %1195 = vmatprep.subr.bf16.mxu0 %v973
    %1196 = vmatpush1.bf16.msra.mxu0 %v972
    %1197 = vmatprep.subr.bf16.mxu0 %v977
    %1198 = vmatpush1.bf16.msra.mxu0 %v976
    %1199 = vmatprep.subr.bf16.mxu0 %v981
    %1200 = vmatpush1.bf16.msra.mxu0 %v980
    %1201 = vmatprep.subr.bf16.mxu0 %v985
    %1202 = vmatpush1.bf16.msra.mxu0 %v984
    %1203 = vmatprep.subr.bf16.mxu0 %v989
    %1204 = vmatpush1.bf16.msra.mxu0 %v988
    %1205 = vmatprep.subr.bf16.mxu0 %v993
    %1206 = vmatpush1.bf16.msra.mxu0 %v992
    %1207 = vmatprep.subr.bf16.mxu0 %v997
    %1208 = vmatpush1.bf16.msra.mxu0 %v996
    %1209 = vmatprep.subr.bf16.mxu0 %v1001
    %1210 = vmatpush1.bf16.msra.mxu0 %v1000
    %1211 = vmatprep.subr.bf16.mxu0 %v1005
    %1212 = vmatpush1.bf16.msra.mxu0 %v1004
    %1213 = vmatprep.subr.bf16.mxu0 %v1009
    %1214 = vmatpush1.bf16.msra.mxu0 %v1008
    %1215 = vmatprep.subr.bf16.mxu0 %v1013
    %1216 = vmatpush1.bf16.msra.mxu0 %v1012
    %1217 = vmatprep.mubr.bf16.mxu0 %v480
    %1218 = vmatmul.mubr.bf16.gmra.mrb[0].mxu0 %v479
    %v1219 = vpop.f32.mrb[0].mxu0
    %v1220 = vadd.f32 %v1179, %v1219
    %v1221 = vpop.f32.mrb[0].mxu0
    %v1222 = vadd.f32 %v1181, %v1221
    %v1223 = vpop.f32.mrb[0].mxu0
    %v1224 = vpop.f32.mrb[0].mxu0
    %1225 = vdwg.mxu0
    %1226 = vmatprep.subr.bf16.mxu0 %v891
    %1227 = vmatpush1.bf16.msra.mxu0 %v890
    %1228 = vmatprep.subr.bf16.mxu0 %v895
    %1229 = vmatpush1.bf16.msra.mxu0 %v894
    %1230 = vmatprep.subr.bf16.mxu0 %v899
    %1231 = vmatpush1.bf16.msra.mxu0 %v898
    %1232 = vmatprep.subr.bf16.mxu0 %v903
    %1233 = vmatpush1.bf16.msra.mxu0 %v902
    %1234 = vmatprep.subr.bf16.mxu0 %v907
    %1235 = vmatpush1.bf16.msra.mxu0 %v906
    %1236 = vmatprep.subr.bf16.mxu0 %v911
    %1237 = vmatpush1.bf16.msra.mxu0 %v910
    %1238 = vmatprep.subr.bf16.mxu0 %v915
    %1239 = vmatpush1.bf16.msra.mxu0 %v914
    %1240 = vmatprep.subr.bf16.mxu0 %v919
    %1241 = vmatpush1.bf16.msra.mxu0 %v918
    %1242 = vmatprep.subr.bf16.mxu0 %v923
    %1243 = vmatpush1.bf16.msra.mxu0 %v922
    %1244 = vmatprep.subr.bf16.mxu0 %v927
    %1245 = vmatpush1.bf16.msra.mxu0 %v926
    %1246 = vmatprep.subr.bf16.mxu0 %v931
    %1247 = vmatpush1.bf16.msra.mxu0 %v930
    %1248 = vmatprep.subr.bf16.mxu0 %v935
    %1249 = vmatpush1.bf16.msra.mxu0 %v934
    %1250 = vmatprep.subr.bf16.mxu0 %v939
    %1251 = vmatpush1.bf16.msra.mxu0 %v938
    %1252 = vmatprep.subr.bf16.mxu0 %v943
    %1253 = vmatpush1.bf16.msra.mxu0 %v942
    %1254 = vmatprep.subr.bf16.mxu0 %v947
    %1255 = vmatpush1.bf16.msra.mxu0 %v946
    %1256 = vmatprep.subr.bf16.mxu0 %v951
    %1257 = vmatpush1.bf16.msra.mxu0 %v950
    %1258 = vmatprep.mubr.bf16.mxu0 %v478
    %1259 = vmatmul.mubr.bf16.gmra.mrb[0].mxu0 %v477
    %v1260 = vpop.f32.mrb[0].mxu0
    %v1261 = vadd.f32 %v495, %v1260
    %v1262 = vpop.f32.mrb[0].mxu0
    %v1263 = vadd.f32 %v499, %v1262
    %v1264 = vpop.f32.mrb[0].mxu0
    %v1265 = vpop.f32.mrb[0].mxu0
    %1266 = vdwg.mxu0
    %1267 = vmatprep.subr.bf16.mxu0 %v955
    %1268 = vmatpush1.bf16.msra.mxu0 %v954
    %1269 = vmatprep.subr.bf16.mxu0 %v959
    %1270 = vmatpush1.bf16.msra.mxu0 %v958
    %1271 = vmatprep.subr.bf16.mxu0 %v963
    %1272 = vmatpush1.bf16.msra.mxu0 %v962
    %1273 = vmatprep.subr.bf16.mxu0 %v967
    %1274 = vmatpush1.bf16.msra.mxu0 %v966
    %1275 = vmatprep.subr.bf16.mxu0 %v971
    %1276 = vmatpush1.bf16.msra.mxu0 %v970
    %1277 = vmatprep.subr.bf16.mxu0 %v975
    %1278 = vmatpush1.bf16.msra.mxu0 %v974
    %1279 = vmatprep.subr.bf16.mxu0 %v979
    %1280 = vmatpush1.bf16.msra.mxu0 %v978
    %1281 = vmatprep.subr.bf16.mxu0 %v983
    %1282 = vmatpush1.bf16.msra.mxu0 %v982
    %1283 = vmatprep.subr.bf16.mxu0 %v987
    %1284 = vmatpush1.bf16.msra.mxu0 %v986
    %1285 = vmatprep.subr.bf16.mxu0 %v991
    %1286 = vmatpush1.bf16.msra.mxu0 %v990
    %1287 = vmatprep.subr.bf16.mxu0 %v995
    %1288 = vmatpush1.bf16.msra.mxu0 %v994
    %1289 = vmatprep.subr.bf16.mxu0 %v999
    %1290 = vmatpush1.bf16.msra.mxu0 %v998
    %1291 = vmatprep.subr.bf16.mxu0 %v1003
    %1292 = vmatpush1.bf16.msra.mxu0 %v1002
    %1293 = vmatprep.subr.bf16.mxu0 %v1007
    %1294 = vmatpush1.bf16.msra.mxu0 %v1006
    %1295 = vmatprep.subr.bf16.mxu0 %v1011
    %1296 = vmatpush1.bf16.msra.mxu0 %v1010
    %1297 = vmatprep.subr.bf16.mxu0 %v1015
    %1298 = vmatpush1.bf16.msra.mxu0 %v1014
    %1299 = vmatprep.mubr.bf16.mxu0 %v480
    %1300 = vmatmul.mubr.bf16.gmra.mrb[0].mxu0 %v479
    %v1301 = vpop.f32.mrb[0].mxu0
    %v1302 = vadd.f32 %v1261, %v1301
    %v1303 = vpop.f32.mrb[0].mxu0
    %v1304 = vadd.f32 %v1263, %v1303
    %v1305 = vpop.f32.mrb[0].mxu0
    %v1306 = vpop.f32.mrb[0].mxu0
    %1307 = vdwg.mxu0
    %v1308 = vmax.f32 %v1220, 0.0
    %v1309 = vmax.f32 %v1222, 0.0
    %v1310 = vmax.f32 %v1302, 0.0
    %v1311 = vmax.f32 %v1304, 0.0
    %v1312 = vmin.f32 %v1308, 6.0
    %v1313 = vmin.f32 %v1309, 6.0
    %v1314 = vmin.f32 %v1310, 6.0
    %v1315 = vmin.f32 %v1311, 6.0
    %v1316 = vpack.c.bf16 %v1312, %v1312
    %v1317 = vpack.c.bf16 %v1313, %v1313
    %v1318 = vpack.c.bf16 %v1314, %v1314
    %v1319 = vpack.c.bf16 %v1315, %v1315
    %s1320 = scalar_lea.vmem [#allocation7], 2
    %v1321 = vld [vmem:[%s1320] ss:$8 sm:$0xf]
    %v1323 = vlaneseq
    %v1324 = vshrl.u32 %v1323, 7
    %v1325 = vsub.s32 0, %v1324
    %v1326 = vrot.slane %v1321, %v1325
    %v1327 = vlaneseq
    %v1328 = vshrl.u32 %v1327, 7
    %v1329 = vsub.s32 1, %v1328
    %v1330 = vrot.slane %v1321, %v1329
    %v1331 = vlaneseq
    %v1332 = vshrl.u32 %v1331, 7
    %v1333 = vsub.s32 2, %v1332
    %v1334 = vrot.slane %v1321, %v1333
    %v1335 = vlaneseq
    %v1336 = vshrl.u32 %v1335, 7
    %v1337 = vsub.s32 3, %v1336
    %v1338 = vrot.slane %v1321, %v1337
    %v1471 = vunpack.c.l.b16 %v208
    %v1472 = vunpack.c.h.b16 %v208
    %v1473 = vunpack.c.l.b16 %v209
    %v1474 = vunpack.c.h.b16 %v209
    %v1475 = vunpack.c.l.b16 %v210
    %v1476 = vunpack.c.h.b16 %v210
    %v1477 = vunpack.c.l.b16 %v211
    %v1478 = vunpack.c.h.b16 %v211
    %v1479 = vunpack.c.l.b16 %v212
    %v1480 = vunpack.c.h.b16 %v212
    %v1481 = vunpack.c.l.b16 %v213
    %v1482 = vunpack.c.h.b16 %v213
    %v1483 = vunpack.c.l.b16 %v214
    %v1484 = vunpack.c.h.b16 %v214
    %v1485 = vunpack.c.l.b16 %v215
    %v1486 = vunpack.c.h.b16 %v215
    %v1487 = vunpack.c.l.b16 %v216
    %v1488 = vunpack.c.h.b16 %v216
    %v1489 = vunpack.c.l.b16 %v217
    %v1490 = vunpack.c.h.b16 %v217
    %v1491 = vunpack.c.l.b16 %v218
    %v1492 = vunpack.c.h.b16 %v218
    %v1493 = vunpack.c.l.b16 %v219
    %v1494 = vunpack.c.h.b16 %v219
    %v1495 = vunpack.c.l.b16 %v220
    %v1496 = vunpack.c.h.b16 %v220
    %v1497 = vunpack.c.l.b16 %v221
    %v1498 = vunpack.c.h.b16 %v221
    %v1499 = vunpack.c.l.b16 %v222
    %v1500 = vunpack.c.h.b16 %v222
    %v1501 = vunpack.c.l.b16 %v223
    %v1502 = vunpack.c.h.b16 %v223
    %v1503 = vunpack.c.l.b16 %v224
    %v1504 = vunpack.c.h.b16 %v224
    %v1505 = vunpack.c.l.b16 %v225
    %v1506 = vunpack.c.h.b16 %v225
    %v1507 = vunpack.c.l.b16 %v226
    %v1508 = vunpack.c.h.b16 %v226
    %v1509 = vunpack.c.l.b16 %v227
    %v1510 = vunpack.c.h.b16 %v227
    %v1511 = vunpack.c.l.b16 %v228
    %v1512 = vunpack.c.h.b16 %v228
    %v1513 = vunpack.c.l.b16 %v229
    %v1514 = vunpack.c.h.b16 %v229
    %v1515 = vunpack.c.l.b16 %v230
    %v1516 = vunpack.c.h.b16 %v230
    %v1517 = vunpack.c.l.b16 %v231
    %v1518 = vunpack.c.h.b16 %v231
    %v1519 = vunpack.c.l.b16 %v232
    %v1520 = vunpack.c.h.b16 %v232
    %v1521 = vunpack.c.l.b16 %v233
    %v1522 = vunpack.c.h.b16 %v233
    %v1523 = vunpack.c.l.b16 %v234
    %v1524 = vunpack.c.h.b16 %v234
    %v1525 = vunpack.c.l.b16 %v235
    %v1526 = vunpack.c.h.b16 %v235
    %v1527 = vunpack.c.l.b16 %v236
    %v1528 = vunpack.c.h.b16 %v236
    %v1529 = vunpack.c.l.b16 %v237
    %v1530 = vunpack.c.h.b16 %v237
    %v1531 = vunpack.c.l.b16 %v238
    %v1532 = vunpack.c.h.b16 %v238
    %v1533 = vunpack.c.l.b16 %v239
    %v1534 = vunpack.c.h.b16 %v239
    %v1535 = vunpack.c.l.b16 %v240
    %v1536 = vunpack.c.h.b16 %v240
    %v1537 = vunpack.c.l.b16 %v241
    %v1538 = vunpack.c.h.b16 %v241
    %v1539 = vunpack.c.l.b16 %v242
    %v1540 = vunpack.c.h.b16 %v242
    %v1541 = vunpack.c.l.b16 %v243
    %v1542 = vunpack.c.h.b16 %v243
    %v1543 = vunpack.c.l.b16 %v244
    %v1544 = vunpack.c.h.b16 %v244
    %v1545 = vunpack.c.l.b16 %v245
    %v1546 = vunpack.c.h.b16 %v245
    %v1547 = vunpack.c.l.b16 %v246
    %v1548 = vunpack.c.h.b16 %v246
    %v1549 = vunpack.c.l.b16 %v247
    %v1550 = vunpack.c.h.b16 %v247
    %v1551 = vunpack.c.l.b16 %v248
    %v1552 = vunpack.c.h.b16 %v248
    %v1553 = vunpack.c.l.b16 %v249
    %v1554 = vunpack.c.h.b16 %v249
    %v1555 = vunpack.c.l.b16 %v250
    %v1556 = vunpack.c.h.b16 %v250
    %v1557 = vunpack.c.l.b16 %v251
    %v1558 = vunpack.c.h.b16 %v251
    %v1559 = vunpack.c.l.b16 %v252
    %v1560 = vunpack.c.h.b16 %v252
    %v1561 = vunpack.c.l.b16 %v253
    %v1562 = vunpack.c.h.b16 %v253
    %v1563 = vunpack.c.l.b16 %v254
    %v1564 = vunpack.c.h.b16 %v254
    %v1565 = vunpack.c.l.b16 %v255
    %v1566 = vunpack.c.h.b16 %v255
    %v1567 = vunpack.c.l.b16 %v256
    %v1568 = vunpack.c.h.b16 %v256
    %v1569 = vunpack.c.l.b16 %v257
    %v1570 = vunpack.c.h.b16 %v257
    %v1571 = vunpack.c.l.b16 %v258
    %v1572 = vunpack.c.h.b16 %v258
    %v1573 = vunpack.c.l.b16 %v259
    %v1574 = vunpack.c.h.b16 %v259
    %v1575 = vunpack.c.l.b16 %v260
    %v1576 = vunpack.c.h.b16 %v260
    %v1577 = vunpack.c.l.b16 %v261
    %v1578 = vunpack.c.h.b16 %v261
    %v1579 = vunpack.c.l.b16 %v262
    %v1580 = vunpack.c.h.b16 %v262
    %v1581 = vunpack.c.l.b16 %v263
    %v1582 = vunpack.c.h.b16 %v263
    %v1583 = vunpack.c.l.b16 %v264
    %v1584 = vunpack.c.h.b16 %v264
    %v1585 = vunpack.c.l.b16 %v265
    %v1586 = vunpack.c.h.b16 %v265
    %v1587 = vunpack.c.l.b16 %v266
    %v1588 = vunpack.c.h.b16 %v266
    %v1589 = vunpack.c.l.b16 %v267
    %v1590 = vunpack.c.h.b16 %v267
    %v1591 = vunpack.c.l.b16 %v268
    %v1592 = vunpack.c.h.b16 %v268
    %v1593 = vunpack.c.l.b16 %v269
    %v1594 = vunpack.c.h.b16 %v269
    %v1595 = vunpack.c.l.b16 %v270
    %v1596 = vunpack.c.h.b16 %v270
    %v1597 = vunpack.c.l.b16 %v271
    %v1598 = vunpack.c.h.b16 %v271
    %v1599 = vunpack.c.l.b16 %v272
    %v1600 = vunpack.c.h.b16 %v272
    %v1601 = vunpack.c.l.b16 %v273
    %v1602 = vunpack.c.h.b16 %v273
    %v1603 = vunpack.c.l.b16 %v274
    %v1604 = vunpack.c.h.b16 %v274
    %v1605 = vunpack.c.l.b16 %v275
    %v1606 = vunpack.c.h.b16 %v275
    %v1607 = vunpack.c.l.b16 %v276
    %v1608 = vunpack.c.h.b16 %v276
    %v1609 = vunpack.c.l.b16 %v277
    %v1610 = vunpack.c.h.b16 %v277
    %v1611 = vunpack.c.l.b16 %v278
    %v1612 = vunpack.c.h.b16 %v278
    %v1613 = vunpack.c.l.b16 %v279
    %v1614 = vunpack.c.h.b16 %v279
    %v1615 = vunpack.c.l.b16 %v280
    %v1616 = vunpack.c.h.b16 %v280
    %v1617 = vunpack.c.l.b16 %v281
    %v1618 = vunpack.c.h.b16 %v281
    %v1619 = vunpack.c.l.b16 %v282
    %v1620 = vunpack.c.h.b16 %v282
    %v1621 = vunpack.c.l.b16 %v283
    %v1622 = vunpack.c.h.b16 %v283
    %v1623 = vunpack.c.l.b16 %v284
    %v1624 = vunpack.c.h.b16 %v284
    %v1625 = vunpack.c.l.b16 %v285
    %v1626 = vunpack.c.h.b16 %v285
    %v1627 = vunpack.c.l.b16 %v286
    %v1628 = vunpack.c.h.b16 %v286
    %v1629 = vunpack.c.l.b16 %v287
    %v1630 = vunpack.c.h.b16 %v287
    %v1631 = vunpack.c.l.b16 %v288
    %v1632 = vunpack.c.h.b16 %v288
    %v1633 = vunpack.c.l.b16 %v289
    %v1634 = vunpack.c.h.b16 %v289
    %v1635 = vunpack.c.l.b16 %v290
    %v1636 = vunpack.c.h.b16 %v290
    %v1637 = vunpack.c.l.b16 %v291
    %v1638 = vunpack.c.h.b16 %v291
    %v1639 = vunpack.c.l.b16 %v292
    %v1640 = vunpack.c.h.b16 %v292
    %v1641 = vunpack.c.l.b16 %v293
    %v1642 = vunpack.c.h.b16 %v293
    %v1643 = vunpack.c.l.b16 %v294
    %v1644 = vunpack.c.h.b16 %v294
    %v1645 = vunpack.c.l.b16 %v295
    %v1646 = vunpack.c.h.b16 %v295
    %v1647 = vunpack.c.l.b16 %v296
    %v1648 = vunpack.c.h.b16 %v296
    %v1649 = vunpack.c.l.b16 %v297
    %v1650 = vunpack.c.h.b16 %v297
    %v1651 = vunpack.c.l.b16 %v298
    %v1652 = vunpack.c.h.b16 %v298
    %v1653 = vunpack.c.l.b16 %v299
    %v1654 = vunpack.c.h.b16 %v299
    %v1655 = vunpack.c.l.b16 %v300
    %v1656 = vunpack.c.h.b16 %v300
    %v1657 = vunpack.c.l.b16 %v301
    %v1658 = vunpack.c.h.b16 %v301
    %v1659 = vunpack.c.l.b16 %v302
    %v1660 = vunpack.c.h.b16 %v302
    %v1661 = vunpack.c.l.b16 %v303
    %v1662 = vunpack.c.h.b16 %v303
    %v1663 = vunpack.c.l.b16 %v304
    %v1664 = vunpack.c.h.b16 %v304
    %v1665 = vunpack.c.l.b16 %v305
    %v1666 = vunpack.c.h.b16 %v305
    %v1667 = vunpack.c.l.b16 %v306
    %v1668 = vunpack.c.h.b16 %v306
    %v1669 = vunpack.c.l.b16 %v307
    %v1670 = vunpack.c.h.b16 %v307
    %v1671 = vunpack.c.l.b16 %v308
    %v1672 = vunpack.c.h.b16 %v308
    %v1673 = vunpack.c.l.b16 %v309
    %v1674 = vunpack.c.h.b16 %v309
    %v1675 = vunpack.c.l.b16 %v310
    %v1676 = vunpack.c.h.b16 %v310
    %v1677 = vunpack.c.l.b16 %v311
    %v1678 = vunpack.c.h.b16 %v311
    %v1679 = vunpack.c.l.b16 %v312
    %v1680 = vunpack.c.h.b16 %v312
    %v1681 = vunpack.c.l.b16 %v313
    %v1682 = vunpack.c.h.b16 %v313
    %v1683 = vunpack.c.l.b16 %v314
    %v1684 = vunpack.c.h.b16 %v314
    %v1685 = vunpack.c.l.b16 %v315
    %v1686 = vunpack.c.h.b16 %v315
    %v1687 = vunpack.c.l.b16 %v316
    %v1688 = vunpack.c.h.b16 %v316
    %v1689 = vunpack.c.l.b16 %v317
    %v1690 = vunpack.c.h.b16 %v317
    %v1691 = vunpack.c.l.b16 %v318
    %v1692 = vunpack.c.h.b16 %v318
    %v1693 = vunpack.c.l.b16 %v319
    %v1694 = vunpack.c.h.b16 %v319
    %v1695 = vunpack.c.l.b16 %v320
    %v1696 = vunpack.c.h.b16 %v320
    %v1697 = vunpack.c.l.b16 %v321
    %v1698 = vunpack.c.h.b16 %v321
    %v1699 = vunpack.c.l.b16 %v322
    %v1700 = vunpack.c.h.b16 %v322
    %v1701 = vunpack.c.l.b16 %v323
    %v1702 = vunpack.c.h.b16 %v323
    %v1703 = vunpack.c.l.b16 %v324
    %v1704 = vunpack.c.h.b16 %v324
    %v1705 = vunpack.c.l.b16 %v325
    %v1706 = vunpack.c.h.b16 %v325
    %v1707 = vunpack.c.l.b16 %v326
    %v1708 = vunpack.c.h.b16 %v326
    %v1709 = vunpack.c.l.b16 %v327
    %v1710 = vunpack.c.h.b16 %v327
    %v1711 = vunpack.c.l.b16 %v328
    %v1712 = vunpack.c.h.b16 %v328
    %v1713 = vunpack.c.l.b16 %v329
    %v1714 = vunpack.c.h.b16 %v329
    %v1715 = vunpack.c.l.b16 %v330
    %v1716 = vunpack.c.h.b16 %v330
    %v1717 = vunpack.c.l.b16 %v331
    %v1718 = vunpack.c.h.b16 %v331
    %v1719 = vunpack.c.l.b16 %v332
    %v1720 = vunpack.c.h.b16 %v332
    %v1721 = vunpack.c.l.b16 %v333
    %v1722 = vunpack.c.h.b16 %v333
    %v1723 = vunpack.c.l.b16 %v334
    %v1724 = vunpack.c.h.b16 %v334
    %v1725 = vunpack.c.l.b16 %v335
    %v1726 = vunpack.c.h.b16 %v335
    %v1727 = vpack.c.b16 %v1475, %v1471
    %v1728 = vpack.c.b16 %v1476, %v1472
    %v1729 = vpack.c.b16 %v1477, %v1473
    %v1730 = vpack.c.b16 %v1478, %v1474
    %v1731 = vpack.c.b16 %v1483, %v1479
    %v1732 = vpack.c.b16 %v1484, %v1480
    %v1733 = vpack.c.b16 %v1485, %v1481
    %v1734 = vpack.c.b16 %v1486, %v1482
    %v1735 = vpack.c.b16 %v1491, %v1487
    %v1736 = vpack.c.b16 %v1492, %v1488
    %v1737 = vpack.c.b16 %v1493, %v1489
    %v1738 = vpack.c.b16 %v1494, %v1490
    %v1739 = vpack.c.b16 %v1499, %v1495
    %v1740 = vpack.c.b16 %v1500, %v1496
    %v1741 = vpack.c.b16 %v1501, %v1497
    %v1742 = vpack.c.b16 %v1502, %v1498
    %v1743 = vpack.c.b16 %v1507, %v1503
    %v1744 = vpack.c.b16 %v1508, %v1504
    %v1745 = vpack.c.b16 %v1509, %v1505
    %v1746 = vpack.c.b16 %v1510, %v1506
    %v1747 = vpack.c.b16 %v1515, %v1511
    %v1748 = vpack.c.b16 %v1516, %v1512
    %v1749 = vpack.c.b16 %v1517, %v1513
    %v1750 = vpack.c.b16 %v1518, %v1514
    %v1751 = vpack.c.b16 %v1523, %v1519
    %v1752 = vpack.c.b16 %v1524, %v1520
    %v1753 = vpack.c.b16 %v1525, %v1521
    %v1754 = vpack.c.b16 %v1526, %v1522
    %v1755 = vpack.c.b16 %v1531, %v1527
    %v1756 = vpack.c.b16 %v1532, %v1528
    %v1757 = vpack.c.b16 %v1533, %v1529
    %v1758 = vpack.c.b16 %v1534, %v1530
    %v1759 = vpack.c.b16 %v1539, %v1535
    %v1760 = vpack.c.b16 %v1540, %v1536
    %v1761 = vpack.c.b16 %v1541, %v1537
    %v1762 = vpack.c.b16 %v1542, %v1538
    %v1763 = vpack.c.b16 %v1547, %v1543
    %v1764 = vpack.c.b16 %v1548, %v1544
    %v1765 = vpack.c.b16 %v1549, %v1545
    %v1766 = vpack.c.b16 %v1550, %v1546
    %v1767 = vpack.c.b16 %v1555, %v1551
    %v1768 = vpack.c.b16 %v1556, %v1552
    %v1769 = vpack.c.b16 %v1557, %v1553
    %v1770 = vpack.c.b16 %v1558, %v1554
    %v1771 = vpack.c.b16 %v1563, %v1559
    %v1772 = vpack.c.b16 %v1564, %v1560
    %v1773 = vpack.c.b16 %v1565, %v1561
    %v1774 = vpack.c.b16 %v1566, %v1562
    %v1775 = vpack.c.b16 %v1571, %v1567
    %v1776 = vpack.c.b16 %v1572, %v1568
    %v1777 = vpack.c.b16 %v1573, %v1569
    %v1778 = vpack.c.b16 %v1574, %v1570
    %v1779 = vpack.c.b16 %v1579, %v1575
    %v1780 = vpack.c.b16 %v1580, %v1576
    %v1781 = vpack.c.b16 %v1581, %v1577
    %v1782 = vpack.c.b16 %v1582, %v1578
    %v1783 = vpack.c.b16 %v1587, %v1583
    %v1784 = vpack.c.b16 %v1588, %v1584
    %v1785 = vpack.c.b16 %v1589, %v1585
    %v1786 = vpack.c.b16 %v1590, %v1586
    %v1787 = vpack.c.b16 %v1595, %v1591
    %v1788 = vpack.c.b16 %v1596, %v1592
    %v1789 = vpack.c.b16 %v1597, %v1593
    %v1790 = vpack.c.b16 %v1598, %v1594
    %v1791 = vpack.c.b16 %v1603, %v1599
    %v1792 = vpack.c.b16 %v1604, %v1600
    %v1793 = vpack.c.b16 %v1605, %v1601
    %v1794 = vpack.c.b16 %v1606, %v1602
    %v1795 = vpack.c.b16 %v1611, %v1607
    %v1796 = vpack.c.b16 %v1612, %v1608
    %v1797 = vpack.c.b16 %v1613, %v1609
    %v1798 = vpack.c.b16 %v1614, %v1610
    %v1799 = vpack.c.b16 %v1619, %v1615
    %v1800 = vpack.c.b16 %v1620, %v1616
    %v1801 = vpack.c.b16 %v1621, %v1617
    %v1802 = vpack.c.b16 %v1622, %v1618
    %v1803 = vpack.c.b16 %v1627, %v1623
    %v1804 = vpack.c.b16 %v1628, %v1624
    %v1805 = vpack.c.b16 %v1629, %v1625
    %v1806 = vpack.c.b16 %v1630, %v1626
    %v1807 = vpack.c.b16 %v1635, %v1631
    %v1808 = vpack.c.b16 %v1636, %v1632
    %v1809 = vpack.c.b16 %v1637, %v1633
    %v1810 = vpack.c.b16 %v1638, %v1634
    %v1811 = vpack.c.b16 %v1643, %v1639
    %v1812 = vpack.c.b16 %v1644, %v1640
    %v1813 = vpack.c.b16 %v1645, %v1641
    %v1814 = vpack.c.b16 %v1646, %v1642
    %v1815 = vpack.c.b16 %v1651, %v1647
    %v1816 = vpack.c.b16 %v1652, %v1648
    %v1817 = vpack.c.b16 %v1653, %v1649
    %v1818 = vpack.c.b16 %v1654, %v1650
    %v1819 = vpack.c.b16 %v1659, %v1655
    %v1820 = vpack.c.b16 %v1660, %v1656
    %v1821 = vpack.c.b16 %v1661, %v1657
    %v1822 = vpack.c.b16 %v1662, %v1658
    %v1823 = vpack.c.b16 %v1667, %v1663
    %v1824 = vpack.c.b16 %v1668, %v1664
    %v1825 = vpack.c.b16 %v1669, %v1665
    %v1826 = vpack.c.b16 %v1670, %v1666
    %v1827 = vpack.c.b16 %v1675, %v1671
    %v1828 = vpack.c.b16 %v1676, %v1672
    %v1829 = vpack.c.b16 %v1677, %v1673
    %v1830 = vpack.c.b16 %v1678, %v1674
    %v1831 = vpack.c.b16 %v1683, %v1679
    %v1832 = vpack.c.b16 %v1684, %v1680
    %v1833 = vpack.c.b16 %v1685, %v1681
    %v1834 = vpack.c.b16 %v1686, %v1682
    %v1835 = vpack.c.b16 %v1691, %v1687
    %v1836 = vpack.c.b16 %v1692, %v1688
    %v1837 = vpack.c.b16 %v1693, %v1689
    %v1838 = vpack.c.b16 %v1694, %v1690
    %v1839 = vpack.c.b16 %v1699, %v1695
    %v1840 = vpack.c.b16 %v1700, %v1696
    %v1841 = vpack.c.b16 %v1701, %v1697
    %v1842 = vpack.c.b16 %v1702, %v1698
    %v1843 = vpack.c.b16 %v1707, %v1703
    %v1844 = vpack.c.b16 %v1708, %v1704
    %v1845 = vpack.c.b16 %v1709, %v1705
    %v1846 = vpack.c.b16 %v1710, %v1706
    %v1847 = vpack.c.b16 %v1715, %v1711
    %v1848 = vpack.c.b16 %v1716, %v1712
    %v1849 = vpack.c.b16 %v1717, %v1713
    %v1850 = vpack.c.b16 %v1718, %v1714
    %v1851 = vpack.c.b16 %v1723, %v1719
    %v1852 = vpack.c.b16 %v1724, %v1720
    %v1853 = vpack.c.b16 %v1725, %v1721
    %v1854 = vpack.c.b16 %v1726, %v1722
    %1983 = vmatprep.subr.bf16.mxu0 %v1728
    %1984 = vmatpush1.bf16.msra.mxu0 %v1727
    %1985 = vmatprep.subr.bf16.mxu0 %v1732
    %1986 = vmatpush1.bf16.msra.mxu0 %v1731
    %1987 = vmatprep.subr.bf16.mxu0 %v1736
    %1988 = vmatpush1.bf16.msra.mxu0 %v1735
    %1989 = vmatprep.subr.bf16.mxu0 %v1740
    %1990 = vmatpush1.bf16.msra.mxu0 %v1739
    %1991 = vmatprep.subr.bf16.mxu0 %v1744
    %1992 = vmatpush1.bf16.msra.mxu0 %v1743
    %1993 = vmatprep.subr.bf16.mxu0 %v1748
    %1994 = vmatpush1.bf16.msra.mxu0 %v1747
    %1995 = vmatprep.subr.bf16.mxu0 %v1752
    %1996 = vmatpush1.bf16.msra.mxu0 %v1751
    %1997 = vmatprep.subr.bf16.mxu0 %v1756
    %1998 = vmatpush1.bf16.msra.mxu0 %v1755
    %1999 = vmatprep.subr.bf16.mxu0 %v1760
    %2000 = vmatpush1.bf16.msra.mxu0 %v1759
    %2001 = vmatprep.subr.bf16.mxu0 %v1764
    %2002 = vmatpush1.bf16.msra.mxu0 %v1763
    %2003 = vmatprep.subr.bf16.mxu0 %v1768
    %2004 = vmatpush1.bf16.msra.mxu0 %v1767
    %2005 = vmatprep.subr.bf16.mxu0 %v1772
    %2006 = vmatpush1.bf16.msra.mxu0 %v1771
    %2007 = vmatprep.subr.bf16.mxu0 %v1776
    %2008 = vmatpush1.bf16.msra.mxu0 %v1775
    %2009 = vmatprep.subr.bf16.mxu0 %v1780
    %2010 = vmatpush1.bf16.msra.mxu0 %v1779
    %2011 = vmatprep.subr.bf16.mxu0 %v1784
    %2012 = vmatpush1.bf16.msra.mxu0 %v1783
    %2013 = vmatprep.subr.bf16.mxu0 %v1788
    %2014 = vmatpush1.bf16.msra.mxu0 %v1787
    %2015 = vmatprep.mubr.bf16.mxu0 %v1317
    %2016 = vmatmul.mubr.bf16.gmra.mrb[0].mxu0 %v1316
    %v2017 = vpop.f32.mrb[0].mxu0
    %v2018 = vadd.f32 %v1326, %v2017
    %v2019 = vpop.f32.mrb[0].mxu0
    %v2020 = vadd.f32 %v1330, %v2019
    %v2021 = vpop.f32.mrb[0].mxu0
    %v2022 = vpop.f32.mrb[0].mxu0
    %2023 = vdwg.mxu0
    %2024 = vmatprep.subr.bf16.mxu0 %v1792
    %2025 = vmatpush1.bf16.msra.mxu0 %v1791
    %2026 = vmatprep.subr.bf16.mxu0 %v1796
    %2027 = vmatpush1.bf16.msra.mxu0 %v1795
    %2028 = vmatprep.subr.bf16.mxu0 %v1800
    %2029 = vmatpush1.bf16.msra.mxu0 %v1799
    %2030 = vmatprep.subr.bf16.mxu0 %v1804
    %2031 = vmatpush1.bf16.msra.mxu0 %v1803
    %2032 = vmatprep.subr.bf16.mxu0 %v1808
    %2033 = vmatpush1.bf16.msra.mxu0 %v1807
    %2034 = vmatprep.subr.bf16.mxu0 %v1812
    %2035 = vmatpush1.bf16.msra.mxu0 %v1811
    %2036 = vmatprep.subr.bf16.mxu0 %v1816
    %2037 = vmatpush1.bf16.msra.mxu0 %v1815
    %2038 = vmatprep.subr.bf16.mxu0 %v1820
    %2039 = vmatpush1.bf16.msra.mxu0 %v1819
    %2040 = vmatprep.subr.bf16.mxu0 %v1824
    %2041 = vmatpush1.bf16.msra.mxu0 %v1823
    %2042 = vmatprep.subr.bf16.mxu0 %v1828
    %2043 = vmatpush1.bf16.msra.mxu0 %v1827
    %2044 = vmatprep.subr.bf16.mxu0 %v1832
    %2045 = vmatpush1.bf16.msra.mxu0 %v1831
    %2046 = vmatprep.subr.bf16.mxu0 %v1836
    %2047 = vmatpush1.bf16.msra.mxu0 %v1835
    %2048 = vmatprep.subr.bf16.mxu0 %v1840
    %2049 = vmatpush1.bf16.msra.mxu0 %v1839
    %2050 = vmatprep.subr.bf16.mxu0 %v1844
    %2051 = vmatpush1.bf16.msra.mxu0 %v1843
    %2052 = vmatprep.subr.bf16.mxu0 %v1848
    %2053 = vmatpush1.bf16.msra.mxu0 %v1847
    %2054 = vmatprep.subr.bf16.mxu0 %v1852
    %2055 = vmatpush1.bf16.msra.mxu0 %v1851
    %2056 = vmatprep.mubr.bf16.mxu0 %v1319
    %2057 = vmatmul.mubr.bf16.gmra.mrb[0].mxu0 %v1318
    %v2058 = vpop.f32.mrb[0].mxu0
    %v2059 = vadd.f32 %v2018, %v2058
    %v2060 = vpop.f32.mrb[0].mxu0
    %v2061 = vadd.f32 %v2020, %v2060
    %v2062 = vpop.f32.mrb[0].mxu0
    %v2063 = vpop.f32.mrb[0].mxu0
    %2064 = vdwg.mxu0
    %2065 = vmatprep.subr.bf16.mxu0 %v1730
    %2066 = vmatpush1.bf16.msra.mxu0 %v1729
    %2067 = vmatprep.subr.bf16.mxu0 %v1734
    %2068 = vmatpush1.bf16.msra.mxu0 %v1733
    %2069 = vmatprep.subr.bf16.mxu0 %v1738
    %2070 = vmatpush1.bf16.msra.mxu0 %v1737
    %2071 = vmatprep.subr.bf16.mxu0 %v1742
    %2072 = vmatpush1.bf16.msra.mxu0 %v1741
    %2073 = vmatprep.subr.bf16.mxu0 %v1746
    %2074 = vmatpush1.bf16.msra.mxu0 %v1745
    %2075 = vmatprep.subr.bf16.mxu0 %v1750
    %2076 = vmatpush1.bf16.msra.mxu0 %v1749
    %2077 = vmatprep.subr.bf16.mxu0 %v1754
    %2078 = vmatpush1.bf16.msra.mxu0 %v1753
    %2079 = vmatprep.subr.bf16.mxu0 %v1758
    %2080 = vmatpush1.bf16.msra.mxu0 %v1757
    %2081 = vmatprep.subr.bf16.mxu0 %v1762
    %2082 = vmatpush1.bf16.msra.mxu0 %v1761
    %2083 = vmatprep.subr.bf16.mxu0 %v1766
    %2084 = vmatpush1.bf16.msra.mxu0 %v1765
    %2085 = vmatprep.subr.bf16.mxu0 %v1770
    %2086 = vmatpush1.bf16.msra.mxu0 %v1769
    %2087 = vmatprep.subr.bf16.mxu0 %v1774
    %2088 = vmatpush1.bf16.msra.mxu0 %v1773
    %2089 = vmatprep.subr.bf16.mxu0 %v1778
    %2090 = vmatpush1.bf16.msra.mxu0 %v1777
    %2091 = vmatprep.subr.bf16.mxu0 %v1782
    %2092 = vmatpush1.bf16.msra.mxu0 %v1781
    %2093 = vmatprep.subr.bf16.mxu0 %v1786
    %2094 = vmatpush1.bf16.msra.mxu0 %v1785
    %2095 = vmatprep.subr.bf16.mxu0 %v1790
    %2096 = vmatpush1.bf16.msra.mxu0 %v1789
    %2097 = vmatprep.mubr.bf16.mxu0 %v1317
    %2098 = vmatmul.mubr.bf16.gmra.mrb[0].mxu0 %v1316
    %v2099 = vpop.f32.mrb[0].mxu0
    %v2100 = vadd.f32 %v1334, %v2099
    %v2101 = vpop.f32.mrb[0].mxu0
    %v2102 = vadd.f32 %v1338, %v2101
    %v2103 = vpop.f32.mrb[0].mxu0
    %v2104 = vpop.f32.mrb[0].mxu0
    %2105 = vdwg.mxu0
    %2106 = vmatprep.subr.bf16.mxu0 %v1794
    %2107 = vmatpush1.bf16.msra.mxu0 %v1793
    %2108 = vmatprep.subr.bf16.mxu0 %v1798
    %2109 = vmatpush1.bf16.msra.mxu0 %v1797
    %2110 = vmatprep.subr.bf16.mxu0 %v1802
    %2111 = vmatpush1.bf16.msra.mxu0 %v1801
    %2112 = vmatprep.subr.bf16.mxu0 %v1806
    %2113 = vmatpush1.bf16.msra.mxu0 %v1805
    %2114 = vmatprep.subr.bf16.mxu0 %v1810
    %2115 = vmatpush1.bf16.msra.mxu0 %v1809
    %2116 = vmatprep.subr.bf16.mxu0 %v1814
    %2117 = vmatpush1.bf16.msra.mxu0 %v1813
    %2118 = vmatprep.subr.bf16.mxu0 %v1818
    %2119 = vmatpush1.bf16.msra.mxu0 %v1817
    %2120 = vmatprep.subr.bf16.mxu0 %v1822
    %2121 = vmatpush1.bf16.msra.mxu0 %v1821
    %2122 = vmatprep.subr.bf16.mxu0 %v1826
    %2123 = vmatpush1.bf16.msra.mxu0 %v1825
    %2124 = vmatprep.subr.bf16.mxu0 %v1830
    %2125 = vmatpush1.bf16.msra.mxu0 %v1829
    %2126 = vmatprep.subr.bf16.mxu0 %v1834
    %2127 = vmatpush1.bf16.msra.mxu0 %v1833
    %2128 = vmatprep.subr.bf16.mxu0 %v1838
    %2129 = vmatpush1.bf16.msra.mxu0 %v1837
    %2130 = vmatprep.subr.bf16.mxu0 %v1842
    %2131 = vmatpush1.bf16.msra.mxu0 %v1841
    %2132 = vmatprep.subr.bf16.mxu0 %v1846
    %2133 = vmatpush1.bf16.msra.mxu0 %v1845
    %2134 = vmatprep.subr.bf16.mxu0 %v1850
    %2135 = vmatpush1.bf16.msra.mxu0 %v1849
    %2136 = vmatprep.subr.bf16.mxu0 %v1854
    %2137 = vmatpush1.bf16.msra.mxu0 %v1853
    %2138 = vmatprep.mubr.bf16.mxu0 %v1319
    %2139 = vmatmul.mubr.bf16.gmra.mrb[0].mxu0 %v1318
    %v2140 = vpop.f32.mrb[0].mxu0
    %v2141 = vadd.f32 %v2100, %v2140
    %v2142 = vpop.f32.mrb[0].mxu0
    %v2143 = vadd.f32 %v2102, %v2142
    %v2144 = vpop.f32.mrb[0].mxu0
    %v2145 = vpop.f32.mrb[0].mxu0
    %2146 = vdwg.mxu0
    %v2147 = vmax.f32 %v2059, 0.0
    %v2148 = vmax.f32 %v2061, 0.0
    %v2149 = vmax.f32 %v2141, 0.0
    %v2150 = vmax.f32 %v2143, 0.0
    %v2151 = vmin.f32 %v2147, 6.0
    %v2152 = vmin.f32 %v2148, 6.0
    %v2153 = vmin.f32 %v2149, 6.0
    %v2154 = vmin.f32 %v2150, 6.0
    %v2155 = vld [vmem:[%s2] sm:$0xf]
    %v2156 = vld [vmem:[%s2 + $0x4] sm:$0xf]
    %v2157 = vld [vmem:[%s2 + $0x8] sm:$0xf]
    %v2158 = vld [vmem:[%s2 + $0xc] sm:$0xf]
    %v2159 = vld [vmem:[%s2 + $0x10] sm:$0xf]
    %v2160 = vld [vmem:[%s2 + $0x14] sm:$0xf]
    %v2161 = vld [vmem:[%s2 + $0x18] sm:$0xf]
    %v2162 = vld [vmem:[%s2 + $0x1c] sm:$0xf]
    %v2163 = vld [vmem:[%s2 + $0x20] sm:$0xf]
    %v2164 = vld [vmem:[%s2 + $0x24] sm:$0xf]
    %v2165 = vld [vmem:[%s2 + $0x28] sm:$0xf]
    %v2166 = vld [vmem:[%s2 + $0x2c] sm:$0xf]
    %v2167 = vld [vmem:[%s2 + $0x30] sm:$0xf]
    %v2168 = vld [vmem:[%s2 + $0x34] sm:$0xf]
    %v2169 = vld [vmem:[%s2 + $0x38] sm:$0xf]
    %v2170 = vld [vmem:[%s2 + $0x3c] sm:$0xf]
    %v2171 = vld [vmem:[%s2 + $0x40] sm:$0xf]
    %v2172 = vld [vmem:[%s2 + $0x44] sm:$0xf]
    %v2173 = vld [vmem:[%s2 + $0x48] sm:$0xf]
    %v2174 = vld [vmem:[%s2 + $0x4c] sm:$0xf]
    %v2175 = vld [vmem:[%s2 + $0x50] sm:$0xf]
    %v2176 = vld [vmem:[%s2 + $0x54] sm:$0xf]
    %v2177 = vld [vmem:[%s2 + $0x58] sm:$0xf]
    %v2178 = vld [vmem:[%s2 + $0x5c] sm:$0xf]
    %v2179 = vld [vmem:[%s2 + $0x60] sm:$0xf]
    %v2180 = vld [vmem:[%s2 + $0x64] sm:$0xf]
    %v2181 = vld [vmem:[%s2 + $0x68] sm:$0xf]
    %v2182 = vld [vmem:[%s2 + $0x6c] sm:$0xf]
    %v2183 = vld [vmem:[%s2 + $0x70] sm:$0xf]
    %v2184 = vld [vmem:[%s2 + $0x74] sm:$0xf]
    %v2185 = vld [vmem:[%s2 + $0x78] sm:$0xf]
    %v2186 = vld [vmem:[%s2 + $0x7c] sm:$0xf]
    %v2187 = vld [vmem:[%s2 + $0x80] sm:$0xf]
    %v2188 = vld [vmem:[%s2 + $0x84] sm:$0xf]
    %v2189 = vld [vmem:[%s2 + $0x88] sm:$0xf]
    %v2190 = vld [vmem:[%s2 + $0x8c] sm:$0xf]
    %v2191 = vld [vmem:[%s2 + $0x90] sm:$0xf]
    %v2192 = vld [vmem:[%s2 + $0x94] sm:$0xf]
    %v2193 = vld [vmem:[%s2 + $0x98] sm:$0xf]
    %v2194 = vld [vmem:[%s2 + $0x9c] sm:$0xf]
    %v2195 = vld [vmem:[%s2 + $0xa0] sm:$0xf]
    %v2196 = vld [vmem:[%s2 + $0xa4] sm:$0xf]
    %v2197 = vld [vmem:[%s2 + $0xa8] sm:$0xf]
    %v2198 = vld [vmem:[%s2 + $0xac] sm:$0xf]
    %v2199 = vld [vmem:[%s2 + $0xb0] sm:$0xf]
    %v2200 = vld [vmem:[%s2 + $0xb4] sm:$0xf]
    %v2201 = vld [vmem:[%s2 + $0xb8] sm:$0xf]
    %v2202 = vld [vmem:[%s2 + $0xbc] sm:$0xf]
    %v2203 = vld [vmem:[%s2 + $0xc0] sm:$0xf]
    %v2204 = vld [vmem:[%s2 + $0xc4] sm:$0xf]
    %v2205 = vld [vmem:[%s2 + $0xc8] sm:$0xf]
    %v2206 = vld [vmem:[%s2 + $0xcc] sm:$0xf]
    %v2207 = vld [vmem:[%s2 + $0xd0] sm:$0xf]
    %v2208 = vld [vmem:[%s2 + $0xd4] sm:$0xf]
    %v2209 = vld [vmem:[%s2 + $0xd8] sm:$0xf]
    %v2210 = vld [vmem:[%s2 + $0xdc] sm:$0xf]
    %v2211 = vld [vmem:[%s2 + $0xe0] sm:$0xf]
    %v2212 = vld [vmem:[%s2 + $0xe4] sm:$0xf]
    %v2213 = vld [vmem:[%s2 + $0xe8] sm:$0xf]
    %v2214 = vld [vmem:[%s2 + $0xec] sm:$0xf]
    %v2215 = vld [vmem:[%s2 + $0xf0] sm:$0xf]
    %v2216 = vld [vmem:[%s2 + $0xf4] sm:$0xf]
    %v2217 = vld [vmem:[%s2 + $0xf8] sm:$0xf]
    %v2218 = vld [vmem:[%s2 + $0xfc] sm:$0xf]
    %v2219 = vpack.c.bf16 %v2151, %v2151
    %v2220 = vpack.c.bf16 %v2152, %v2152
    %v2221 = vpack.c.bf16 %v2153, %v2153
    %v2222 = vpack.c.bf16 %v2154, %v2154
    %v2223 = vld [vmem:[#allocation7 + $0x3] ss:$0 sm:$0xff]
    %v2288 = vunpack.c.l.b16 %v2155
    %v2289 = vunpack.c.l.b16 %v2156
    %v2290 = vunpack.c.l.b16 %v2157
    %v2291 = vunpack.c.l.b16 %v2158
    %v2292 = vunpack.c.l.b16 %v2159
    %v2293 = vunpack.c.l.b16 %v2160
    %v2294 = vunpack.c.l.b16 %v2161
    %v2295 = vunpack.c.l.b16 %v2162
    %v2296 = vunpack.c.l.b16 %v2163
    %v2297 = vunpack.c.l.b16 %v2164
    %v2298 = vunpack.c.l.b16 %v2165
    %v2299 = vunpack.c.l.b16 %v2166
    %v2300 = vunpack.c.l.b16 %v2167
    %v2301 = vunpack.c.l.b16 %v2168
    %v2302 = vunpack.c.l.b16 %v2169
    %v2303 = vunpack.c.l.b16 %v2170
    %v2304 = vunpack.c.l.b16 %v2171
    %v2305 = vunpack.c.l.b16 %v2172
    %v2306 = vunpack.c.l.b16 %v2173
    %v2307 = vunpack.c.l.b16 %v2174
    %v2308 = vunpack.c.l.b16 %v2175
    %v2309 = vunpack.c.l.b16 %v2176
    %v2310 = vunpack.c.l.b16 %v2177
    %v2311 = vunpack.c.l.b16 %v2178
    %v2312 = vunpack.c.l.b16 %v2179
    %v2313 = vunpack.c.l.b16 %v2180
    %v2314 = vunpack.c.l.b16 %v2181
    %v2315 = vunpack.c.l.b16 %v2182
    %v2316 = vunpack.c.l.b16 %v2183
    %v2317 = vunpack.c.l.b16 %v2184
    %v2318 = vunpack.c.l.b16 %v2185
    %v2319 = vunpack.c.l.b16 %v2186
    %v2320 = vunpack.c.l.b16 %v2187
    %v2321 = vunpack.c.l.b16 %v2188
    %v2322 = vunpack.c.l.b16 %v2189
    %v2323 = vunpack.c.l.b16 %v2190
    %v2324 = vunpack.c.l.b16 %v2191
    %v2325 = vunpack.c.l.b16 %v2192
    %v2326 = vunpack.c.l.b16 %v2193
    %v2327 = vunpack.c.l.b16 %v2194
    %v2328 = vunpack.c.l.b16 %v2195
    %v2329 = vunpack.c.l.b16 %v2196
    %v2330 = vunpack.c.l.b16 %v2197
    %v2331 = vunpack.c.l.b16 %v2198
    %v2332 = vunpack.c.l.b16 %v2199
    %v2333 = vunpack.c.l.b16 %v2200
    %v2334 = vunpack.c.l.b16 %v2201
    %v2335 = vunpack.c.l.b16 %v2202
    %v2336 = vunpack.c.l.b16 %v2203
    %v2337 = vunpack.c.l.b16 %v2204
    %v2338 = vunpack.c.l.b16 %v2205
    %v2339 = vunpack.c.l.b16 %v2206
    %v2340 = vunpack.c.l.b16 %v2207
    %v2341 = vunpack.c.l.b16 %v2208
    %v2342 = vunpack.c.l.b16 %v2209
    %v2343 = vunpack.c.l.b16 %v2210
    %v2344 = vunpack.c.l.b16 %v2211
    %v2345 = vunpack.c.l.b16 %v2212
    %v2346 = vunpack.c.l.b16 %v2213
    %v2347 = vunpack.c.l.b16 %v2214
    %v2348 = vunpack.c.l.b16 %v2215
    %v2349 = vunpack.c.l.b16 %v2216
    %v2350 = vunpack.c.l.b16 %v2217
    %v2351 = vunpack.c.l.b16 %v2218
    %v2352 = vpack.c.b16 %v2289, %v2288
    %v2353 = vpack.c.b16 %v2291, %v2290
    %v2354 = vpack.c.b16 %v2293, %v2292
    %v2355 = vpack.c.b16 %v2295, %v2294
    %v2356 = vpack.c.b16 %v2297, %v2296
    %v2357 = vpack.c.b16 %v2299, %v2298
    %v2358 = vpack.c.b16 %v2301, %v2300
    %v2359 = vpack.c.b16 %v2303, %v2302
    %v2360 = vpack.c.b16 %v2305, %v2304
    %v2361 = vpack.c.b16 %v2307, %v2306
    %v2362 = vpack.c.b16 %v2309, %v2308
    %v2363 = vpack.c.b16 %v2311, %v2310
    %v2364 = vpack.c.b16 %v2313, %v2312
    %v2365 = vpack.c.b16 %v2315, %v2314
    %v2366 = vpack.c.b16 %v2317, %v2316
    %v2367 = vpack.c.b16 %v2319, %v2318
    %v2368 = vpack.c.b16 %v2321, %v2320
    %v2369 = vpack.c.b16 %v2323, %v2322
    %v2370 = vpack.c.b16 %v2325, %v2324
    %v2371 = vpack.c.b16 %v2327, %v2326
    %v2372 = vpack.c.b16 %v2329, %v2328
    %v2373 = vpack.c.b16 %v2331, %v2330
    %v2374 = vpack.c.b16 %v2333, %v2332
    %v2375 = vpack.c.b16 %v2335, %v2334
    %v2376 = vpack.c.b16 %v2337, %v2336
    %v2377 = vpack.c.b16 %v2339, %v2338
    %v2378 = vpack.c.b16 %v2341, %v2340
    %v2379 = vpack.c.b16 %v2343, %v2342
    %v2380 = vpack.c.b16 %v2345, %v2344
    %v2381 = vpack.c.b16 %v2347, %v2346
    %v2382 = vpack.c.b16 %v2349, %v2348
    %v2383 = vpack.c.b16 %v2351, %v2350
    %2416 = vmatprep.subr.bf16.mxu0 0
    %2417 = vmatpush1.bf16.msra.mxu0 %v2352
    %2418 = vmatprep.subr.bf16.mxu0 0
    %2419 = vmatpush1.bf16.msra.mxu0 %v2353
    %2420 = vmatprep.subr.bf16.mxu0 0
    %2421 = vmatpush1.bf16.msra.mxu0 %v2354
    %2422 = vmatprep.subr.bf16.mxu0 0
    %2423 = vmatpush1.bf16.msra.mxu0 %v2355
    %2424 = vmatprep.subr.bf16.mxu0 0
    %2425 = vmatpush1.bf16.msra.mxu0 %v2356
    %2426 = vmatprep.subr.bf16.mxu0 0
    %2427 = vmatpush1.bf16.msra.mxu0 %v2357
    %2428 = vmatprep.subr.bf16.mxu0 0
    %2429 = vmatpush1.bf16.msra.mxu0 %v2358
    %2430 = vmatprep.subr.bf16.mxu0 0
    %2431 = vmatpush1.bf16.msra.mxu0 %v2359
    %2432 = vmatprep.subr.bf16.mxu0 0
    %2433 = vmatpush1.bf16.msra.mxu0 %v2360
    %2434 = vmatprep.subr.bf16.mxu0 0
    %2435 = vmatpush1.bf16.msra.mxu0 %v2361
    %2436 = vmatprep.subr.bf16.mxu0 0
    %2437 = vmatpush1.bf16.msra.mxu0 %v2362
    %2438 = vmatprep.subr.bf16.mxu0 0
    %2439 = vmatpush1.bf16.msra.mxu0 %v2363
    %2440 = vmatprep.subr.bf16.mxu0 0
    %2441 = vmatpush1.bf16.msra.mxu0 %v2364
    %2442 = vmatprep.subr.bf16.mxu0 0
    %2443 = vmatpush1.bf16.msra.mxu0 %v2365
    %2444 = vmatprep.subr.bf16.mxu0 0
    %2445 = vmatpush1.bf16.msra.mxu0 %v2366
    %2446 = vmatprep.subr.bf16.mxu0 0
    %2447 = vmatpush1.bf16.msra.mxu0 %v2367
    %2448 = vmatprep.mubr.bf16.mxu0 %v2220
    %2449 = vmatmul.mubr.bf16.gmra.mrb[0].mxu0 %v2219
    %v2450 = vpop.f32.mrb[0].mxu0
    %v2451 = vadd.f32 %v2223, %v2450
    %v2452 = vpop.f32.mrb[0].mxu0
    %v2453 = vpop.f32.mrb[0].mxu0
    %v2454 = vpop.f32.mrb[0].mxu0
    %2455 = vdwg.mxu0
    %2456 = vmatprep.subr.bf16.mxu0 0
    %2457 = vmatpush1.bf16.msra.mxu0 %v2368
    %2458 = vmatprep.subr.bf16.mxu0 0
    %2459 = vmatpush1.bf16.msra.mxu0 %v2369
    %2460 = vmatprep.subr.bf16.mxu0 0
    %2461 = vmatpush1.bf16.msra.mxu0 %v2370
    %2462 = vmatprep.subr.bf16.mxu0 0
    %2463 = vmatpush1.bf16.msra.mxu0 %v2371
    %2464 = vmatprep.subr.bf16.mxu0 0
    %2465 = vmatpush1.bf16.msra.mxu0 %v2372
    %2466 = vmatprep.subr.bf16.mxu0 0
    %2467 = vmatpush1.bf16.msra.mxu0 %v2373
    %2468 = vmatprep.subr.bf16.mxu0 0
    %2469 = vmatpush1.bf16.msra.mxu0 %v2374
    %2470 = vmatprep.subr.bf16.mxu0 0
    %2471 = vmatpush1.bf16.msra.mxu0 %v2375
    %2472 = vmatprep.subr.bf16.mxu0 0
    %2473 = vmatpush1.bf16.msra.mxu0 %v2376
    %2474 = vmatprep.subr.bf16.mxu0 0
    %2475 = vmatpush1.bf16.msra.mxu0 %v2377
    %2476 = vmatprep.subr.bf16.mxu0 0
    %2477 = vmatpush1.bf16.msra.mxu0 %v2378
    %2478 = vmatprep.subr.bf16.mxu0 0
    %2479 = vmatpush1.bf16.msra.mxu0 %v2379
    %2480 = vmatprep.subr.bf16.mxu0 0
    %2481 = vmatpush1.bf16.msra.mxu0 %v2380
    %2482 = vmatprep.subr.bf16.mxu0 0
    %2483 = vmatpush1.bf16.msra.mxu0 %v2381
    %2484 = vmatprep.subr.bf16.mxu0 0
    %2485 = vmatpush1.bf16.msra.mxu0 %v2382
    %2486 = vmatprep.subr.bf16.mxu0 0
    %2487 = vmatpush1.bf16.msra.mxu0 %v2383
    %2488 = vmatprep.mubr.bf16.mxu0 %v2222
    %2489 = vmatmul.mubr.bf16.gmra.mrb[0].mxu0 %v2221
    %v2490 = vpop.f32.mrb[0].mxu0
    %v2491 = vadd.f32 %v2451, %v2490
    %v2492 = vpop.f32.mrb[0].mxu0
    %v2493 = vpop.f32.mrb[0].mxu0
    %v2494 = vpop.f32.mrb[0].mxu0
    %2495 = vdwg.mxu0
    %v2496 = vtanh.pop %v2491
    %v2497 = vld [vmem:[#allocation7 + $0x4] ss:$0 sm:$0xff]
    %v2498 = vmul.f32 %v2496, %v2497
    %v2499 = vlaneseq
    %v2500 = vand.u32 %v2499, 127
    %vm2501 = vcmp.eq.s32.totalorder %v2500, 7
    %v2502 = vsel %vm2501, 1.0, %v2498
    %v2503 = vld [vmem:[#allocation7 + $0x20] sm:$0xff]
    %vm2504 = vcmask 64512
    %v2506 = vsel %vm2504, %v2502, 0
    %2508 = vmatprep.subr.mxu0 0.0
    %2509 = vmatpush1.msra.mxu0 %v2503
    %2510 = vmatprep.subr.mxu0 0.0
    %2511 = vmatpush1.msra.mxu0 0.0
    %2512 = vmatprep.subr.mxu0 0.0
    %2513 = vmatpush1.msra.mxu0 0.0
    %2514 = vmatprep.subr.mxu0 0.0
    %2515 = vmatpush1.msra.mxu0 0.0
    %2516 = vmatprep.subr.mxu0 0.0
    %2517 = vmatpush1.msra.mxu0 0.0
    %2518 = vmatprep.subr.mxu0 0.0
    %2519 = vmatpush1.msra.mxu0 0.0
    %2520 = vmatprep.subr.mxu0 0.0
    %2521 = vmatpush1.msra.mxu0 0.0
    %2522 = vmatprep.subr.mxu0 0.0
    %2523 = vmatpush1.msra.mxu0 0.0
    %2524 = vmatprep.subr.mxu0 0.0
    %2525 = vmatpush1.msra.mxu0 0.0
    %2526 = vmatprep.subr.mxu0 0.0
    %2527 = vmatpush1.msra.mxu0 0.0
    %2528 = vmatprep.subr.mxu0 0.0
    %2529 = vmatpush1.msra.mxu0 0.0
    %2530 = vmatprep.subr.mxu0 0.0
    %2531 = vmatpush1.msra.mxu0 0.0
    %2532 = vmatprep.subr.mxu0 0.0
    %2533 = vmatpush1.msra.mxu0 0.0
    %2534 = vmatprep.subr.mxu0 0.0
    %2535 = vmatpush1.msra.mxu0 0.0
    %2536 = vmatprep.subr.mxu0 0.0
    %2537 = vmatpush1.msra.mxu0 0.0
    %2538 = vmatprep.subr.mxu0 0.0
    %2539 = vmatpush1.msra.mxu0 0.0
    %2540 = vmatprep.subr.mxu0 0.0
    %2541 = vmatpush1.msra.mxu0 0.0
    %2542 = vmatprep.subr.mxu0 0.0
    %2543 = vmatpush1.msra.mxu0 0.0
    %2544 = vmatprep.subr.mxu0 0.0
    %2545 = vmatpush1.msra.mxu0 0.0
    %2546 = vmatprep.subr.mxu0 0.0
    %2547 = vmatpush1.msra.mxu0 0.0
    %2548 = vmatprep.subr.mxu0 0.0
    %2549 = vmatpush1.msra.mxu0 0.0
    %2550 = vmatprep.subr.mxu0 0.0
    %2551 = vmatpush1.msra.mxu0 0.0
    %2552 = vmatprep.subr.mxu0 0.0
    %2553 = vmatpush1.msra.mxu0 0.0
    %2554 = vmatprep.subr.mxu0 0.0
    %2555 = vmatpush1.msra.mxu0 0.0
    %2556 = vmatprep.subr.mxu0 0.0
    %2557 = vmatpush1.msra.mxu0 0.0
    %2558 = vmatprep.subr.mxu0 0.0
    %2559 = vmatpush1.msra.mxu0 0.0
    %2560 = vmatprep.subr.mxu0 0.0
    %2561 = vmatpush1.msra.mxu0 0.0
    %2562 = vmatprep.subr.mxu0 0.0
    %2563 = vmatpush1.msra.mxu0 0.0
    %2564 = vmatprep.subr.mxu0 0.0
    %2565 = vmatpush1.msra.mxu0 0.0
    %2566 = vmatprep.subr.mxu0 0.0
    %2567 = vmatpush1.msra.mxu0 0.0
    %2568 = vmatprep.subr.mxu0 0.0
    %2569 = vmatpush1.msra.mxu0 0.0
    %2570 = vmatprep.subr.mxu0 0.0
    %2571 = vmatpush1.msra.mxu0 0.0
    %2572 = vmatprep.mubr.f32.mxu0 0.0
    %2573 = vmatmul.mubr.f32.gmra.mrb[0].mxu0 %v2506
    %v2574 = vpop.f32.mrb[0].mxu0
    %v2575 = vadd.f32 0.0, %v2574
    %v2576 = vpop.f32.mrb[0].mxu0
    %2577 = vdwg.mxu0
    %v2578 = vsub.f32 %v2575, 0.3
    %v2579 = vmul.f32 %v2578, %v2578
    %v2580 = vmul.f32 %v2575, %v2575
    %2582 = vrot.lane.b32.xlu0 %v2580, 120
    %v2583 = vpop.permute.xlu0 %2582
    %v2585 = vadd.f32 %v2579, %v2583
    %v2586 = vsub.f32 %v2575, 0.4
    %v2587 = vmul.f32 %v2586, %v2586
    %2589 = vrot.lane.b32.xlu0 %v2587, 112
    %v2590 = vpop.permute.xlu0 %2589
    %v2592 = vadd.f32 %v2585, %v2590
    %v2593 = vrsqrt.pop %v2592
    %v2594 = vmul.f32 %v2592, %v2593
    %vm2595 = vcmp.eq.f32.partialorder %v2592, inf
    %v2596 = vsel %vm2595, %v2592, %v2594
    %vm2597 = vcmp.eq.f32.partialorder %v2592, 0.0
    %v2598 = vand.u32 %v2592, 2147483648
    %v2599 = vsel %vm2597, %v2598, %v2596
    %2601 = vrot.lane.b32.xlu0 %v2599, 24
    %v2602 = vpop.permute.xlu0 %2601
    %v2604 = vsub.f32 %v2575, %v2602
    %v2605 = vmax.f32 %v2604, 0.0
    %2607 = vrot.lane.b32.xlu0 %v2605, 72
    %v2608 = vpop.permute.xlu0 %2607
    %v2610 = vsel %vm2504, %v2608, 0.0
    %2611 = vadd.xlane.f32.xlu0 %v2610
    %v2612 = vpop.xlane.xlu0 %2611
    %2613 = vrot.lane.b32.xlu0 %v2580, 61
    %v2614 = vpop.permute.xlu0 %2613
    %vm2616 = vcmask 31744
    %v2617 = vsel %vm2616, %v2614, 0.0
    %2618 = vadd.xlane.f32.xlu0 %v2617
    %v2619 = vpop.xlane.xlu0 %2618
    %v2620 = vrsqrt.pop %v2619
    %v2621 = vmul.f32 %v2619, %v2620
    %vm2622 = vcmp.eq.f32.partialorder %v2619, inf
    %v2623 = vsel %vm2622, %v2619, %v2621
    %vm2624 = vcmp.eq.f32.partialorder %v2619, 0.0
    %v2625 = vand.u32 %v2619, 2147483648
    %v2626 = vsel %vm2624, %v2625, %v2623
    %v2627 = vadd.f32 %v2626, 1e-06
    %v2628 = vrcp.pop %v2627
    %v2629 = vmul.f32 %v2575, %v2628
    %2631 = vrot.lane.b32.xlu0 %v2575, 64
    %v2632 = vpop.permute.xlu0 %2631
    %v2634 = vsub.f32 %v79, %v2632
    %v2635 = vmul.f32 %v2634, %v2634
    %vm2636 = vcmask 23552
    %v2637 = vsel %vm2636, %v2635, 0.0
    %2638 = vadd.xlane.f32.xlu0 %v2637
    %v2639 = vpop.xlane.xlu0 %2638
    %v2640 = vrsqrt.pop %v2639
    %v2641 = vmul.f32 %v2639, %v2640
    %vm2642 = vcmp.eq.f32.partialorder %v2639, inf
    %v2643 = vsel %vm2642, %v2639, %v2641
    %vm2644 = vcmp.eq.f32.partialorder %v2639, 0.0
    %v2645 = vand.u32 %v2639, 2147483648
    %v2646 = vsel %vm2644, %v2645, %v2643
    %2648 = vrot.lane.b32.xlu0 %v2629, 64
    %v2649 = vpop.permute.xlu0 %2648
    %v2651 = vmul.f32 %v79, %v2649
    %2653 = vrot.lane.b32.xlu0 %v2651, 125
    %v2654 = vpop.permute.xlu0 %2653
    %v2656 = vsel %vm2616, %v2654, 0.0
    %2657 = vadd.xlane.f32.xlu0 %v2656
    %v2658 = vpop.xlane.xlu0 %2657
    %v2659 = vand.u32 2147483647, %v2658
    %v2660 = vsub.f32 1.0, %v2659
    %v2661 = vadd.f32 %v2646, %v2660
    %2662 = vrot.lane.b32.xlu0 %v2605, 104
    %v2663 = vpop.permute.xlu0 %2662
    %2665 = vrot.lane.b32.xlu0 %v2575, 105
    %v2666 = vpop.permute.xlu0 %2665
    %2668 = vrot.lane.b32.xlu0 %v2629, 105
    %v2669 = vpop.permute.xlu0 %2668
    %2672 = vrot.lane.b32.xlu0 %v79, 49
    %v2673 = vpop.permute.xlu0 %2672
    %vm2675 = vcmask 261120
    %v2676 = vsel %vm2675, %v2575, %v2663
    %vm2677 = vcmask 326656
    %v2678 = vsel %vm2677, %v2676, %v2612
    %vm2679 = vcmask 334848
    %v2680 = vsel %vm2679, %v2678, %v2666
    %vm2681 = vcmask 359424
    %v2682 = vsel %vm2681, %v2680, %v2669
    %vm2683 = vcmask 392192
    %v2684 = vsel %vm2683, %v2682, %v2661
    %vm2685 = vcmask 400384
    %v2686 = vsel %vm2685, %v2684, %v2673
    %vm2687 = vcmask 424960
    %v2688 = vsel %vm2687, %v2686, %v2673
    %vm2689 = vcmask 457728
    %v2690 = vsel %vm2689, %v2688, 0.0
    %v2691 = vld [vmem:[#allocation4] sm:$0xff]
    %v2692 = vld [vmem:[#allocation4 + $0x8] sm:$0xff]
    %v2693 = vld [vmem:[#allocation4 + $0x10] sm:$0xff]
    %v2694 = vld [vmem:[#allocation4 + $0x18] sm:$0xff]
    %v2695 = vld [vmem:[#allocation4 + $0x20] sm:$0xff]
    %v2696 = vld [vmem:[#allocation4 + $0x28] sm:$0xff]
    %v2697 = vld [vmem:[#allocation4 + $0x30] sm:$0xff]
    %v2698 = vld [vmem:[#allocation4 + $0x38] sm:$0xff]
    %v2699 = vld [vmem:[#allocation4 + $0x40] sm:$0xff]
    %v2700 = vld [vmem:[#allocation4 + $0x48] sm:$0xff]
    %v2701 = vld [vmem:[#allocation4 + $0x50] sm:$0xff]
    %v2702 = vld [vmem:[#allocation4 + $0x58] sm:$0xff]
    %v2703 = vld [vmem:[#allocation4 + $0x60] sm:$0xff]
    %v2704 = vld [vmem:[#allocation4 + $0x68] sm:$0xff]
    %v2705 = vld [vmem:[#allocation4 + $0x70] sm:$0xff]
    %v2706 = vld [vmem:[#allocation4 + $0x78] sm:$0xff]
    %v2707 = vld [vmem:[#allocation4 + $0x80] sm:$0xff]
    %v2708 = vld [vmem:[#allocation4 + $0x88] sm:$0xff]
    %v2709 = vld [vmem:[#allocation4 + $0x90] sm:$0xff]
    %v2710 = vld [vmem:[#allocation4 + $0x98] sm:$0xff]
    %v2711 = vld [vmem:[#allocation4 + $0xa0] sm:$0xff]
    %v2712 = vld [vmem:[#allocation4 + $0xa8] sm:$0xff]
    %v2713 = vld [vmem:[#allocation4 + $0xb0] sm:$0xff]
    %v2714 = vld [vmem:[#allocation4 + $0xb8] sm:$0xff]
    %v2715 = vld [vmem:[#allocation4 + $0xc0] sm:$0xff]
    %v2716 = vld [vmem:[#allocation4 + $0xc8] sm:$0xff]
    %v2717 = vld [vmem:[#allocation4 + $0xd0] sm:$0xff]
    %v2718 = vld [vmem:[#allocation4 + $0xd8] sm:$0xff]
    %v2719 = vld [vmem:[#allocation4 + $0xe0] sm:$0xff]
    %v2720 = vld [vmem:[#allocation4 + $0xe8] sm:$0xff]
    %v2721 = vld [vmem:[#allocation4 + $0xf0] sm:$0xff]
    %v2722 = vld [vmem:[#allocation4 + $0xf8] sm:$0xff]
    %v2723 = vld [vmem:[#allocation4 + $0x100] sm:$0xff]
    %v2724 = vld [vmem:[#allocation4 + $0x108] sm:$0xff]
    %v2725 = vld [vmem:[#allocation4 + $0x110] sm:$0xff]
    %v2726 = vld [vmem:[#allocation4 + $0x118] sm:$0xff]
    %v2727 = vld [vmem:[#allocation4 + $0x120] sm:$0xff]
    %v2728 = vld [vmem:[#allocation4 + $0x128] sm:$0xff]
    %v2729 = vld [vmem:[#allocation4 + $0x130] sm:$0xff]
    %v2730 = vld [vmem:[#allocation4 + $0x138] sm:$0xff]
    %v2731 = vld [vmem:[#allocation6] sm:$0xf]
    %v2732 = vld [vmem:[#allocation6 + $0x4] sm:$0xf]
    %v2733 = vld [vmem:[#allocation6 + $0x8] sm:$0xf]
    %v2734 = vld [vmem:[#allocation6 + $0xc] sm:$0xf]
    %v2735 = vld [vmem:[#allocation6 + $0x10] sm:$0xf]
    %v2736 = vld [vmem:[#allocation6 + $0x14] sm:$0xf]
    %v2737 = vld [vmem:[#allocation6 + $0x18] sm:$0xf]
    %v2738 = vld [vmem:[#allocation6 + $0x1c] sm:$0xf]
    %v2739 = vld [vmem:[#allocation6 + $0x20] sm:$0xf]
    %v2740 = vld [vmem:[#allocation6 + $0x24] sm:$0xf]
    %v2741 = vld [vmem:[#allocation6 + $0x28] sm:$0xf]
    %v2742 = vld [vmem:[#allocation6 + $0x2c] sm:$0xf]
    %v2743 = vld [vmem:[#allocation6 + $0x30] sm:$0xf]
    %v2744 = vld [vmem:[#allocation6 + $0x34] sm:$0xf]
    %v2745 = vld [vmem:[#allocation6 + $0x38] sm:$0xf]
    %v2746 = vld [vmem:[#allocation6 + $0x3c] sm:$0xf]
    %v2747 = vld [vmem:[#allocation6 + $0x40] sm:$0xf]
    %v2748 = vld [vmem:[#allocation6 + $0x44] sm:$0xf]
    %v2749 = vld [vmem:[#allocation6 + $0x48] sm:$0xf]
    %v2750 = vld [vmem:[#allocation6 + $0x4c] sm:$0xf]
    %v2751 = vld [vmem:[#allocation6 + $0x50] sm:$0xf]
    %v2752 = vld [vmem:[#allocation6 + $0x54] sm:$0xf]
    %v2753 = vld [vmem:[#allocation6 + $0x58] sm:$0xf]
    %v2754 = vld [vmem:[#allocation6 + $0x5c] sm:$0xf]
    %v2755 = vld [vmem:[#allocation6 + $0x60] sm:$0xf]
    %v2756 = vld [vmem:[#allocation6 + $0x64] sm:$0xf]
    %v2757 = vld [vmem:[#allocation6 + $0x68] sm:$0xf]
    %v2758 = vld [vmem:[#allocation6 + $0x6c] sm:$0xf]
    %v2759 = vld [vmem:[#allocation6 + $0x70] sm:$0xf]
    %v2760 = vld [vmem:[#allocation6 + $0x74] sm:$0xf]
    %v2761 = vld [vmem:[#allocation6 + $0x78] sm:$0xf]
    %v2762 = vld [vmem:[#allocation6 + $0x7c] sm:$0xf]
    %v2763 = vld [vmem:[#allocation6 + $0x80] sm:$0xf]
    %v2764 = vld [vmem:[#allocation6 + $0x84] sm:$0xf]
    %v2765 = vld [vmem:[#allocation6 + $0x88] sm:$0xf]
    %v2766 = vld [vmem:[#allocation6 + $0x8c] sm:$0xf]
    %v2767 = vld [vmem:[#allocation6 + $0x90] sm:$0xf]
    %v2768 = vld [vmem:[#allocation6 + $0x94] sm:$0xf]
    %v2769 = vld [vmem:[#allocation6 + $0x98] sm:$0xf]
    %v2770 = vld [vmem:[#allocation6 + $0x9c] sm:$0xf]
    %v2771 = vld [vmem:[#allocation6 + $0xa0] sm:$0xf]
    %v2772 = vld [vmem:[#allocation6 + $0xa4] sm:$0xf]
    %v2773 = vld [vmem:[#allocation6 + $0xa8] sm:$0xf]
    %v2774 = vld [vmem:[#allocation6 + $0xac] sm:$0xf]
    %v2775 = vld [vmem:[#allocation6 + $0xb0] sm:$0xf]
    %v2776 = vld [vmem:[#allocation6 + $0xb4] sm:$0xf]
    %v2777 = vld [vmem:[#allocation6 + $0xb8] sm:$0xf]
    %v2778 = vld [vmem:[#allocation6 + $0xbc] sm:$0xf]
    %v2779 = vpack.c.bf16 %v2690, %v2690
    %s2780 = scalar_lea.vmem [#allocation7], 5
    %v2781 = vld [vmem:[%s2780] ss:$8 sm:$0x3]
    %v2783 = vlaneseq
    %v2784 = vshrl.u32 %v2783, 7
    %v2785 = vsub.s32 0, %v2784
    %v2786 = vrot.slane %v2781, %v2785
    %v2787 = vlaneseq
    %v2788 = vshrl.u32 %v2787, 7
    %v2789 = vsub.s32 1, %v2788
    %v2790 = vrot.slane %v2781, %v2789
    %v2801 = vunpack.c.l.b16 %v2723
    %v2802 = vunpack.c.h.b16 %v2723
    %v2803 = vunpack.c.l.b16 %v2724
    %v2804 = vunpack.c.h.b16 %v2724
    %v2805 = vunpack.c.l.b16 %v2725
    %v2806 = vunpack.c.h.b16 %v2725
    %v2807 = vunpack.c.l.b16 %v2726
    %v2808 = vunpack.c.h.b16 %v2726
    %v2809 = vunpack.c.l.b16 %v2727
    %v2810 = vunpack.c.h.b16 %v2727
    %v2811 = vunpack.c.l.b16 %v2728
    %v2812 = vunpack.c.h.b16 %v2728
    %v2813 = vunpack.c.l.b16 %v2729
    %v2814 = vunpack.c.h.b16 %v2729
    %v2815 = vunpack.c.l.b16 %v2730
    %v2816 = vunpack.c.h.b16 %v2730
    %v2817 = vpack.c.b16 %v2803, %v2801
    %v2818 = vpack.c.b16 %v2804, %v2802
    %v2819 = vpack.c.b16 %v2807, %v2805
    %v2820 = vpack.c.b16 %v2808, %v2806
    %v2821 = vpack.c.b16 %v2811, %v2809
    %v2822 = vpack.c.b16 %v2812, %v2810
    %v2823 = vpack.c.b16 %v2815, %v2813
    %v2824 = vpack.c.b16 %v2816, %v2814
    %vm2833 = vcmask 523264
    %v2835 = vsel %vm2833, %v2779, 0
    %2837 = vmatprep.subr.bf16.mxu0 %v2818
    %2838 = vmatpush1.bf16.msra.mxu0 %v2817
    %2839 = vmatprep.subr.bf16.mxu0 %v2820
    %2840 = vmatpush1.bf16.msra.mxu0 %v2819
    %2841 = vmatprep.subr.bf16.mxu0 %v2822
    %2842 = vmatpush1.bf16.msra.mxu0 %v2821
    %2843 = vmatprep.subr.bf16.mxu0 %v2824
    %2844 = vmatpush1.bf16.msra.mxu0 %v2823
    %2845 = vmatprep.subr.bf16.mxu0 0
    %2846 = vmatpush1.bf16.msra.mxu0 0
    %2847 = vmatprep.subr.bf16.mxu0 0
    %2848 = vmatpush1.bf16.msra.mxu0 0
    %2849 = vmatprep.subr.bf16.mxu0 0
    %2850 = vmatpush1.bf16.msra.mxu0 0
    %2851 = vmatprep.subr.bf16.mxu0 0
    %2852 = vmatpush1.bf16.msra.mxu0 0
    %2853 = vmatprep.subr.bf16.mxu0 0
    %2854 = vmatpush1.bf16.msra.mxu0 0
    %2855 = vmatprep.subr.bf16.mxu0 0
    %2856 = vmatpush1.bf16.msra.mxu0 0
    %2857 = vmatprep.subr.bf16.mxu0 0
    %2858 = vmatpush1.bf16.msra.mxu0 0
    %2859 = vmatprep.subr.bf16.mxu0 0
    %2860 = vmatpush1.bf16.msra.mxu0 0
    %2861 = vmatprep.subr.bf16.mxu0 0
    %2862 = vmatpush1.bf16.msra.mxu0 0
    %2863 = vmatprep.subr.bf16.mxu0 0
    %2864 = vmatpush1.bf16.msra.mxu0 0
    %2865 = vmatprep.subr.bf16.mxu0 0
    %2866 = vmatpush1.bf16.msra.mxu0 0
    %2867 = vmatprep.subr.bf16.mxu0 0
    %2868 = vmatpush1.bf16.msra.mxu0 0
    %2869 = vmatprep.mubr.bf16.mxu0 0
    %2870 = vmatmul.mubr.bf16.gmra.mrb[0].mxu0 %v2835
    %v2871 = vpop.f32.mrb[0].mxu0
    %v2872 = vadd.f32 %v2786, %v2871
    %v2873 = vpop.f32.mrb[0].mxu0
    %v2874 = vadd.f32 %v2790, %v2873
    %v2875 = vpop.f32.mrb[0].mxu0
    %v2876 = vpop.f32.mrb[0].mxu0
    %2877 = vdwg.mxu0
    %v2878 = vmax.f32 %v2872, 0.0
    %v2879 = vmax.f32 %v2874, 0.0
    %v2880 = vmin.f32 %v2878, 6.0
    %v2881 = vmin.f32 %v2879, 6.0
    %v2882 = vpack.c.bf16 %v2880, %v2880
    %v2883 = vpack.c.bf16 %v2881, %v2881
    %s2884 = scalar_lea.vmem [#allocation7], 6
    %v2885 = vld [vmem:[%s2884] ss:$8 sm:$0x3]
    %v2887 = vlaneseq
    %v2888 = vshrl.u32 %v2887, 7
    %v2889 = vsub.s32 0, %v2888
    %v2890 = vrot.slane %v2885, %v2889
    %v2891 = vlaneseq
    %v2892 = vshrl.u32 %v2891, 7
    %v2893 = vsub.s32 1, %v2892
    %v2894 = vrot.slane %v2885, %v2893
    %v2929 = vunpack.c.l.b16 %v2691
    %v2930 = vunpack.c.h.b16 %v2691
    %v2931 = vunpack.c.l.b16 %v2692
    %v2932 = vunpack.c.h.b16 %v2692
    %v2933 = vunpack.c.l.b16 %v2693
    %v2934 = vunpack.c.h.b16 %v2693
    %v2935 = vunpack.c.l.b16 %v2694
    %v2936 = vunpack.c.h.b16 %v2694
    %v2937 = vunpack.c.l.b16 %v2695
    %v2938 = vunpack.c.h.b16 %v2695
    %v2939 = vunpack.c.l.b16 %v2696
    %v2940 = vunpack.c.h.b16 %v2696
    %v2941 = vunpack.c.l.b16 %v2697
    %v2942 = vunpack.c.h.b16 %v2697
    %v2943 = vunpack.c.l.b16 %v2698
    %v2944 = vunpack.c.h.b16 %v2698
    %v2945 = vunpack.c.l.b16 %v2699
    %v2946 = vunpack.c.h.b16 %v2699
    %v2947 = vunpack.c.l.b16 %v2700
    %v2948 = vunpack.c.h.b16 %v2700
    %v2949 = vunpack.c.l.b16 %v2701
    %v2950 = vunpack.c.h.b16 %v2701
    %v2951 = vunpack.c.l.b16 %v2702
    %v2952 = vunpack.c.h.b16 %v2702
    %v2953 = vunpack.c.l.b16 %v2703
    %v2954 = vunpack.c.h.b16 %v2703
    %v2955 = vunpack.c.l.b16 %v2704
    %v2956 = vunpack.c.h.b16 %v2704
    %v2957 = vunpack.c.l.b16 %v2705
    %v2958 = vunpack.c.h.b16 %v2705
    %v2959 = vunpack.c.l.b16 %v2706
    %v2960 = vunpack.c.h.b16 %v2706
    %v2961 = vunpack.c.l.b16 %v2707
    %v2962 = vunpack.c.h.b16 %v2707
    %v2963 = vunpack.c.l.b16 %v2708
    %v2964 = vunpack.c.h.b16 %v2708
    %v2965 = vunpack.c.l.b16 %v2709
    %v2966 = vunpack.c.h.b16 %v2709
    %v2967 = vunpack.c.l.b16 %v2710
    %v2968 = vunpack.c.h.b16 %v2710
    %v2969 = vunpack.c.l.b16 %v2711
    %v2970 = vunpack.c.h.b16 %v2711
    %v2971 = vunpack.c.l.b16 %v2712
    %v2972 = vunpack.c.h.b16 %v2712
    %v2973 = vunpack.c.l.b16 %v2713
    %v2974 = vunpack.c.h.b16 %v2713
    %v2975 = vunpack.c.l.b16 %v2714
    %v2976 = vunpack.c.h.b16 %v2714
    %v2977 = vunpack.c.l.b16 %v2715
    %v2978 = vunpack.c.h.b16 %v2715
    %v2979 = vunpack.c.l.b16 %v2716
    %v2980 = vunpack.c.h.b16 %v2716
    %v2981 = vunpack.c.l.b16 %v2717
    %v2982 = vunpack.c.h.b16 %v2717
    %v2983 = vunpack.c.l.b16 %v2718
    %v2984 = vunpack.c.h.b16 %v2718
    %v2985 = vunpack.c.l.b16 %v2719
    %v2986 = vunpack.c.h.b16 %v2719
    %v2987 = vunpack.c.l.b16 %v2720
    %v2988 = vunpack.c.h.b16 %v2720
    %v2989 = vunpack.c.l.b16 %v2721
    %v2990 = vunpack.c.h.b16 %v2721
    %v2991 = vunpack.c.l.b16 %v2722
    %v2992 = vunpack.c.h.b16 %v2722
    %v2993 = vpack.c.b16 %v2931, %v2929
    %v2994 = vpack.c.b16 %v2932, %v2930
    %v2995 = vpack.c.b16 %v2935, %v2933
    %v2996 = vpack.c.b16 %v2936, %v2934
    %v2997 = vpack.c.b16 %v2939, %v2937
    %v2998 = vpack.c.b16 %v2940, %v2938
    %v2999 = vpack.c.b16 %v2943, %v2941
    %v3000 = vpack.c.b16 %v2944, %v2942
    %v3001 = vpack.c.b16 %v2947, %v2945
    %v3002 = vpack.c.b16 %v2948, %v2946
    %v3003 = vpack.c.b16 %v2951, %v2949
    %v3004 = vpack.c.b16 %v2952, %v2950
    %v3005 = vpack.c.b16 %v2955, %v2953
    %v3006 = vpack.c.b16 %v2956, %v2954
    %v3007 = vpack.c.b16 %v2959, %v2957
    %v3008 = vpack.c.b16 %v2960, %v2958
    %v3009 = vpack.c.b16 %v2963, %v2961
    %v3010 = vpack.c.b16 %v2964, %v2962
    %v3011 = vpack.c.b16 %v2967, %v2965
    %v3012 = vpack.c.b16 %v2968, %v2966
    %v3013 = vpack.c.b16 %v2971, %v2969
    %v3014 = vpack.c.b16 %v2972, %v2970
    %v3015 = vpack.c.b16 %v2975, %v2973
    %v3016 = vpack.c.b16 %v2976, %v2974
    %v3017 = vpack.c.b16 %v2979, %v2977
    %v3018 = vpack.c.b16 %v2980, %v2978
    %v3019 = vpack.c.b16 %v2983, %v2981
    %v3020 = vpack.c.b16 %v2984, %v2982
    %v3021 = vpack.c.b16 %v2987, %v2985
    %v3022 = vpack.c.b16 %v2988, %v2986
    %v3023 = vpack.c.b16 %v2991, %v2989
    %v3024 = vpack.c.b16 %v2992, %v2990
    %3057 = vmatprep.subr.bf16.mxu0 %v2994
    %3058 = vmatpush1.bf16.msra.mxu0 %v2993
    %3059 = vmatprep.subr.bf16.mxu0 %v2996
    %3060 = vmatpush1.bf16.msra.mxu0 %v2995
    %3061 = vmatprep.subr.bf16.mxu0 %v2998
    %3062 = vmatpush1.bf16.msra.mxu0 %v2997
    %3063 = vmatprep.subr.bf16.mxu0 %v3000
    %3064 = vmatpush1.bf16.msra.mxu0 %v2999
    %3065 = vmatprep.subr.bf16.mxu0 %v3002
    %3066 = vmatpush1.bf16.msra.mxu0 %v3001
    %3067 = vmatprep.subr.bf16.mxu0 %v3004
    %3068 = vmatpush1.bf16.msra.mxu0 %v3003
    %3069 = vmatprep.subr.bf16.mxu0 %v3006
    %3070 = vmatpush1.bf16.msra.mxu0 %v3005
    %3071 = vmatprep.subr.bf16.mxu0 %v3008
    %3072 = vmatpush1.bf16.msra.mxu0 %v3007
    %3073 = vmatprep.subr.bf16.mxu0 %v3010
    %3074 = vmatpush1.bf16.msra.mxu0 %v3009
    %3075 = vmatprep.subr.bf16.mxu0 %v3012
    %3076 = vmatpush1.bf16.msra.mxu0 %v3011
    %3077 = vmatprep.subr.bf16.mxu0 %v3014
    %3078 = vmatpush1.bf16.msra.mxu0 %v3013
    %3079 = vmatprep.subr.bf16.mxu0 %v3016
    %3080 = vmatpush1.bf16.msra.mxu0 %v3015
    %3081 = vmatprep.subr.bf16.mxu0 %v3018
    %3082 = vmatpush1.bf16.msra.mxu0 %v3017
    %3083 = vmatprep.subr.bf16.mxu0 %v3020
    %3084 = vmatpush1.bf16.msra.mxu0 %v3019
    %3085 = vmatprep.subr.bf16.mxu0 %v3022
    %3086 = vmatpush1.bf16.msra.mxu0 %v3021
    %3087 = vmatprep.subr.bf16.mxu0 %v3024
    %3088 = vmatpush1.bf16.msra.mxu0 %v3023
    %3089 = vmatprep.mubr.bf16.mxu0 %v2883
    %3090 = vmatmul.mubr.bf16.gmra.mrb[0].mxu0 %v2882
    %v3091 = vpop.f32.mrb[0].mxu0
    %v3092 = vadd.f32 %v2890, %v3091
    %v3093 = vpop.f32.mrb[0].mxu0
    %v3094 = vadd.f32 %v2894, %v3093
    %v3095 = vpop.f32.mrb[0].mxu0
    %v3096 = vpop.f32.mrb[0].mxu0
    %3097 = vdwg.mxu0
    %v3098 = vmax.f32 %v3092, 0.0
    %v3099 = vmax.f32 %v3094, 0.0
    %v3100 = vmin.f32 %v3098, 6.0
    %v3101 = vmin.f32 %v3099, 6.0
    %v3102 = vpack.c.bf16 %v3100, %v3100
    %v3103 = vpack.c.bf16 %v3101, %v3101
    %v3104 = vld [vmem:[#allocation7 + $0x7] ss:$0 sm:$0xff]
    %v3137 = vunpack.c.l.b16 %v2731
    %v3138 = vunpack.c.l.b16 %v2732
    %v3139 = vunpack.c.l.b16 %v2733
    %v3140 = vunpack.c.l.b16 %v2734
    %v3141 = vunpack.c.l.b16 %v2735
    %v3142 = vunpack.c.l.b16 %v2736
    %v3143 = vunpack.c.l.b16 %v2737
    %v3144 = vunpack.c.l.b16 %v2738
    %v3145 = vunpack.c.l.b16 %v2739
    %v3146 = vunpack.c.l.b16 %v2740
    %v3147 = vunpack.c.l.b16 %v2741
    %v3148 = vunpack.c.l.b16 %v2742
    %v3149 = vunpack.c.l.b16 %v2743
    %v3150 = vunpack.c.l.b16 %v2744
    %v3151 = vunpack.c.l.b16 %v2745
    %v3152 = vunpack.c.l.b16 %v2746
    %v3153 = vunpack.c.l.b16 %v2747
    %v3154 = vunpack.c.l.b16 %v2748
    %v3155 = vunpack.c.l.b16 %v2749
    %v3156 = vunpack.c.l.b16 %v2750
    %v3157 = vunpack.c.l.b16 %v2751
    %v3158 = vunpack.c.l.b16 %v2752
    %v3159 = vunpack.c.l.b16 %v2753
    %v3160 = vunpack.c.l.b16 %v2754
    %v3161 = vunpack.c.l.b16 %v2755
    %v3162 = vunpack.c.l.b16 %v2756
    %v3163 = vunpack.c.l.b16 %v2757
    %v3164 = vunpack.c.l.b16 %v2758
    %v3165 = vunpack.c.l.b16 %v2759
    %v3166 = vunpack.c.l.b16 %v2760
    %v3167 = vunpack.c.l.b16 %v2761
    %v3168 = vunpack.c.l.b16 %v2762
    %v3169 = vpack.c.b16 %v3138, %v3137
    %v3170 = vpack.c.b16 %v3140, %v3139
    %v3171 = vpack.c.b16 %v3142, %v3141
    %v3172 = vpack.c.b16 %v3144, %v3143
    %v3173 = vpack.c.b16 %v3146, %v3145
    %v3174 = vpack.c.b16 %v3148, %v3147
    %v3175 = vpack.c.b16 %v3150, %v3149
    %v3176 = vpack.c.b16 %v3152, %v3151
    %v3177 = vpack.c.b16 %v3154, %v3153
    %v3178 = vpack.c.b16 %v3156, %v3155
    %v3179 = vpack.c.b16 %v3158, %v3157
    %v3180 = vpack.c.b16 %v3160, %v3159
    %v3181 = vpack.c.b16 %v3162, %v3161
    %v3182 = vpack.c.b16 %v3164, %v3163
    %v3183 = vpack.c.b16 %v3166, %v3165
    %v3184 = vpack.c.b16 %v3168, %v3167
    %3201 = vmatprep.subr.bf16.mxu0 0
    %3202 = vmatpush1.bf16.msra.mxu0 %v3169
    %3203 = vmatprep.subr.bf16.mxu0 0
    %3204 = vmatpush1.bf16.msra.mxu0 %v3170
    %3205 = vmatprep.subr.bf16.mxu0 0
    %3206 = vmatpush1.bf16.msra.mxu0 %v3171
    %3207 = vmatprep.subr.bf16.mxu0 0
    %3208 = vmatpush1.bf16.msra.mxu0 %v3172
    %3209 = vmatprep.subr.bf16.mxu0 0
    %3210 = vmatpush1.bf16.msra.mxu0 %v3173
    %3211 = vmatprep.subr.bf16.mxu0 0
    %3212 = vmatpush1.bf16.msra.mxu0 %v3174
    %3213 = vmatprep.subr.bf16.mxu0 0
    %3214 = vmatpush1.bf16.msra.mxu0 %v3175
    %3215 = vmatprep.subr.bf16.mxu0 0
    %3216 = vmatpush1.bf16.msra.mxu0 %v3176
    %3217 = vmatprep.subr.bf16.mxu0 0
    %3218 = vmatpush1.bf16.msra.mxu0 %v3177
    %3219 = vmatprep.subr.bf16.mxu0 0
    %3220 = vmatpush1.bf16.msra.mxu0 %v3178
    %3221 = vmatprep.subr.bf16.mxu0 0
    %3222 = vmatpush1.bf16.msra.mxu0 %v3179
    %3223 = vmatprep.subr.bf16.mxu0 0
    %3224 = vmatpush1.bf16.msra.mxu0 %v3180
    %3225 = vmatprep.subr.bf16.mxu0 0
    %3226 = vmatpush1.bf16.msra.mxu0 %v3181
    %3227 = vmatprep.subr.bf16.mxu0 0
    %3228 = vmatpush1.bf16.msra.mxu0 %v3182
    %3229 = vmatprep.subr.bf16.mxu0 0
    %3230 = vmatpush1.bf16.msra.mxu0 %v3183
    %3231 = vmatprep.subr.bf16.mxu0 0
    %3232 = vmatpush1.bf16.msra.mxu0 %v3184
    %3233 = vmatprep.mubr.bf16.mxu0 %v3103
    %3234 = vmatmul.mubr.bf16.gmra.mrb[0].mxu0 %v3102
    %v3235 = vpop.f32.mrb[0].mxu0
    %v3236 = vadd.f32 %v3104, %v3235
    %v3237 = vpop.f32.mrb[0].mxu0
    %v3238 = vpop.f32.mrb[0].mxu0
    %v3239 = vpop.f32.mrb[0].mxu0
    %3240 = vdwg.mxu0
    %v3241 = vmax.f32 %v3236, 0.0
    %v3242 = vmin.f32 %v3241, 6.0
    %v3243 = vpack.c.bf16 %v3242, %v3242
    %v3244 = vld [vmem:[#allocation7 + $0x40] ss:$0 sm:$0xff]
    %v3261 = vunpack.c.l.b16 %v2763
    %v3262 = vunpack.c.l.b16 %v2764
    %v3263 = vunpack.c.l.b16 %v2765
    %v3264 = vunpack.c.l.b16 %v2766
    %v3265 = vunpack.c.l.b16 %v2767
    %v3266 = vunpack.c.l.b16 %v2768
    %v3267 = vunpack.c.l.b16 %v2769
    %v3268 = vunpack.c.l.b16 %v2770
    %v3269 = vunpack.c.l.b16 %v2771
    %v3270 = vunpack.c.l.b16 %v2772
    %v3271 = vunpack.c.l.b16 %v2773
    %v3272 = vunpack.c.l.b16 %v2774
    %v3273 = vunpack.c.l.b16 %v2775
    %v3274 = vunpack.c.l.b16 %v2776
    %v3275 = vunpack.c.l.b16 %v2777
    %v3276 = vunpack.c.l.b16 %v2778
    %v3277 = vpack.c.b16 %v3262, %v3261
    %v3278 = vpack.c.b16 %v3264, %v3263
    %v3279 = vpack.c.b16 %v3266, %v3265
    %v3280 = vpack.c.b16 %v3268, %v3267
    %v3281 = vpack.c.b16 %v3270, %v3269
    %v3282 = vpack.c.b16 %v3272, %v3271
    %v3283 = vpack.c.b16 %v3274, %v3273
    %v3284 = vpack.c.b16 %v3276, %v3275
    %3293 = vmatprep.subr.bf16.mxu0 0
    %3294 = vmatpush1.bf16.msra.mxu0 %v3277
    %3295 = vmatprep.subr.bf16.mxu0 0
    %3296 = vmatpush1.bf16.msra.mxu0 %v3278
    %3297 = vmatprep.subr.bf16.mxu0 0
    %3298 = vmatpush1.bf16.msra.mxu0 %v3279
    %3299 = vmatprep.subr.bf16.mxu0 0
    %3300 = vmatpush1.bf16.msra.mxu0 %v3280
    %3301 = vmatprep.subr.bf16.mxu0 0
    %3302 = vmatpush1.bf16.msra.mxu0 %v3281
    %3303 = vmatprep.subr.bf16.mxu0 0
    %3304 = vmatpush1.bf16.msra.mxu0 %v3282
    %3305 = vmatprep.subr.bf16.mxu0 0
    %3306 = vmatpush1.bf16.msra.mxu0 %v3283
    %3307 = vmatprep.subr.bf16.mxu0 0
    %3308 = vmatpush1.bf16.msra.mxu0 %v3284
    %3309 = vmatprep.subr.bf16.mxu0 0
    %3310 = vmatpush1.bf16.msra.mxu0 0
    %3311 = vmatprep.subr.bf16.mxu0 0
    %3312 = vmatpush1.bf16.msra.mxu0 0
    %3313 = vmatprep.subr.bf16.mxu0 0
    %3314 = vmatpush1.bf16.msra.mxu0 0
    %3315 = vmatprep.subr.bf16.mxu0 0
    %3316 = vmatpush1.bf16.msra.mxu0 0
    %3317 = vmatprep.subr.bf16.mxu0 0
    %3318 = vmatpush1.bf16.msra.mxu0 0
    %3319 = vmatprep.subr.bf16.mxu0 0
    %3320 = vmatpush1.bf16.msra.mxu0 0
    %3321 = vmatprep.subr.bf16.mxu0 0
    %3322 = vmatpush1.bf16.msra.mxu0 0
    %3323 = vmatprep.subr.bf16.mxu0 0
    %3324 = vmatpush1.bf16.msra.mxu0 0
    %3325 = vmatprep.mubr.bf16.mxu0 0
    %3326 = vmatmul.mubr.bf16.gmra.mrb[0].mxu0 %v3243
    %v3327 = vpop.f32.mrb[0].mxu0
    %v3328 = vadd.f32 %v3244, %v3327
    %v3329 = vpop.f32.mrb[0].mxu0
    %v3330 = vpop.f32.mrb[0].mxu0
    %v3331 = vpop.f32.mrb[0].mxu0
    %3332 = vdwg.mxu0
    %v3333 = vtanh.pop %v3328
    %v3334 = vmul.f32 %v2497, %v3333
    %3335 = vst [vmem:[%s6] sm:$0xff] %v3334
    // Predicated region
    $region42: #{curobo_forward.1} parent=1 // pred_check
      _
    $region43: #{curobo_forward.1} parent=1 // pred_check_branch
      %3337 = sbr.rel (0) target = $region45
    $region44: #{curobo_forward.1} parent=1 // pred_region
      _
    $region45: #{curobo_forward.1} parent=1 // pred_fallthru
      _
    // Predicated region
    $region46: #{curobo_forward.1} parent=1 // pred_check
      _
    $region47: #{curobo_forward.1} parent=1 // pred_check_branch
      %3339 = sbr.rel (0) target = $region49
    $region48: #{curobo_forward.1} parent=1 // pred_region
      _
    $region49: #{curobo_forward.1} parent=1 // pred_fallthru
      _
    %3340 = vsyncpa [#allocation3], 1
    %3341 = vsyncpa [#allocation5], 1
    %3342 = vsyncpa [#allocation8], 1

</llo_original>
